<compile_context>
chip_gen: v5e
topology: v5e:2x2
jax: 0.10.0
libtpu: 0.0.40
codegen_flags: <defaults>
</compile_context>

<pallas_src>
import functools
import math

import jax
import jax.numpy as jnp
from jax.experimental import pallas as pl
from jax.experimental.pallas import tpu as pltpu

CONV_KS = (5, 3, 3)        # kernel sizes of the three conv stages
CP = 16                    # channel padding (bf16 sublane packing granularity)
MAX_TILE_LANES = 1024      # bound on per-GEMM output lanes (accumulator size)


# --------------------------- Pallas kernels ---------------------------------

def _conv_stage_kernel(x_ref, w_ref, b_ref, o_ref, slab_ref, *,
                       k, wp, tiles, split):
    """One conv stage for one image: implicit GEMM with an in-VMEM im2col slab.

    x_ref   : (1, CP, L)       bf16; channels padded to CP, H and W padded by
                               k//2, flattened, plus a (k-1)-lane tail halo.
    w_ref   : (2, Cout, K)     bf16; K = k*k*CP, tap-major / channel-minor.
                               [0] = input_module weights, [1] = gate weights.
    b_ref   : (2, Cout, 1)     f32.
    o_ref   : (1, Cout, H*Wp)  bf16; only columns [0, W) of each Wp-row are
                               valid (junk pad columns sliced off outside).
    slab_ref: (K, Tmax)        bf16 VMEM scratch (the im2col slab).
    """
    n = pl.program_id(0)
    sel = jnp.where(n >= split, 1, 0).astype(jnp.int32)    # weight set per image
    w = w_ref[sel]                                          # (Cout, K)
    b = b_ref[sel]                                          # (Cout, 1)
    for r0, nr in tiles:                                    # static row tiles
        base = r0 * wp
        t_lanes = nr * wp
        # Build the im2col slab: k*k aligned (CP, T) chunks stacked on sublanes.
        for a in range(k):
            for c in range(k):
                tap = a * k + c
                s = base + a * wp + c
                slab_ref[tap * CP:(tap + 1) * CP, :t_lanes] = (
                    x_ref[0, :, s:s + t_lanes])
        # Single large-K bf16 GEMM (f32 accumulate) + fused bias + ReLU.
        acc = jnp.dot(w, slab_ref[:, :t_lanes],
                      preferred_element_type=jnp.float32)   # (Cout, T)
        o_ref[0, :, base:base + t_lanes] = jnp.maximum(acc + b, 0.0).astype(
            o_ref.dtype)


def _tail_kernel(*refs):
    """Fused post-conv tail: input_module head (sigmoid) -> all expert MLPs,
    plus the prior gate head (softmax).  Everything stays in VMEM.

    refs layout:
      0..3   : feat_im (n_im,h), loc_im (n_im,2), feat_g (B,h), loc_g (B,2)
      4..16  : input_module head params (13)
      17..29 : gate head params (13)
      30..35 : packed expert params (w1, b1, w2, b2, w3, b3)
      36, 37 : outputs: expert_out (n_im, E), prior (B, E)
    """
    fi_ref, li_ref, fg_ref, lg_ref = refs[0:4]
    hp_im = refs[4:17]
    hp_g = refs[17:30]
    ew1, eb1, ew2, eb2, ew3, eb3 = refs[30:36]
    eo_ref, pr_ref = refs[36], refs[37]

    bf = jnp.bfloat16

    def head(f, l, hp):
        (img_s, img_t, lw1, lb1, lw2, lb2, loc_s, loc_t,
         dw1a, dw1b, db1, dw2, db2) = [r[...] for r in hp]
        img_n = f * img_s + img_t                               # BN (eval)
        h = jnp.maximum(
            jnp.dot(l.astype(bf), lw1,
                    preferred_element_type=jnp.float32) + lb1, 0.0)
        loc_f = jnp.dot(h.astype(bf), lw2,
                        preferred_element_type=jnp.float32) + lb2
        loc_n = loc_f * loc_s + loc_t                           # BN (eval)
        d = (jnp.dot(img_n.astype(bf), dw1a,
                     preferred_element_type=jnp.float32)
             + jnp.dot(loc_n.astype(bf), dw1b,
                       preferred_element_type=jnp.float32)
             + db1)
        d = jnp.maximum(d, 0.0)
        return jnp.dot(d.astype(bf), dw2,
                       preferred_element_type=jnp.float32) + db2

    # input_module head + fused experts (W1 concat / block-diag W2 / W3).
    feat = jax.nn.sigmoid(head(fi_ref[...], li_ref[...], hp_im))
    h1 = jnp.maximum(
        jnp.dot(feat.astype(bf), ew1[...],
                preferred_element_type=jnp.float32) + eb1[...], 0.0)
    h2 = jnp.maximum(
        jnp.dot(h1.astype(bf), ew2[...],
                preferred_element_type=jnp.float32) + eb2[...], 0.0)
    z = jnp.dot(h2.astype(bf), ew3[...],
                preferred_element_type=jnp.float32) + eb3[...]
    eo_ref[...] = jax.nn.sigmoid(z)

    # Prior gate head with exact softmax (tiny; avoids approx-reciprocal drift).
    zg = head(fg_ref[...], lg_ref[...], hp_g)
    m = jnp.max(zg, axis=-1, keepdims=True)
    e = jnp.exp(zg - m)
    pr_ref[...] = e / jnp.sum(e, axis=-1, keepdims=True)


# ------------------------------ wrappers -------------------------------------

def conv_stage(x, w, b, *, k, split):
    """x: (N, Cin, H, W) bf16; w: (2, Cout, K) bf16; b: (2, Cout, 1) f32.
    Returns (N, Cout, H, Wp) bf16; only [..., :W] columns are valid."""
    N, Cin, H, W = x.shape
    Cout, K = w.shape[1], w.shape[2]
    p = k // 2
    Hp, Wp = H + 2 * p, W + 2 * p
    HWp = H * Wp
    L = Hp * Wp + (k - 1)     # +tail halo so the last taps never read OOB

    xp = jnp.pad(x, ((0, 0), (0, CP - Cin), (p, p), (p, p)))
    xp = xp.reshape(N, CP, Hp * Wp)
    xp = jnp.pad(xp, ((0, 0), (0, 0), (0, k - 1)))

    tr = max(1, min(H, MAX_TILE_LANES // Wp))
    tiles = tuple((r0, min(tr, H - r0)) for r0 in range(0, H, tr))
    tmax = tr * Wp

    cost = pl.CostEstimate(
        flops=2 * N * Cout * K * HWp,
        transcendentals=0,
        bytes_accessed=2 * (N * CP * L + 2 * Cout * K + N * Cout * HWp)
        + 4 * 2 * Cout)

    out = pl.pallas_call(
        functools.partial(_conv_stage_kernel, k=k, wp=Wp, tiles=tiles,
                          split=split),
        out_shape=jax.ShapeDtypeStruct((N, Cout, HWp), jnp.bfloat16),
        grid_spec=pltpu.PrefetchScalarGridSpec(
            num_scalar_prefetch=0,
            grid=(N,),
            in_specs=[
                pl.BlockSpec((1, CP, L), lambda n: (n, 0, 0)),
                pl.BlockSpec((2, Cout, K), lambda n: (0, 0, 0)),
                pl.BlockSpec((2, Cout, 1), lambda n: (0, 0, 0)),
            ],
            out_specs=pl.BlockSpec((1, Cout, HWp), lambda n: (n, 0, 0)),
            scratch_shapes=[pltpu.VMEM((K, tmax), jnp.bfloat16)],
        ),
        compiler_params=pltpu.CompilerParams(
            dimension_semantics=("parallel",),
            vmem_limit_bytes=32 * 1024 * 1024),
        cost_estimate=cost,
    )(xp, w, b)
    return out.reshape(N, Cout, H, Wp)


def maxpool2(x):
    N, C, H, W = x.shape
    H2, W2 = (H // 2) * 2, (W // 2) * 2
    x = x[:, :, :H2, :W2]
    return x.reshape(N, C, H2 // 2, 2, W2 // 2, 2).max(axis=(3, 5))


def conv_trunk(x, conv_packed, split):
    """x: (N, 3, H, W) float. Images [0, split) use input_module conv weights,
    [split, N) use gate conv weights. Returns (N, hidden) f32 features."""
    x = x.astype(jnp.bfloat16)
    for k, st in zip(CONV_KS, conv_packed):
        W = x.shape[3]
        y = conv_stage(x, st["w"], st["b"], k=k, split=split)
        x = maxpool2(y[:, :, :, :W])       # drop junk W-pad columns, 2x2 pool
    feat = jnp.mean(x.astype(jnp.float32), axis=(2, 3))   # AdaptiveAvgPool2d(1)
    return jnp.maximum(feat, 0.0)                          # trailing ReLU


def tail(feat_im, loc_im, feat_g, loc_g, packed):
    n_im, b = feat_im.shape[0], feat_g.shape[0]
    ex = packed["experts"]
    E = ex["w3"].shape[1]
    args = ([feat_im, loc_im, feat_g, loc_g]
            + list(packed["head_im"]) + list(packed["head_g"])
            + [ex["w1"], ex["b1"], ex["w2"], ex["b2"], ex["w3"], ex["b3"]])
    return pl.pallas_call(
        _tail_kernel,
        out_shape=(jax.ShapeDtypeStruct((n_im, E), jnp.float32),
                   jax.ShapeDtypeStruct((b, E), jnp.float32)),
    )(*args)


# --------------------------- one-time weight packing --------------------------

def _bn_affine(bn):
    scale = bn["gamma"] * jax.lax.rsqrt(bn["rv"] + 1e-5)
    shift = bn["beta"] - bn["rm"] * scale
    return scale.reshape(1, -1), shift.reshape(1, -1)


def _pack_conv_stage(w_pair, b_pair, k):
    """Two weight sets of one stage -> (2, Cout, k*k*CP) bf16, (2, Cout, 1) f32."""
    ws = []
    for w in w_pair:                                   # (Cout, Cin, k, k)
        cout, cin = w.shape[0], w.shape[1]
        wt = jnp.transpose(w, (0, 2, 3, 1))            # (Cout, k, k, Cin)
        wt = jnp.pad(wt, ((0, 0), (0, 0), (0, 0), (0, CP - cin)))
        ws.append(wt.reshape(cout, k * k * CP))
    w = jnp.stack(ws).astype(jnp.bfloat16)
    b = jnp.stack([bb.reshape(-1, 1) for bb in b_pair]).astype(jnp.float32)
    return dict(w=w, b=b)


def _pack_head(p):
    h = p["loc_w1"].shape[1]
    bf = jnp.bfloat16
    img_s, img_t = _bn_affine(p["img_bn"])
    loc_s, loc_t = _bn_affine(p["loc_bn"])
    return (img_s, img_t,
            p["loc_w1"].astype(bf), p["loc_b1"].reshape(1, -1),
            p["loc_w2"].astype(bf), p["loc_b2"].reshape(1, -1),
            loc_s, loc_t,
            p["dec_w1"][:h].astype(bf), p["dec_w1"][h:].astype(bf),
            p["dec_b1"].reshape(1, -1),
            p["dec_w2"].astype(bf), p["dec_b2"].reshape(1, -1))


def _pack_experts(experts):
    E = len(experts)
    h = experts[0]["w1"].shape[0]
    w1 = jnp.concatenate([e["w1"] for e in experts], axis=1)          # (h, E*h)
    b1 = jnp.concatenate([e["b1"] for e in experts]).reshape(1, E * h)
    b2 = jnp.concatenate([e["b2"] for e in experts]).reshape(1, E * h)
    b3 = jnp.concatenate([e["b3"] for e in experts]).reshape(1, E)
    w2 = jnp.zeros((E * h, E * h), jnp.float32)
    w3 = jnp.zeros((E * h, E), jnp.float32)
    for e in range(E):
        w2 = jax.lax.dynamic_update_slice(w2, experts[e]["w2"], (e * h, e * h))
        w3 = jax.lax.dynamic_update_slice(w3, experts[e]["w3"], (e * h, e))
    return dict(w1=w1.astype(jnp.bfloat16), b1=b1,
                w2=w2.astype(jnp.bfloat16), b2=b2,
                w3=w3.astype(jnp.bfloat16), b3=b3)


def prepare_params(params):
    """One-time packing (conv layout, BN affines, expert block matrices, bf16
    casts) hoisted out of the per-forward path."""
    im, g = params["input_module"], params["gate"]
    conv = []
    for i, k in enumerate(CONV_KS):
        name = f"conv{i + 1}"
        conv.append(_pack_conv_stage(
            [im["img"][f"{name}_w"], g["img"][f"{name}_w"]],
            [im["img"][f"{name}_b"], g["img"][f"{name}_b"]], k))
    return dict(conv=conv,
                head_im=_pack_head(im),
                head_g=_pack_head(g),
                experts=_pack_experts(params["experts"]))


# ------------------------------ forward --------------------------------------

def samoe_forward(context, inp, packed, expert_trace):
    imgs, locs, dones = context["imgs"], context["locs"], context["dones"]
    B, S = imgs.shape[0], imgs.shape[1]
    C, H, W = imgs.shape[2], imgs.shape[3], imgs.shape[4]

    ctx_imgs = imgs.reshape(B * S, C, H, W)
    ctx_locs = locs.reshape(B * S, -1)
    dones_bs = dones.reshape(B, S)

    # One merged conv trunk over [ctx rows | query rows | query rows(gate)];
    # per-image weight-set selection happens inside the kernel.
    split = B * S + B
    trunk_in = jnp.concatenate([ctx_imgs, inp["img"], inp["img"]], axis=0)
    feats = conv_trunk(trunk_in, packed["conv"], split)        # (split+B, h)

    feat_im, feat_g = feats[:split], feats[split:]
    loc_im = jnp.concatenate([ctx_locs, inp["loc"]], axis=0)
    loc_g = inp["loc"]

    # One fused tail kernel: both heads + all expert MLPs.
    all_expert_out, prior = tail(feat_im, loc_im.astype(jnp.float32),
                                 feat_g, loc_g.astype(jnp.float32), packed)
    E = prior.shape[1]

    preds = all_expert_out[:B * S].reshape(B, S, E).transpose(0, 2, 1)  # (B,E,S)
    expert_outputs = all_expert_out[B * S:].reshape(B, E, 1)

    # Gating epilogue (sub-vreg sized) in plain JAX.
    err = jnp.sum((preds - dones_bs[:, None, :]) ** 2, axis=-1)         # (B,E)
    ew = jax.nn.softmax(-err, axis=-1) * prior
    expert_weights = ew / jnp.sum(ew, axis=-1, keepdims=True)

    new_trace = expert_trace + jnp.sum(expert_weights, axis=0)
    return expert_weights, expert_outputs, new_trace


# --------------------------- parameter init ---------------------------------

def _xavier(key, shape, fan_in, fan_out):
    bound = math.sqrt(6.0 / (fan_in + fan_out))
    return jax.random.uniform(key, shape, jnp.float32, -bound, bound)


def _bias(key, n, fan_in):
    bound = 1.0 / math.sqrt(fan_in)
    return jax.random.uniform(key, (n,), jnp.float32, -bound, bound)


def init_params(key, hidden=32, num_experts=4):
    keys = iter(jax.random.split(key, 128))
    nk = lambda: next(keys)

    def bn(n):
        return dict(gamma=jnp.ones((n,), jnp.float32),
                    beta=jnp.zeros((n,), jnp.float32),
                    rm=jnp.zeros((n,), jnp.float32),
                    rv=jnp.ones((n,), jnp.float32))

    def img_params():
        return dict(
            conv1_w=_xavier(nk(), (8, 3, 5, 5), 5 * 5 * 3, 5 * 5 * 8),
            conv1_b=_bias(nk(), 8, 5 * 5 * 3),
            conv2_w=_xavier(nk(), (16, 8, 3, 3), 3 * 3 * 8, 3 * 3 * 16),
            conv2_b=_bias(nk(), 16, 3 * 3 * 8),
            conv3_w=_xavier(nk(), (hidden, 16, 3, 3), 3 * 3 * 16, 3 * 3 * hidden),
            conv3_b=_bias(nk(), hidden, 3 * 3 * 16),
        )

    def input_expert_params(head_out):
        return dict(
            img=img_params(),
            img_bn=bn(hidden),
            loc_w1=_xavier(nk(), (2, hidden), 2, hidden),
            loc_b1=_bias(nk(), hidden, 2),
            loc_w2=_xavier(nk(), (hidden, hidden), hidden, hidden),
            loc_b2=_bias(nk(), hidden, hidden),
            loc_bn=bn(hidden),
            dec_w1=_xavier(nk(), (2 * hidden, hidden), 2 * hidden, hidden),
            dec_b1=_bias(nk(), hidden, 2 * hidden),
            dec_w2=_xavier(nk(), (hidden, head_out), hidden, head_out),
            dec_b2=_bias(nk(), head_out, hidden),
        )

    experts = []
    for _ in range(num_experts):
        experts.append(dict(
            w1=_xavier(nk(), (hidden, hidden), hidden, hidden),
            b1=_bias(nk(), hidden, hidden),
            w2=_xavier(nk(), (hidden, hidden), hidden, hidden),
            b2=_bias(nk(), hidden, hidden),
            w3=_xavier(nk(), (hidden, 1), hidden, 1),
            b3=_bias(nk(), 1, hidden),
        ))

    return dict(
        input_module=input_expert_params(hidden),
        gate=input_expert_params(num_experts),
        experts=experts,
    )


# --------------------------------- main --------------------------------------

if __name__ == "__main__":
    B, S, C, H, W = 2, 3, 3, 16, 16     # small shapes (module uses 88x88x3)
    hidden, E = 32, 4

    root = jax.random.PRNGKey(0)
    pkey, dkey = jax.random.split(root)
    params = init_params(pkey, hidden=hidden, num_experts=E)
    packed = prepare_params(params)      # one-time packing, outside the jit

    k1, k2, k3, k4, k5 = jax.random.split(dkey, 5)
    context = dict(
        imgs=jax.random.normal(k1, (B, S, C, H, W), jnp.float32),
        locs=jax.random.normal(k2, (B, S, 2), jnp.float32),
        dones=(jax.random.uniform(k3, (B, S, 1)) > 0.5).astype(jnp.float32),
    )
    inp = dict(
        img=jax.random.normal(k4, (B, C, H, W), jnp.float32),
        loc=jax.random.normal(k5, (B, 2), jnp.float32),
    )
    expert_trace = jnp.ones((E,), jnp.float32)

    fwd = jax.jit(samoe_forward)
    expert_weights, expert_outputs, new_trace = fwd(context, inp, packed,
                                                    expert_trace)
    jax.block_until_ready((expert_weights, expert_outputs, new_trace))

    assert expert_weights.shape == (B, E)
    assert expert_outputs.shape == (B, E, 1)
    assert new_trace.shape == (E,)
    assert bool(jnp.all(jnp.isfinite(expert_weights)))
    assert bool(jnp.all(jnp.isfinite(expert_outputs)))
    assert bool(jnp.allclose(jnp.sum(expert_weights, axis=1), 1.0, atol=1e-5))
    print("KERNEL_OK")
</pallas_src>

<mosaic_0001>
module attributes {stable_mosaic.version = 11 : i64} {
  func.func @_conv_stage_kernel(%arg0: i32, %arg1: memref<1x16x404xbf16, #tpu.memory_space<vmem>>, %arg2: memref<2x8x400xbf16, #tpu.memory_space<vmem>>, %arg3: memref<2x8x1xf32, #tpu.memory_space<vmem>>, %arg4: memref<1x8x320xbf16, #tpu.memory_space<vmem>>, %arg5: memref<400x320xbf16, #tpu.memory_space<vmem>>) attributes {dimension_semantics = [#tpu.dimension_semantics<parallel>], iteration_bounds = array<i64: 10>, scalar_prefetch = 0 : i64, scratch_operands = 1 : i64, tpu.core_type = #tpu.core_type<tc>, window_params = [{transform_indices = @transform_0, window_bounds = array<i64: 1, 16, 404>}, {pipeline_mode = #tpu.pipeline_mode<synchronous>, transform_indices = @transform_1, window_bounds = array<i64: 2, 8, 400>}, {pipeline_mode = #tpu.pipeline_mode<synchronous>, transform_indices = @transform_2, window_bounds = array<i64: 2, 8, 1>}, {transform_indices = @transform_3, window_bounds = array<i64: 1, 8, 320>}]} {
    %c8_i32 = arith.constant 8 : i32
    %0 = arith.cmpi sge, %arg0, %c8_i32 : i32
    %c1_i32 = arith.constant 1 : i32
    %c0_i32 = arith.constant 0 : i32
    %1 = arith.select %0, %c1_i32, %c0_i32 : i32
    %2 = arith.index_cast %1 : i32 to index
    %c0 = arith.constant 0 : index
    %c0_0 = arith.constant 0 : index
    %3 = vector.load %arg2[%2, %c0, %c0_0] : memref<2x8x400xbf16, #tpu.memory_space<vmem>>, vector<1x8x400xbf16>
    %4 = vector.shape_cast %3 : vector<1x8x400xbf16> to vector<8x400xbf16>
    %5 = arith.index_cast %1 : i32 to index
    %c0_1 = arith.constant 0 : index
    %c0_2 = arith.constant 0 : index
    %6 = vector.load %arg3[%5, %c0_1, %c0_2] : memref<2x8x1xf32, #tpu.memory_space<vmem>>, vector<1x8x1xf32>
    %7 = vector.shape_cast %6 : vector<1x8x1xf32> to vector<8x1xf32>
    %c0_3 = arith.constant 0 : index
    %c0_4 = arith.constant 0 : index
    %c0_5 = arith.constant 0 : index
    %8 = vector.load %arg1[%c0_3, %c0_4, %c0_5] : memref<1x16x404xbf16, #tpu.memory_space<vmem>>, vector<1x16x320xbf16>
    %9 = vector.shape_cast %8 : vector<1x16x320xbf16> to vector<16x320xbf16>
    %c0_6 = arith.constant 0 : index
    %c0_7 = arith.constant 0 : index
    %10 = vector.load %arg5[%c0_6, %c0_7] : memref<400x320xbf16, #tpu.memory_space<vmem>>, vector<16x320xbf16>
    tpu.vector_store %arg5[%c0_6, %c0_7], %9 {strides = array<i32>} : memref<400x320xbf16, #tpu.memory_space<vmem>>, vector<16x320xbf16>,
    %c0_8 = arith.constant 0 : index
    %c0_9 = arith.constant 0 : index
    %c1 = arith.constant 1 : index
    %11 = vector.load %arg1[%c0_8, %c0_9, %c1] : memref<1x16x404xbf16, #tpu.memory_space<vmem>>, vector<1x16x320xbf16>
    %12 = vector.shape_cast %11 : vector<1x16x320xbf16> to vector<16x320xbf16>
    %c16 = arith.constant 16 : index
    %c0_10 = arith.constant 0 : index
    %13 = vector.load %arg5[%c16, %c0_10] : memref<400x320xbf16, #tpu.memory_space<vmem>>, vector<16x320xbf16>
    tpu.vector_store %arg5[%c16, %c0_10], %12 {strides = array<i32>} : memref<400x320xbf16, #tpu.memory_space<vmem>>, vector<16x320xbf16>,
    %c0_11 = arith.constant 0 : index
    %c0_12 = arith.constant 0 : index
    %c2 = arith.constant 2 : index
    %14 = vector.load %arg1[%c0_11, %c0_12, %c2] : memref<1x16x404xbf16, #tpu.memory_space<vmem>>, vector<1x16x320xbf16>
    %15 = vector.shape_cast %14 : vector<1x16x320xbf16> to vector<16x320xbf16>
    %c32 = arith.constant 32 : index
    %c0_13 = arith.constant 0 : index
    %16 = vector.load %arg5[%c32, %c0_13] : memref<400x320xbf16, #tpu.memory_space<vmem>>, vector<16x320xbf16>
    tpu.vector_store %arg5[%c32, %c0_13], %15 {strides = array<i32>} : memref<400x320xbf16, #tpu.memory_space<vmem>>, vector<16x320xbf16>,
    %c0_14 = arith.constant 0 : index
    %c0_15 = arith.constant 0 : index
    %c3 = arith.constant 3 : index
    %17 = vector.load %arg1[%c0_14, %c0_15, %c3] : memref<1x16x404xbf16, #tpu.memory_space<vmem>>, vector<1x16x320xbf16>
    %18 = vector.shape_cast %17 : vector<1x16x320xbf16> to vector<16x320xbf16>
    %c48 = arith.constant 48 : index
    %c0_16 = arith.constant 0 : index
    %19 = vector.load %arg5[%c48, %c0_16] : memref<400x320xbf16, #tpu.memory_space<vmem>>, vector<16x320xbf16>
    tpu.vector_store %arg5[%c48, %c0_16], %18 {strides = array<i32>} : memref<400x320xbf16, #tpu.memory_space<vmem>>, vector<16x320xbf16>,
    %c0_17 = arith.constant 0 : index
    %c0_18 = arith.constant 0 : index
    %c4 = arith.constant 4 : index
    %20 = vector.load %arg1[%c0_17, %c0_18, %c4] : memref<1x16x404xbf16, #tpu.memory_space<vmem>>, vector<1x16x320xbf16>
    %21 = vector.shape_cast %20 : vector<1x16x320xbf16> to vector<16x320xbf16>
    %c64 = arith.constant 64 : index
    %c0_19 = arith.constant 0 : index
    %22 = vector.load %arg5[%c64, %c0_19] : memref<400x320xbf16, #tpu.memory_space<vmem>>, vector<16x320xbf16>
    tpu.vector_store %arg5[%c64, %c0_19], %21 {strides = array<i32>} : memref<400x320xbf16, #tpu.memory_space<vmem>>, vector<16x320xbf16>,
    %c0_20 = arith.constant 0 : index
    %c0_21 = arith.constant 0 : index
    %c20 = arith.constant 20 : index
    %23 = vector.load %arg1[%c0_20, %c0_21, %c20] : memref<1x16x404xbf16, #tpu.memory_space<vmem>>, vector<1x16x320xbf16>
    %24 = vector.shape_cast %23 : vector<1x16x320xbf16> to vector<16x320xbf16>
    %c80 = arith.constant 80 : index
    %c0_22 = arith.constant 0 : index
    %25 = vector.load %arg5[%c80, %c0_22] : memref<400x320xbf16, #tpu.memory_space<vmem>>, vector<16x320xbf16>
    tpu.vector_store %arg5[%c80, %c0_22], %24 {strides = array<i32>} : memref<400x320xbf16, #tpu.memory_space<vmem>>, vector<16x320xbf16>,
    %c0_23 = arith.constant 0 : index
    %c0_24 = arith.constant 0 : index
    %c21 = arith.constant 21 : index
    %26 = vector.load %arg1[%c0_23, %c0_24, %c21] : memref<1x16x404xbf16, #tpu.memory_space<vmem>>, vector<1x16x320xbf16>
    %27 = vector.shape_cast %26 : vector<1x16x320xbf16> to vector<16x320xbf16>
    %c96 = arith.constant 96 : index
    %c0_25 = arith.constant 0 : index
    %28 = vector.load %arg5[%c96, %c0_25] : memref<400x320xbf16, #tpu.memory_space<vmem>>, vector<16x320xbf16>
    tpu.vector_store %arg5[%c96, %c0_25], %27 {strides = array<i32>} : memref<400x320xbf16, #tpu.memory_space<vmem>>, vector<16x320xbf16>,
    %c0_26 = arith.constant 0 : index
    %c0_27 = arith.constant 0 : index
    %c22 = arith.constant 22 : index
    %29 = vector.load %arg1[%c0_26, %c0_27, %c22] : memref<1x16x404xbf16, #tpu.memory_space<vmem>>, vector<1x16x320xbf16>
    %30 = vector.shape_cast %29 : vector<1x16x320xbf16> to vector<16x320xbf16>
    %c112 = arith.constant 112 : index
    %c0_28 = arith.constant 0 : index
    %31 = vector.load %arg5[%c112, %c0_28] : memref<400x320xbf16, #tpu.memory_space<vmem>>, vector<16x320xbf16>
    tpu.vector_store %arg5[%c112, %c0_28], %30 {strides = array<i32>} : memref<400x320xbf16, #tpu.memory_space<vmem>>, vector<16x320xbf16>,
    %c0_29 = arith.constant 0 : index
    %c0_30 = arith.constant 0 : index
    %c23 = arith.constant 23 : index
    %32 = vector.load %arg1[%c0_29, %c0_30, %c23] : memref<1x16x404xbf16, #tpu.memory_space<vmem>>, vector<1x16x320xbf16>
    %33 = vector.shape_cast %32 : vector<1x16x320xbf16> to vector<16x320xbf16>
    %c128 = arith.constant 128 : index
    %c0_31 = arith.constant 0 : index
    %34 = vector.load %arg5[%c128, %c0_31] : memref<400x320xbf16, #tpu.memory_space<vmem>>, vector<16x320xbf16>
    tpu.vector_store %arg5[%c128, %c0_31], %33 {strides = array<i32>} : memref<400x320xbf16, #tpu.memory_space<vmem>>, vector<16x320xbf16>,
    %c0_32 = arith.constant 0 : index
    %c0_33 = arith.constant 0 : index
    %c24 = arith.constant 24 : index
    %35 = vector.load %arg1[%c0_32, %c0_33, %c24] : memref<1x16x404xbf16, #tpu.memory_space<vmem>>, vector<1x16x320xbf16>
    %36 = vector.shape_cast %35 : vector<1x16x320xbf16> to vector<16x320xbf16>
    %c144 = arith.constant 144 : index
    %c0_34 = arith.constant 0 : index
    %37 = vector.load %arg5[%c144, %c0_34] : memref<400x320xbf16, #tpu.memory_space<vmem>>, vector<16x320xbf16>
    tpu.vector_store %arg5[%c144, %c0_34], %36 {strides = array<i32>} : memref<400x320xbf16, #tpu.memory_space<vmem>>, vector<16x320xbf16>,
    %c0_35 = arith.constant 0 : index
    %c0_36 = arith.constant 0 : index
    %c40 = arith.constant 40 : index
    %38 = vector.load %arg1[%c0_35, %c0_36, %c40] : memref<1x16x404xbf16, #tpu.memory_space<vmem>>, vector<1x16x320xbf16>
    %39 = vector.shape_cast %38 : vector<1x16x320xbf16> to vector<16x320xbf16>
    %c160 = arith.constant 160 : index
    %c0_37 = arith.constant 0 : index
    %40 = vector.load %arg5[%c160, %c0_37] : memref<400x320xbf16, #tpu.memory_space<vmem>>, vector<16x320xbf16>
    tpu.vector_store %arg5[%c160, %c0_37], %39 {strides = array<i32>} : memref<400x320xbf16, #tpu.memory_space<vmem>>, vector<16x320xbf16>,
    %c0_38 = arith.constant 0 : index
    %c0_39 = arith.constant 0 : index
    %c41 = arith.constant 41 : index
    %41 = vector.load %arg1[%c0_38, %c0_39, %c41] : memref<1x16x404xbf16, #tpu.memory_space<vmem>>, vector<1x16x320xbf16>
    %42 = vector.shape_cast %41 : vector<1x16x320xbf16> to vector<16x320xbf16>
    %c176 = arith.constant 176 : index
    %c0_40 = arith.constant 0 : index
    %43 = vector.load %arg5[%c176, %c0_40] : memref<400x320xbf16, #tpu.memory_space<vmem>>, vector<16x320xbf16>
    tpu.vector_store %arg5[%c176, %c0_40], %42 {strides = array<i32>} : memref<400x320xbf16, #tpu.memory_space<vmem>>, vector<16x320xbf16>,
    %c0_41 = arith.constant 0 : index
    %c0_42 = arith.constant 0 : index
    %c42 = arith.constant 42 : index
    %44 = vector.load %arg1[%c0_41, %c0_42, %c42] : memref<1x16x404xbf16, #tpu.memory_space<vmem>>, vector<1x16x320xbf16>
    %45 = vector.shape_cast %44 : vector<1x16x320xbf16> to vector<16x320xbf16>
    %c192 = arith.constant 192 : index
    %c0_43 = arith.constant 0 : index
    %46 = vector.load %arg5[%c192, %c0_43] : memref<400x320xbf16, #tpu.memory_space<vmem>>, vector<16x320xbf16>
    tpu.vector_store %arg5[%c192, %c0_43], %45 {strides = array<i32>} : memref<400x320xbf16, #tpu.memory_space<vmem>>, vector<16x320xbf16>,
    %c0_44 = arith.constant 0 : index
    %c0_45 = arith.constant 0 : index
    %c43 = arith.constant 43 : index
    %47 = vector.load %arg1[%c0_44, %c0_45, %c43] : memref<1x16x404xbf16, #tpu.memory_space<vmem>>, vector<1x16x320xbf16>
    %48 = vector.shape_cast %47 : vector<1x16x320xbf16> to vector<16x320xbf16>
    %c208 = arith.constant 208 : index
    %c0_46 = arith.constant 0 : index
    %49 = vector.load %arg5[%c208, %c0_46] : memref<400x320xbf16, #tpu.memory_space<vmem>>, vector<16x320xbf16>
    tpu.vector_store %arg5[%c208, %c0_46], %48 {strides = array<i32>} : memref<400x320xbf16, #tpu.memory_space<vmem>>, vector<16x320xbf16>,
    %c0_47 = arith.constant 0 : index
    %c0_48 = arith.constant 0 : index
    %c44 = arith.constant 44 : index
    %50 = vector.load %arg1[%c0_47, %c0_48, %c44] : memref<1x16x404xbf16, #tpu.memory_space<vmem>>, vector<1x16x320xbf16>
    %51 = vector.shape_cast %50 : vector<1x16x320xbf16> to vector<16x320xbf16>
    %c224 = arith.constant 224 : index
    %c0_49 = arith.constant 0 : index
    %52 = vector.load %arg5[%c224, %c0_49] : memref<400x320xbf16, #tpu.memory_space<vmem>>, vector<16x320xbf16>
    tpu.vector_store %arg5[%c224, %c0_49], %51 {strides = array<i32>} : memref<400x320xbf16, #tpu.memory_space<vmem>>, vector<16x320xbf16>,
    %c0_50 = arith.constant 0 : index
    %c0_51 = arith.constant 0 : index
    %c60 = arith.constant 60 : index
    %53 = vector.load %arg1[%c0_50, %c0_51, %c60] : memref<1x16x404xbf16, #tpu.memory_space<vmem>>, vector<1x16x320xbf16>
    %54 = vector.shape_cast %53 : vector<1x16x320xbf16> to vector<16x320xbf16>
    %c240 = arith.constant 240 : index
    %c0_52 = arith.constant 0 : index
    %55 = vector.load %arg5[%c240, %c0_52] : memref<400x320xbf16, #tpu.memory_space<vmem>>, vector<16x320xbf16>
    tpu.vector_store %arg5[%c240, %c0_52], %54 {strides = array<i32>} : memref<400x320xbf16, #tpu.memory_space<vmem>>, vector<16x320xbf16>,
    %c0_53 = arith.constant 0 : index
    %c0_54 = arith.constant 0 : index
    %c61 = arith.constant 61 : index
    %56 = vector.load %arg1[%c0_53, %c0_54, %c61] : memref<1x16x404xbf16, #tpu.memory_space<vmem>>, vector<1x16x320xbf16>
    %57 = vector.shape_cast %56 : vector<1x16x320xbf16> to vector<16x320xbf16>
    %c256 = arith.constant 256 : index
    %c0_55 = arith.constant 0 : index
    %58 = vector.load %arg5[%c256, %c0_55] : memref<400x320xbf16, #tpu.memory_space<vmem>>, vector<16x320xbf16>
    tpu.vector_store %arg5[%c256, %c0_55], %57 {strides = array<i32>} : memref<400x320xbf16, #tpu.memory_space<vmem>>, vector<16x320xbf16>,
    %c0_56 = arith.constant 0 : index
    %c0_57 = arith.constant 0 : index
    %c62 = arith.constant 62 : index
    %59 = vector.load %arg1[%c0_56, %c0_57, %c62] : memref<1x16x404xbf16, #tpu.memory_space<vmem>>, vector<1x16x320xbf16>
    %60 = vector.shape_cast %59 : vector<1x16x320xbf16> to vector<16x320xbf16>
    %c272 = arith.constant 272 : index
    %c0_58 = arith.constant 0 : index
    %61 = vector.load %arg5[%c272, %c0_58] : memref<400x320xbf16, #tpu.memory_space<vmem>>, vector<16x320xbf16>
    tpu.vector_store %arg5[%c272, %c0_58], %60 {strides = array<i32>} : memref<400x320xbf16, #tpu.memory_space<vmem>>, vector<16x320xbf16>,
    %c0_59 = arith.constant 0 : index
    %c0_60 = arith.constant 0 : index
    %c63 = arith.constant 63 : index
    %62 = vector.load %arg1[%c0_59, %c0_60, %c63] : memref<1x16x404xbf16, #tpu.memory_space<vmem>>, vector<1x16x320xbf16>
    %63 = vector.shape_cast %62 : vector<1x16x320xbf16> to vector<16x320xbf16>
    %c288 = arith.constant 288 : index
    %c0_61 = arith.constant 0 : index
    %64 = vector.load %arg5[%c288, %c0_61] : memref<400x320xbf16, #tpu.memory_space<vmem>>, vector<16x320xbf16>
    tpu.vector_store %arg5[%c288, %c0_61], %63 {strides = array<i32>} : memref<400x320xbf16, #tpu.memory_space<vmem>>, vector<16x320xbf16>,
    %c0_62 = arith.constant 0 : index
    %c0_63 = arith.constant 0 : index
    %c64_64 = arith.constant 64 : index
    %65 = vector.load %arg1[%c0_62, %c0_63, %c64_64] : memref<1x16x404xbf16, #tpu.memory_space<vmem>>, vector<1x16x320xbf16>
    %66 = vector.shape_cast %65 : vector<1x16x320xbf16> to vector<16x320xbf16>
    %c304 = arith.constant 304 : index
    %c0_65 = arith.constant 0 : index
    %67 = vector.load %arg5[%c304, %c0_65] : memref<400x320xbf16, #tpu.memory_space<vmem>>, vector<16x320xbf16>
    tpu.vector_store %arg5[%c304, %c0_65], %66 {strides = array<i32>} : memref<400x320xbf16, #tpu.memory_space<vmem>>, vector<16x320xbf16>,
    %c0_66 = arith.constant 0 : index
    %c0_67 = arith.constant 0 : index
    %c80_68 = arith.constant 80 : index
    %68 = vector.load %arg1[%c0_66, %c0_67, %c80_68] : memref<1x16x404xbf16, #tpu.memory_space<vmem>>, vector<1x16x320xbf16>
    %69 = vector.shape_cast %68 : vector<1x16x320xbf16> to vector<16x320xbf16>
    %c320 = arith.constant 320 : index
    %c0_69 = arith.constant 0 : index
    %70 = vector.load %arg5[%c320, %c0_69] : memref<400x320xbf16, #tpu.memory_space<vmem>>, vector<16x320xbf16>
    tpu.vector_store %arg5[%c320, %c0_69], %69 {strides = array<i32>} : memref<400x320xbf16, #tpu.memory_space<vmem>>, vector<16x320xbf16>,
    %c0_70 = arith.constant 0 : index
    %c0_71 = arith.constant 0 : index
    %c81 = arith.constant 81 : index
    %71 = vector.load %arg1[%c0_70, %c0_71, %c81] : memref<1x16x404xbf16, #tpu.memory_space<vmem>>, vector<1x16x320xbf16>
    %72 = vector.shape_cast %71 : vector<1x16x320xbf16> to vector<16x320xbf16>
    %c336 = arith.constant 336 : index
    %c0_72 = arith.constant 0 : index
    %73 = vector.load %arg5[%c336, %c0_72] : memref<400x320xbf16, #tpu.memory_space<vmem>>, vector<16x320xbf16>
    tpu.vector_store %arg5[%c336, %c0_72], %72 {strides = array<i32>} : memref<400x320xbf16, #tpu.memory_space<vmem>>, vector<16x320xbf16>,
    %c0_73 = arith.constant 0 : index
    %c0_74 = arith.constant 0 : index
    %c82 = arith.constant 82 : index
    %74 = vector.load %arg1[%c0_73, %c0_74, %c82] : memref<1x16x404xbf16, #tpu.memory_space<vmem>>, vector<1x16x320xbf16>
    %75 = vector.shape_cast %74 : vector<1x16x320xbf16> to vector<16x320xbf16>
    %c352 = arith.constant 352 : index
    %c0_75 = arith.constant 0 : index
    %76 = vector.load %arg5[%c352, %c0_75] : memref<400x320xbf16, #tpu.memory_space<vmem>>, vector<16x320xbf16>
    tpu.vector_store %arg5[%c352, %c0_75], %75 {strides = array<i32>} : memref<400x320xbf16, #tpu.memory_space<vmem>>, vector<16x320xbf16>,
    %c0_76 = arith.constant 0 : index
    %c0_77 = arith.constant 0 : index
    %c83 = arith.constant 83 : index
    %77 = vector.load %arg1[%c0_76, %c0_77, %c83] : memref<1x16x404xbf16, #tpu.memory_space<vmem>>, vector<1x16x320xbf16>
    %78 = vector.shape_cast %77 : vector<1x16x320xbf16> to vector<16x320xbf16>
    %c368 = arith.constant 368 : index
    %c0_78 = arith.constant 0 : index
    %79 = vector.load %arg5[%c368, %c0_78] : memref<400x320xbf16, #tpu.memory_space<vmem>>, vector<16x320xbf16>
    tpu.vector_store %arg5[%c368, %c0_78], %78 {strides = array<i32>} : memref<400x320xbf16, #tpu.memory_space<vmem>>, vector<16x320xbf16>,
    %c0_79 = arith.constant 0 : index
    %c0_80 = arith.constant 0 : index
    %c84 = arith.constant 84 : index
    %80 = vector.load %arg1[%c0_79, %c0_80, %c84] : memref<1x16x404xbf16, #tpu.memory_space<vmem>>, vector<1x16x320xbf16>
    %81 = vector.shape_cast %80 : vector<1x16x320xbf16> to vector<16x320xbf16>
    %c384 = arith.constant 384 : index
    %c0_81 = arith.constant 0 : index
    %82 = vector.load %arg5[%c384, %c0_81] : memref<400x320xbf16, #tpu.memory_space<vmem>>, vector<16x320xbf16>
    tpu.vector_store %arg5[%c384, %c0_81], %81 {strides = array<i32>} : memref<400x320xbf16, #tpu.memory_space<vmem>>, vector<16x320xbf16>,
    %c0_82 = arith.constant 0 : index
    %c0_83 = arith.constant 0 : index
    %83 = vector.load %arg5[%c0_82, %c0_83] : memref<400x320xbf16, #tpu.memory_space<vmem>>, vector<400x320xbf16>
    %cst = arith.constant dense<0.000000e+00> : vector<8x320xf32>
    %84 = tpu.matmul %4, %83, %cst {dimension_numbers = #tpu.dot_dimension_numbers<[1], [0], [0], [1], [0, 0, 1, 1], [], []>} : vector<8x400xbf16>, vector<400x320xbf16>, vector<8x320xf32> -> vector<8x320xf32>
    %85 = vector.broadcast %7 : vector<8x1xf32> to vector<8x320xf32>
    %86 = arith.addf %84, %85 : vector<8x320xf32>
    %cst_84 = arith.constant 0.000000e+00 : f32
    %87 = vector.broadcast %cst_84 : f32 to vector<8x320xf32>
    %88 = arith.maximumf %86, %87 : vector<8x320xf32>
    %89 = arith.truncf %88 : vector<8x320xf32> to vector<8x320xbf16>
    %c0_85 = arith.constant 0 : index
    %c0_86 = arith.constant 0 : index
    %c0_87 = arith.constant 0 : index
    %90 = vector.load %arg4[%c0_85, %c0_86, %c0_87] : memref<1x8x320xbf16, #tpu.memory_space<vmem>>, vector<1x8x320xbf16>
    %91 = vector.shape_cast %90 : vector<1x8x320xbf16> to vector<8x320xbf16>
    %92 = vector.shape_cast %89 : vector<8x320xbf16> to vector<1x8x320xbf16>
    tpu.vector_store %arg4[%c0_85, %c0_86, %c0_87], %92 {strides = array<i32>} : memref<1x8x320xbf16, #tpu.memory_space<vmem>>, vector<1x8x320xbf16>,
    return
  }
  func.func @transform_0(%arg0: i32) -> (i32, i32, i32) {
    %c0_i32 = arith.constant 0 : i32
    %c0_i32_0 = arith.constant 0 : i32
    %c0_i32_1 = arith.constant 0 : i32
    return %arg0, %c0_i32, %c0_i32_0 : i32, i32, i32
  }
  func.func @transform_1(%arg0: i32) -> (i32, i32, i32) {
    %c0_i32 = arith.constant 0 : i32
    %c0_i32_0 = arith.constant 0 : i32
    %c0_i32_1 = arith.constant 0 : i32
    %c0_i32_2 = arith.constant 0 : i32
    return %c0_i32, %c0_i32_0, %c0_i32_1 : i32, i32, i32
  }
  func.func @transform_2(%arg0: i32) -> (i32, i32, i32) {
    %c0_i32 = arith.constant 0 : i32
    %c0_i32_0 = arith.constant 0 : i32
    %c0_i32_1 = arith.constant 0 : i32
    %c0_i32_2 = arith.constant 0 : i32
    return %c0_i32, %c0_i32_0, %c0_i32_1 : i32, i32, i32
  }
  func.func @transform_3(%arg0: i32) -> (i32, i32, i32) {
    %c0_i32 = arith.constant 0 : i32
    %c0_i32_0 = arith.constant 0 : i32
    %c0_i32_1 = arith.constant 0 : i32
    return %arg0, %c0_i32, %c0_i32_0 : i32, i32, i32
  }
}

module attributes {stable_mosaic.version = 11 : i64} {
  func.func @_conv_stage_kernel(%arg0: i32, %arg1: memref<1x16x102xbf16, #tpu.memory_space<vmem>>, %arg2: memref<2x16x144xbf16, #tpu.memory_space<vmem>>, %arg3: memref<2x16x1xf32, #tpu.memory_space<vmem>>, %arg4: memref<1x16x80xbf16, #tpu.memory_space<vmem>>, %arg5: memref<144x80xbf16, #tpu.memory_space<vmem>>) attributes {dimension_semantics = [#tpu.dimension_semantics<parallel>], iteration_bounds = array<i64: 10>, scalar_prefetch = 0 : i64, scratch_operands = 1 : i64, tpu.core_type = #tpu.core_type<tc>, window_params = [{transform_indices = @transform_0, window_bounds = array<i64: 1, 16, 102>}, {pipeline_mode = #tpu.pipeline_mode<synchronous>, transform_indices = @transform_1, window_bounds = array<i64: 2, 16, 144>}, {pipeline_mode = #tpu.pipeline_mode<synchronous>, transform_indices = @transform_2, window_bounds = array<i64: 2, 16, 1>}, {transform_indices = @transform_3, window_bounds = array<i64: 1, 16, 80>}]} {
    %c8_i32 = arith.constant 8 : i32
    %0 = arith.cmpi sge, %arg0, %c8_i32 : i32
    %c1_i32 = arith.constant 1 : i32
    %c0_i32 = arith.constant 0 : i32
    %1 = arith.select %0, %c1_i32, %c0_i32 : i32
    %2 = arith.index_cast %1 : i32 to index
    %c0 = arith.constant 0 : index
    %c0_0 = arith.constant 0 : index
    %3 = vector.load %arg2[%2, %c0, %c0_0] : memref<2x16x144xbf16, #tpu.memory_space<vmem>>, vector<1x16x144xbf16>
    %4 = vector.shape_cast %3 : vector<1x16x144xbf16> to vector<16x144xbf16>
    %5 = arith.index_cast %1 : i32 to index
    %c0_1 = arith.constant 0 : index
    %c0_2 = arith.constant 0 : index
    %6 = vector.load %arg3[%5, %c0_1, %c0_2] : memref<2x16x1xf32, #tpu.memory_space<vmem>>, vector<1x16x1xf32>
    %7 = vector.shape_cast %6 : vector<1x16x1xf32> to vector<16x1xf32>
    %c0_3 = arith.constant 0 : index
    %c0_4 = arith.constant 0 : index
    %c0_5 = arith.constant 0 : index
    %8 = vector.load %arg1[%c0_3, %c0_4, %c0_5] : memref<1x16x102xbf16, #tpu.memory_space<vmem>>, vector<1x16x80xbf16>
    %9 = vector.shape_cast %8 : vector<1x16x80xbf16> to vector<16x80xbf16>
    %c0_6 = arith.constant 0 : index
    %c0_7 = arith.constant 0 : index
    %10 = vector.load %arg5[%c0_6, %c0_7] : memref<144x80xbf16, #tpu.memory_space<vmem>>, vector<16x80xbf16>
    tpu.vector_store %arg5[%c0_6, %c0_7], %9 {strides = array<i32>} : memref<144x80xbf16, #tpu.memory_space<vmem>>, vector<16x80xbf16>,
    %c0_8 = arith.constant 0 : index
    %c0_9 = arith.constant 0 : index
    %c1 = arith.constant 1 : index
    %11 = vector.load %arg1[%c0_8, %c0_9, %c1] : memref<1x16x102xbf16, #tpu.memory_space<vmem>>, vector<1x16x80xbf16>
    %12 = vector.shape_cast %11 : vector<1x16x80xbf16> to vector<16x80xbf16>
    %c16 = arith.constant 16 : index
    %c0_10 = arith.constant 0 : index
    %13 = vector.load %arg5[%c16, %c0_10] : memref<144x80xbf16, #tpu.memory_space<vmem>>, vector<16x80xbf16>
    tpu.vector_store %arg5[%c16, %c0_10], %12 {strides = array<i32>} : memref<144x80xbf16, #tpu.memory_space<vmem>>, vector<16x80xbf16>,
    %c0_11 = arith.constant 0 : index
    %c0_12 = arith.constant 0 : index
    %c2 = arith.constant 2 : index
    %14 = vector.load %arg1[%c0_11, %c0_12, %c2] : memref<1x16x102xbf16, #tpu.memory_space<vmem>>, vector<1x16x80xbf16>
    %15 = vector.shape_cast %14 : vector<1x16x80xbf16> to vector<16x80xbf16>
    %c32 = arith.constant 32 : index
    %c0_13 = arith.constant 0 : index
    %16 = vector.load %arg5[%c32, %c0_13] : memref<144x80xbf16, #tpu.memory_space<vmem>>, vector<16x80xbf16>
    tpu.vector_store %arg5[%c32, %c0_13], %15 {strides = array<i32>} : memref<144x80xbf16, #tpu.memory_space<vmem>>, vector<16x80xbf16>,
    %c0_14 = arith.constant 0 : index
    %c0_15 = arith.constant 0 : index
    %c10 = arith.constant 10 : index
    %17 = vector.load %arg1[%c0_14, %c0_15, %c10] : memref<1x16x102xbf16, #tpu.memory_space<vmem>>, vector<1x16x80xbf16>
    %18 = vector.shape_cast %17 : vector<1x16x80xbf16> to vector<16x80xbf16>
    %c48 = arith.constant 48 : index
    %c0_16 = arith.constant 0 : index
    %19 = vector.load %arg5[%c48, %c0_16] : memref<144x80xbf16, #tpu.memory_space<vmem>>, vector<16x80xbf16>
    tpu.vector_store %arg5[%c48, %c0_16], %18 {strides = array<i32>} : memref<144x80xbf16, #tpu.memory_space<vmem>>, vector<16x80xbf16>,
    %c0_17 = arith.constant 0 : index
    %c0_18 = arith.constant 0 : index
    %c11 = arith.constant 11 : index
    %20 = vector.load %arg1[%c0_17, %c0_18, %c11] : memref<1x16x102xbf16, #tpu.memory_space<vmem>>, vector<1x16x80xbf16>
    %21 = vector.shape_cast %20 : vector<1x16x80xbf16> to vector<16x80xbf16>
    %c64 = arith.constant 64 : index
    %c0_19 = arith.constant 0 : index
    %22 = vector.load %arg5[%c64, %c0_19] : memref<144x80xbf16, #tpu.memory_space<vmem>>, vector<16x80xbf16>
    tpu.vector_store %arg5[%c64, %c0_19], %21 {strides = array<i32>} : memref<144x80xbf16, #tpu.memory_space<vmem>>, vector<16x80xbf16>,
    %c0_20 = arith.constant 0 : index
    %c0_21 = arith.constant 0 : index
    %c12 = arith.constant 12 : index
    %23 = vector.load %arg1[%c0_20, %c0_21, %c12] : memref<1x16x102xbf16, #tpu.memory_space<vmem>>, vector<1x16x80xbf16>
    %24 = vector.shape_cast %23 : vector<1x16x80xbf16> to vector<16x80xbf16>
    %c80 = arith.constant 80 : index
    %c0_22 = arith.constant 0 : index
    %25 = vector.load %arg5[%c80, %c0_22] : memref<144x80xbf16, #tpu.memory_space<vmem>>, vector<16x80xbf16>
    tpu.vector_store %arg5[%c80, %c0_22], %24 {strides = array<i32>} : memref<144x80xbf16, #tpu.memory_space<vmem>>, vector<16x80xbf16>,
    %c0_23 = arith.constant 0 : index
    %c0_24 = arith.constant 0 : index
    %c20 = arith.constant 20 : index
    %26 = vector.load %arg1[%c0_23, %c0_24, %c20] : memref<1x16x102xbf16, #tpu.memory_space<vmem>>, vector<1x16x80xbf16>
    %27 = vector.shape_cast %26 : vector<1x16x80xbf16> to vector<16x80xbf16>
    %c96 = arith.constant 96 : index
    %c0_25 = arith.constant 0 : index
    %28 = vector.load %arg5[%c96, %c0_25] : memref<144x80xbf16, #tpu.memory_space<vmem>>, vector<16x80xbf16>
    tpu.vector_store %arg5[%c96, %c0_25], %27 {strides = array<i32>} : memref<144x80xbf16, #tpu.memory_space<vmem>>, vector<16x80xbf16>,
    %c0_26 = arith.constant 0 : index
    %c0_27 = arith.constant 0 : index
    %c21 = arith.constant 21 : index
    %29 = vector.load %arg1[%c0_26, %c0_27, %c21] : memref<1x16x102xbf16, #tpu.memory_space<vmem>>, vector<1x16x80xbf16>
    %30 = vector.shape_cast %29 : vector<1x16x80xbf16> to vector<16x80xbf16>
    %c112 = arith.constant 112 : index
    %c0_28 = arith.constant 0 : index
    %31 = vector.load %arg5[%c112, %c0_28] : memref<144x80xbf16, #tpu.memory_space<vmem>>, vector<16x80xbf16>
    tpu.vector_store %arg5[%c112, %c0_28], %30 {strides = array<i32>} : memref<144x80xbf16, #tpu.memory_space<vmem>>, vector<16x80xbf16>,
    %c0_29 = arith.constant 0 : index
    %c0_30 = arith.constant 0 : index
    %c22 = arith.constant 22 : index
    %32 = vector.load %arg1[%c0_29, %c0_30, %c22] : memref<1x16x102xbf16, #tpu.memory_space<vmem>>, vector<1x16x80xbf16>
    %33 = vector.shape_cast %32 : vector<1x16x80xbf16> to vector<16x80xbf16>
    %c128 = arith.constant 128 : index
    %c0_31 = arith.constant 0 : index
    %34 = vector.load %arg5[%c128, %c0_31] : memref<144x80xbf16, #tpu.memory_space<vmem>>, vector<16x80xbf16>
    tpu.vector_store %arg5[%c128, %c0_31], %33 {strides = array<i32>} : memref<144x80xbf16, #tpu.memory_space<vmem>>, vector<16x80xbf16>,
    %c0_32 = arith.constant 0 : index
    %c0_33 = arith.constant 0 : index
    %35 = vector.load %arg5[%c0_32, %c0_33] : memref<144x80xbf16, #tpu.memory_space<vmem>>, vector<144x80xbf16>
    %cst = arith.constant dense<0.000000e+00> : vector<16x80xf32>
    %36 = tpu.matmul %4, %35, %cst {dimension_numbers = #tpu.dot_dimension_numbers<[1], [0], [0], [1], [0, 0, 1, 1], [], []>} : vector<16x144xbf16>, vector<144x80xbf16>, vector<16x80xf32> -> vector<16x80xf32>
    %37 = vector.broadcast %7 : vector<16x1xf32> to vector<16x80xf32>
    %38 = arith.addf %36, %37 : vector<16x80xf32>
    %cst_34 = arith.constant 0.000000e+00 : f32
    %39 = vector.broadcast %cst_34 : f32 to vector<16x80xf32>
    %40 = arith.maximumf %38, %39 : vector<16x80xf32>
    %41 = arith.truncf %40 : vector<16x80xf32> to vector<16x80xbf16>
    %c0_35 = arith.constant 0 : index
    %c0_36 = arith.constant 0 : index
    %c0_37 = arith.constant 0 : index
    %42 = vector.load %arg4[%c0_35, %c0_36, %c0_37] : memref<1x16x80xbf16, #tpu.memory_space<vmem>>, vector<1x16x80xbf16>
    %43 = vector.shape_cast %42 : vector<1x16x80xbf16> to vector<16x80xbf16>
    %44 = vector.shape_cast %41 : vector<16x80xbf16> to vector<1x16x80xbf16>
    tpu.vector_store %arg4[%c0_35, %c0_36, %c0_37], %44 {strides = array<i32>} : memref<1x16x80xbf16, #tpu.memory_space<vmem>>, vector<1x16x80xbf16>,
    return
  }
  func.func @transform_0(%arg0: i32) -> (i32, i32, i32) {
    %c0_i32 = arith.constant 0 : i32
    %c0_i32_0 = arith.constant 0 : i32
    %c0_i32_1 = arith.constant 0 : i32
    return %arg0, %c0_i32, %c0_i32_0 : i32, i32, i32
  }
  func.func @transform_1(%arg0: i32) -> (i32, i32, i32) {
    %c0_i32 = arith.constant 0 : i32
    %c0_i32_0 = arith.constant 0 : i32
    %c0_i32_1 = arith.constant 0 : i32
    %c0_i32_2 = arith.constant 0 : i32
    return %c0_i32, %c0_i32_0, %c0_i32_1 : i32, i32, i32
  }
  func.func @transform_2(%arg0: i32) -> (i32, i32, i32) {
    %c0_i32 = arith.constant 0 : i32
    %c0_i32_0 = arith.constant 0 : i32
    %c0_i32_1 = arith.constant 0 : i32
    %c0_i32_2 = arith.constant 0 : i32
    return %c0_i32, %c0_i32_0, %c0_i32_1 : i32, i32, i32
  }
  func.func @transform_3(%arg0: i32) -> (i32, i32, i32) {
    %c0_i32 = arith.constant 0 : i32
    %c0_i32_0 = arith.constant 0 : i32
    %c0_i32_1 = arith.constant 0 : i32
    return %arg0, %c0_i32, %c0_i32_0 : i32, i32, i32
  }
}

module attributes {stable_mosaic.version = 11 : i64} {
  func.func @_conv_stage_kernel(%arg0: i32, %arg1: memref<1x16x38xbf16, #tpu.memory_space<vmem>>, %arg2: memref<2x32x144xbf16, #tpu.memory_space<vmem>>, %arg3: memref<2x32x1xf32, #tpu.memory_space<vmem>>, %arg4: memref<1x32x24xbf16, #tpu.memory_space<vmem>>, %arg5: memref<144x24xbf16, #tpu.memory_space<vmem>>) attributes {dimension_semantics = [#tpu.dimension_semantics<parallel>], iteration_bounds = array<i64: 10>, scalar_prefetch = 0 : i64, scratch_operands = 1 : i64, tpu.core_type = #tpu.core_type<tc>, window_params = [{transform_indices = @transform_0, window_bounds = array<i64: 1, 16, 38>}, {pipeline_mode = #tpu.pipeline_mode<synchronous>, transform_indices = @transform_1, window_bounds = array<i64: 2, 32, 144>}, {pipeline_mode = #tpu.pipeline_mode<synchronous>, transform_indices = @transform_2, window_bounds = array<i64: 2, 32, 1>}, {transform_indices = @transform_3, window_bounds = array<i64: 1, 32, 24>}]} {
    %c8_i32 = arith.constant 8 : i32
    %0 = arith.cmpi sge, %arg0, %c8_i32 : i32
    %c1_i32 = arith.constant 1 : i32
    %c0_i32 = arith.constant 0 : i32
    %1 = arith.select %0, %c1_i32, %c0_i32 : i32
    %2 = arith.index_cast %1 : i32 to index
    %c0 = arith.constant 0 : index
    %c0_0 = arith.constant 0 : index
    %3 = vector.load %arg2[%2, %c0, %c0_0] : memref<2x32x144xbf16, #tpu.memory_space<vmem>>, vector<1x32x144xbf16>
    %4 = vector.shape_cast %3 : vector<1x32x144xbf16> to vector<32x144xbf16>
    %5 = arith.index_cast %1 : i32 to index
    %c0_1 = arith.constant 0 : index
    %c0_2 = arith.constant 0 : index
    %6 = vector.load %arg3[%5, %c0_1, %c0_2] : memref<2x32x1xf32, #tpu.memory_space<vmem>>, vector<1x32x1xf32>
    %7 = vector.shape_cast %6 : vector<1x32x1xf32> to vector<32x1xf32>
    %c0_3 = arith.constant 0 : index
    %c0_4 = arith.constant 0 : index
    %c0_5 = arith.constant 0 : index
    %8 = vector.load %arg1[%c0_3, %c0_4, %c0_5] : memref<1x16x38xbf16, #tpu.memory_space<vmem>>, vector<1x16x24xbf16>
    %9 = vector.shape_cast %8 : vector<1x16x24xbf16> to vector<16x24xbf16>
    %c0_6 = arith.constant 0 : index
    %c0_7 = arith.constant 0 : index
    %10 = vector.load %arg5[%c0_6, %c0_7] : memref<144x24xbf16, #tpu.memory_space<vmem>>, vector<16x24xbf16>
    tpu.vector_store %arg5[%c0_6, %c0_7], %9 {strides = array<i32>} : memref<144x24xbf16, #tpu.memory_space<vmem>>, vector<16x24xbf16>,
    %c0_8 = arith.constant 0 : index
    %c0_9 = arith.constant 0 : index
    %c1 = arith.constant 1 : index
    %11 = vector.load %arg1[%c0_8, %c0_9, %c1] : memref<1x16x38xbf16, #tpu.memory_space<vmem>>, vector<1x16x24xbf16>
    %12 = vector.shape_cast %11 : vector<1x16x24xbf16> to vector<16x24xbf16>
    %c16 = arith.constant 16 : index
    %c0_10 = arith.constant 0 : index
    %13 = vector.load %arg5[%c16, %c0_10] : memref<144x24xbf16, #tpu.memory_space<vmem>>, vector<16x24xbf16>
    tpu.vector_store %arg5[%c16, %c0_10], %12 {strides = array<i32>} : memref<144x24xbf16, #tpu.memory_space<vmem>>, vector<16x24xbf16>,
    %c0_11 = arith.constant 0 : index
    %c0_12 = arith.constant 0 : index
    %c2 = arith.constant 2 : index
    %14 = vector.load %arg1[%c0_11, %c0_12, %c2] : memref<1x16x38xbf16, #tpu.memory_space<vmem>>, vector<1x16x24xbf16>
    %15 = vector.shape_cast %14 : vector<1x16x24xbf16> to vector<16x24xbf16>
    %c32 = arith.constant 32 : index
    %c0_13 = arith.constant 0 : index
    %16 = vector.load %arg5[%c32, %c0_13] : memref<144x24xbf16, #tpu.memory_space<vmem>>, vector<16x24xbf16>
    tpu.vector_store %arg5[%c32, %c0_13], %15 {strides = array<i32>} : memref<144x24xbf16, #tpu.memory_space<vmem>>, vector<16x24xbf16>,
    %c0_14 = arith.constant 0 : index
    %c0_15 = arith.constant 0 : index
    %c6 = arith.constant 6 : index
    %17 = vector.load %arg1[%c0_14, %c0_15, %c6] : memref<1x16x38xbf16, #tpu.memory_space<vmem>>, vector<1x16x24xbf16>
    %18 = vector.shape_cast %17 : vector<1x16x24xbf16> to vector<16x24xbf16>
    %c48 = arith.constant 48 : index
    %c0_16 = arith.constant 0 : index
    %19 = vector.load %arg5[%c48, %c0_16] : memref<144x24xbf16, #tpu.memory_space<vmem>>, vector<16x24xbf16>
    tpu.vector_store %arg5[%c48, %c0_16], %18 {strides = array<i32>} : memref<144x24xbf16, #tpu.memory_space<vmem>>, vector<16x24xbf16>,
    %c0_17 = arith.constant 0 : index
    %c0_18 = arith.constant 0 : index
    %c7 = arith.constant 7 : index
    %20 = vector.load %arg1[%c0_17, %c0_18, %c7] : memref<1x16x38xbf16, #tpu.memory_space<vmem>>, vector<1x16x24xbf16>
    %21 = vector.shape_cast %20 : vector<1x16x24xbf16> to vector<16x24xbf16>
    %c64 = arith.constant 64 : index
    %c0_19 = arith.constant 0 : index
    %22 = vector.load %arg5[%c64, %c0_19] : memref<144x24xbf16, #tpu.memory_space<vmem>>, vector<16x24xbf16>
    tpu.vector_store %arg5[%c64, %c0_19], %21 {strides = array<i32>} : memref<144x24xbf16, #tpu.memory_space<vmem>>, vector<16x24xbf16>,
    %c0_20 = arith.constant 0 : index
    %c0_21 = arith.constant 0 : index
    %c8 = arith.constant 8 : index
    %23 = vector.load %arg1[%c0_20, %c0_21, %c8] : memref<1x16x38xbf16, #tpu.memory_space<vmem>>, vector<1x16x24xbf16>
    %24 = vector.shape_cast %23 : vector<1x16x24xbf16> to vector<16x24xbf16>
    %c80 = arith.constant 80 : index
    %c0_22 = arith.constant 0 : index
    %25 = vector.load %arg5[%c80, %c0_22] : memref<144x24xbf16, #tpu.memory_space<vmem>>, vector<16x24xbf16>
    tpu.vector_store %arg5[%c80, %c0_22], %24 {strides = array<i32>} : memref<144x24xbf16, #tpu.memory_space<vmem>>, vector<16x24xbf16>,
    %c0_23 = arith.constant 0 : index
    %c0_24 = arith.constant 0 : index
    %c12 = arith.constant 12 : index
    %26 = vector.load %arg1[%c0_23, %c0_24, %c12] : memref<1x16x38xbf16, #tpu.memory_space<vmem>>, vector<1x16x24xbf16>
    %27 = vector.shape_cast %26 : vector<1x16x24xbf16> to vector<16x24xbf16>
    %c96 = arith.constant 96 : index
    %c0_25 = arith.constant 0 : index
    %28 = vector.load %arg5[%c96, %c0_25] : memref<144x24xbf16, #tpu.memory_space<vmem>>, vector<16x24xbf16>
    tpu.vector_store %arg5[%c96, %c0_25], %27 {strides = array<i32>} : memref<144x24xbf16, #tpu.memory_space<vmem>>, vector<16x24xbf16>,
    %c0_26 = arith.constant 0 : index
    %c0_27 = arith.constant 0 : index
    %c13 = arith.constant 13 : index
    %29 = vector.load %arg1[%c0_26, %c0_27, %c13] : memref<1x16x38xbf16, #tpu.memory_space<vmem>>, vector<1x16x24xbf16>
    %30 = vector.shape_cast %29 : vector<1x16x24xbf16> to vector<16x24xbf16>
    %c112 = arith.constant 112 : index
    %c0_28 = arith.constant 0 : index
    %31 = vector.load %arg5[%c112, %c0_28] : memref<144x24xbf16, #tpu.memory_space<vmem>>, vector<16x24xbf16>
    tpu.vector_store %arg5[%c112, %c0_28], %30 {strides = array<i32>} : memref<144x24xbf16, #tpu.memory_space<vmem>>, vector<16x24xbf16>,
    %c0_29 = arith.constant 0 : index
    %c0_30 = arith.constant 0 : index
    %c14 = arith.constant 14 : index
    %32 = vector.load %arg1[%c0_29, %c0_30, %c14] : memref<1x16x38xbf16, #tpu.memory_space<vmem>>, vector<1x16x24xbf16>
    %33 = vector.shape_cast %32 : vector<1x16x24xbf16> to vector<16x24xbf16>
    %c128 = arith.constant 128 : index
    %c0_31 = arith.constant 0 : index
    %34 = vector.load %arg5[%c128, %c0_31] : memref<144x24xbf16, #tpu.memory_space<vmem>>, vector<16x24xbf16>
    tpu.vector_store %arg5[%c128, %c0_31], %33 {strides = array<i32>} : memref<144x24xbf16, #tpu.memory_space<vmem>>, vector<16x24xbf16>,
    %c0_32 = arith.constant 0 : index
    %c0_33 = arith.constant 0 : index
    %35 = vector.load %arg5[%c0_32, %c0_33] : memref<144x24xbf16, #tpu.memory_space<vmem>>, vector<144x24xbf16>
    %cst = arith.constant dense<0.000000e+00> : vector<32x24xf32>
    %36 = tpu.matmul %4, %35, %cst {dimension_numbers = #tpu.dot_dimension_numbers<[1], [0], [0], [1], [0, 0, 1, 1], [], []>} : vector<32x144xbf16>, vector<144x24xbf16>, vector<32x24xf32> -> vector<32x24xf32>
    %37 = vector.broadcast %7 : vector<32x1xf32> to vector<32x24xf32>
    %38 = arith.addf %36, %37 : vector<32x24xf32>
    %cst_34 = arith.constant 0.000000e+00 : f32
    %39 = vector.broadcast %cst_34 : f32 to vector<32x24xf32>
    %40 = arith.maximumf %38, %39 : vector<32x24xf32>
    %41 = arith.truncf %40 : vector<32x24xf32> to vector<32x24xbf16>
    %c0_35 = arith.constant 0 : index
    %c0_36 = arith.constant 0 : index
    %c0_37 = arith.constant 0 : index
    %42 = vector.load %arg4[%c0_35, %c0_36, %c0_37] : memref<1x32x24xbf16, #tpu.memory_space<vmem>>, vector<1x32x24xbf16>
    %43 = vector.shape_cast %42 : vector<1x32x24xbf16> to vector<32x24xbf16>
    %44 = vector.shape_cast %41 : vector<32x24xbf16> to vector<1x32x24xbf16>
    tpu.vector_store %arg4[%c0_35, %c0_36, %c0_37], %44 {strides = array<i32>} : memref<1x32x24xbf16, #tpu.memory_space<vmem>>, vector<1x32x24xbf16>,
    return
  }
  func.func @transform_0(%arg0: i32) -> (i32, i32, i32) {
    %c0_i32 = arith.constant 0 : i32
    %c0_i32_0 = arith.constant 0 : i32
    %c0_i32_1 = arith.constant 0 : i32
    return %arg0, %c0_i32, %c0_i32_0 : i32, i32, i32
  }
  func.func @transform_1(%arg0: i32) -> (i32, i32, i32) {
    %c0_i32 = arith.constant 0 : i32
    %c0_i32_0 = arith.constant 0 : i32
    %c0_i32_1 = arith.constant 0 : i32
    %c0_i32_2 = arith.constant 0 : i32
    return %c0_i32, %c0_i32_0, %c0_i32_1 : i32, i32, i32
  }
  func.func @transform_2(%arg0: i32) -> (i32, i32, i32) {
    %c0_i32 = arith.constant 0 : i32
    %c0_i32_0 = arith.constant 0 : i32
    %c0_i32_1 = arith.constant 0 : i32
    %c0_i32_2 = arith.constant 0 : i32
    return %c0_i32, %c0_i32_0, %c0_i32_1 : i32, i32, i32
  }
  func.func @transform_3(%arg0: i32) -> (i32, i32, i32) {
    %c0_i32 = arith.constant 0 : i32
    %c0_i32_0 = arith.constant 0 : i32
    %c0_i32_1 = arith.constant 0 : i32
    return %arg0, %c0_i32, %c0_i32_0 : i32, i32, i32
  }
}

module attributes {stable_mosaic.version = 11 : i64} {
  func.func @_tail_kernel(%arg0: memref<8x32xf32, #tpu.memory_space<vmem>>, %arg1: memref<8x2xf32, #tpu.memory_space<vmem>>, %arg2: memref<2x32xf32, #tpu.memory_space<vmem>>, %arg3: memref<2x2xf32, #tpu.memory_space<vmem>>, %arg4: memref<1x32xf32, #tpu.memory_space<vmem>>, %arg5: memref<1x32xf32, #tpu.memory_space<vmem>>, %arg6: memref<2x32xbf16, #tpu.memory_space<vmem>>, %arg7: memref<1x32xf32, #tpu.memory_space<vmem>>, %arg8: memref<32x32xbf16, #tpu.memory_space<vmem>>, %arg9: memref<1x32xf32, #tpu.memory_space<vmem>>, %arg10: memref<1x32xf32, #tpu.memory_space<vmem>>, %arg11: memref<1x32xf32, #tpu.memory_space<vmem>>, %arg12: memref<32x32xbf16, #tpu.memory_space<vmem>>, %arg13: memref<32x32xbf16, #tpu.memory_space<vmem>>, %arg14: memref<1x32xf32, #tpu.memory_space<vmem>>, %arg15: memref<32x32xbf16, #tpu.memory_space<vmem>>, %arg16: memref<1x32xf32, #tpu.memory_space<vmem>>, %arg17: memref<1x32xf32, #tpu.memory_space<vmem>>, %arg18: memref<1x32xf32, #tpu.memory_space<vmem>>, %arg19: memref<2x32xbf16, #tpu.memory_space<vmem>>, %arg20: memref<1x32xf32, #tpu.memory_space<vmem>>, %arg21: memref<32x32xbf16, #tpu.memory_space<vmem>>, %arg22: memref<1x32xf32, #tpu.memory_space<vmem>>, %arg23: memref<1x32xf32, #tpu.memory_space<vmem>>, %arg24: memref<1x32xf32, #tpu.memory_space<vmem>>, %arg25: memref<32x32xbf16, #tpu.memory_space<vmem>>, %arg26: memref<32x32xbf16, #tpu.memory_space<vmem>>, %arg27: memref<1x32xf32, #tpu.memory_space<vmem>>, %arg28: memref<32x4xbf16, #tpu.memory_space<vmem>>, %arg29: memref<1x4xf32, #tpu.memory_space<vmem>>, %arg30: memref<32x128xbf16, #tpu.memory_space<vmem>>, %arg31: memref<1x128xf32, #tpu.memory_space<vmem>>, %arg32: memref<128x128xbf16, #tpu.memory_space<vmem>>, %arg33: memref<1x128xf32, #tpu.memory_space<vmem>>, %arg34: memref<128x4xbf16, #tpu.memory_space<vmem>>, %arg35: memref<1x4xf32, #tpu.memory_space<vmem>>, %arg36: memref<8x4xf32, #tpu.memory_space<vmem>>, %arg37: memref<2x4xf32, #tpu.memory_space<vmem>>) attributes {dimension_semantics = [], scalar_prefetch = 0 : i64, scratch_operands = 0 : i64, tpu.core_type = #tpu.core_type<tc>} {
    %c0 = arith.constant 0 : index
    %c0_0 = arith.constant 0 : index
    %0 = vector.load %arg0[%c0, %c0_0] : memref<8x32xf32, #tpu.memory_space<vmem>>, vector<8x32xf32>
    %c0_1 = arith.constant 0 : index
    %c0_2 = arith.constant 0 : index
    %1 = vector.load %arg1[%c0_1, %c0_2] : memref<8x2xf32, #tpu.memory_space<vmem>>, vector<8x2xf32>
    %c0_3 = arith.constant 0 : index
    %c0_4 = arith.constant 0 : index
    %2 = vector.load %arg4[%c0_3, %c0_4] : memref<1x32xf32, #tpu.memory_space<vmem>>, vector<1x32xf32>
    %c0_5 = arith.constant 0 : index
    %c0_6 = arith.constant 0 : index
    %3 = vector.load %arg5[%c0_5, %c0_6] : memref<1x32xf32, #tpu.memory_space<vmem>>, vector<1x32xf32>
    %c0_7 = arith.constant 0 : index
    %c0_8 = arith.constant 0 : index
    %4 = vector.load %arg6[%c0_7, %c0_8] : memref<2x32xbf16, #tpu.memory_space<vmem>>, vector<2x32xbf16>
    %c0_9 = arith.constant 0 : index
    %c0_10 = arith.constant 0 : index
    %5 = vector.load %arg7[%c0_9, %c0_10] : memref<1x32xf32, #tpu.memory_space<vmem>>, vector<1x32xf32>
    %c0_11 = arith.constant 0 : index
    %c0_12 = arith.constant 0 : index
    %6 = vector.load %arg8[%c0_11, %c0_12] : memref<32x32xbf16, #tpu.memory_space<vmem>>, vector<32x32xbf16>
    %c0_13 = arith.constant 0 : index
    %c0_14 = arith.constant 0 : index
    %7 = vector.load %arg9[%c0_13, %c0_14] : memref<1x32xf32, #tpu.memory_space<vmem>>, vector<1x32xf32>
    %c0_15 = arith.constant 0 : index
    %c0_16 = arith.constant 0 : index
    %8 = vector.load %arg10[%c0_15, %c0_16] : memref<1x32xf32, #tpu.memory_space<vmem>>, vector<1x32xf32>
    %c0_17 = arith.constant 0 : index
    %c0_18 = arith.constant 0 : index
    %9 = vector.load %arg11[%c0_17, %c0_18] : memref<1x32xf32, #tpu.memory_space<vmem>>, vector<1x32xf32>
    %c0_19 = arith.constant 0 : index
    %c0_20 = arith.constant 0 : index
    %10 = vector.load %arg12[%c0_19, %c0_20] : memref<32x32xbf16, #tpu.memory_space<vmem>>, vector<32x32xbf16>
    %c0_21 = arith.constant 0 : index
    %c0_22 = arith.constant 0 : index
    %11 = vector.load %arg13[%c0_21, %c0_22] : memref<32x32xbf16, #tpu.memory_space<vmem>>, vector<32x32xbf16>
    %c0_23 = arith.constant 0 : index
    %c0_24 = arith.constant 0 : index
    %12 = vector.load %arg14[%c0_23, %c0_24] : memref<1x32xf32, #tpu.memory_space<vmem>>, vector<1x32xf32>
    %c0_25 = arith.constant 0 : index
    %c0_26 = arith.constant 0 : index
    %13 = vector.load %arg15[%c0_25, %c0_26] : memref<32x32xbf16, #tpu.memory_space<vmem>>, vector<32x32xbf16>
    %c0_27 = arith.constant 0 : index
    %c0_28 = arith.constant 0 : index
    %14 = vector.load %arg16[%c0_27, %c0_28] : memref<1x32xf32, #tpu.memory_space<vmem>>, vector<1x32xf32>
    %15 = vector.broadcast %2 : vector<1x32xf32> to vector<8x32xf32>
    %16 = arith.mulf %0, %15 : vector<8x32xf32>
    %17 = vector.broadcast %3 : vector<1x32xf32> to vector<8x32xf32>
    %18 = arith.addf %16, %17 : vector<8x32xf32>
    %19 = arith.truncf %1 : vector<8x2xf32> to vector<8x2xbf16>
    %cst = arith.constant dense<0.000000e+00> : vector<8x32xf32>
    %20 = tpu.matmul %19, %4, %cst {dimension_numbers = #tpu.dot_dimension_numbers<[1], [0], [0], [1], [0, 0, 1, 1], [], []>} : vector<8x2xbf16>, vector<2x32xbf16>, vector<8x32xf32> -> vector<8x32xf32>
    %21 = vector.broadcast %5 : vector<1x32xf32> to vector<8x32xf32>
    %22 = arith.addf %20, %21 : vector<8x32xf32>
    %cst_29 = arith.constant 0.000000e+00 : f32
    %23 = vector.broadcast %cst_29 : f32 to vector<8x32xf32>
    %24 = arith.maximumf %22, %23 : vector<8x32xf32>
    %25 = arith.truncf %24 : vector<8x32xf32> to vector<8x32xbf16>
    %cst_30 = arith.constant dense<0.000000e+00> : vector<8x32xf32>
    %26 = tpu.matmul %25, %6, %cst_30 {dimension_numbers = #tpu.dot_dimension_numbers<[1], [0], [0], [1], [0, 0, 1, 1], [], []>} : vector<8x32xbf16>, vector<32x32xbf16>, vector<8x32xf32> -> vector<8x32xf32>
    %27 = vector.broadcast %7 : vector<1x32xf32> to vector<8x32xf32>
    %28 = arith.addf %26, %27 : vector<8x32xf32>
    %29 = vector.broadcast %8 : vector<1x32xf32> to vector<8x32xf32>
    %30 = arith.mulf %28, %29 : vector<8x32xf32>
    %31 = vector.broadcast %9 : vector<1x32xf32> to vector<8x32xf32>
    %32 = arith.addf %30, %31 : vector<8x32xf32>
    %33 = arith.truncf %18 : vector<8x32xf32> to vector<8x32xbf16>
    %cst_31 = arith.constant dense<0.000000e+00> : vector<8x32xf32>
    %34 = tpu.matmul %33, %10, %cst_31 {dimension_numbers = #tpu.dot_dimension_numbers<[1], [0], [0], [1], [0, 0, 1, 1], [], []>} : vector<8x32xbf16>, vector<32x32xbf16>, vector<8x32xf32> -> vector<8x32xf32>
    %35 = arith.truncf %32 : vector<8x32xf32> to vector<8x32xbf16>
    %cst_32 = arith.constant dense<0.000000e+00> : vector<8x32xf32>
    %36 = tpu.matmul %35, %11, %cst_32 {dimension_numbers = #tpu.dot_dimension_numbers<[1], [0], [0], [1], [0, 0, 1, 1], [], []>} : vector<8x32xbf16>, vector<32x32xbf16>, vector<8x32xf32> -> vector<8x32xf32>
    %37 = arith.addf %34, %36 : vector<8x32xf32>
    %38 = vector.broadcast %12 : vector<1x32xf32> to vector<8x32xf32>
    %39 = arith.addf %37, %38 : vector<8x32xf32>
    %cst_33 = arith.constant 0.000000e+00 : f32
    %40 = vector.broadcast %cst_33 : f32 to vector<8x32xf32>
    %41 = arith.maximumf %39, %40 : vector<8x32xf32>
    %42 = arith.truncf %41 : vector<8x32xf32> to vector<8x32xbf16>
    %cst_34 = arith.constant dense<0.000000e+00> : vector<8x32xf32>
    %43 = tpu.matmul %42, %13, %cst_34 {dimension_numbers = #tpu.dot_dimension_numbers<[1], [0], [0], [1], [0, 0, 1, 1], [], []>} : vector<8x32xbf16>, vector<32x32xbf16>, vector<8x32xf32> -> vector<8x32xf32>
    %44 = vector.broadcast %14 : vector<1x32xf32> to vector<8x32xf32>
    %45 = arith.addf %43, %44 : vector<8x32xf32>
    %46 = arith.negf %45 : vector<8x32xf32>
    %47 = math.exp %46 : vector<8x32xf32>
    %cst_35 = arith.constant 1.000000e+00 : f32
    %48 = vector.broadcast %cst_35 : f32 to vector<8x32xf32>
    %49 = arith.addf %48, %47 : vector<8x32xf32>
    %50 = arith.divf %48, %49 : vector<8x32xf32>
    %51 = arith.truncf %50 : vector<8x32xf32> to vector<8x32xbf16>
    %c0_36 = arith.constant 0 : index
    %c0_37 = arith.constant 0 : index
    %52 = vector.load %arg30[%c0_36, %c0_37] : memref<32x128xbf16, #tpu.memory_space<vmem>>, vector<32x128xbf16>
    %cst_38 = arith.constant dense<0.000000e+00> : vector<8x128xf32>
    %53 = tpu.matmul %51, %52, %cst_38 {dimension_numbers = #tpu.dot_dimension_numbers<[1], [0], [0], [1], [0, 0, 1, 1], [], []>} : vector<8x32xbf16>, vector<32x128xbf16>, vector<8x128xf32> -> vector<8x128xf32>
    %c0_39 = arith.constant 0 : index
    %c0_40 = arith.constant 0 : index
    %54 = vector.load %arg31[%c0_39, %c0_40] : memref<1x128xf32, #tpu.memory_space<vmem>>, vector<1x128xf32>
    %55 = vector.broadcast %54 : vector<1x128xf32> to vector<8x128xf32>
    %56 = arith.addf %53, %55 : vector<8x128xf32>
    %cst_41 = arith.constant 0.000000e+00 : f32
    %57 = vector.broadcast %cst_41 : f32 to vector<8x128xf32>
    %58 = arith.maximumf %56, %57 : vector<8x128xf32>
    %59 = arith.truncf %58 : vector<8x128xf32> to vector<8x128xbf16>
    %c0_42 = arith.constant 0 : index
    %c0_43 = arith.constant 0 : index
    %60 = vector.load %arg32[%c0_42, %c0_43] : memref<128x128xbf16, #tpu.memory_space<vmem>>, vector<128x128xbf16>
    %cst_44 = arith.constant dense<0.000000e+00> : vector<8x128xf32>
    %61 = tpu.matmul %59, %60, %cst_44 {dimension_numbers = #tpu.dot_dimension_numbers<[1], [0], [0], [1], [0, 0, 1, 1], [], []>} : vector<8x128xbf16>, vector<128x128xbf16>, vector<8x128xf32> -> vector<8x128xf32>
    %c0_45 = arith.constant 0 : index
    %c0_46 = arith.constant 0 : index
    %62 = vector.load %arg33[%c0_45, %c0_46] : memref<1x128xf32, #tpu.memory_space<vmem>>, vector<1x128xf32>
    %63 = vector.broadcast %62 : vector<1x128xf32> to vector<8x128xf32>
    %64 = arith.addf %61, %63 : vector<8x128xf32>
    %cst_47 = arith.constant 0.000000e+00 : f32
    %65 = vector.broadcast %cst_47 : f32 to vector<8x128xf32>
    %66 = arith.maximumf %64, %65 : vector<8x128xf32>
    %67 = arith.truncf %66 : vector<8x128xf32> to vector<8x128xbf16>
    %c0_48 = arith.constant 0 : index
    %c0_49 = arith.constant 0 : index
    %68 = vector.load %arg34[%c0_48, %c0_49] : memref<128x4xbf16, #tpu.memory_space<vmem>>, vector<128x4xbf16>
    %cst_50 = arith.constant dense<0.000000e+00> : vector<8x4xf32>
    %69 = tpu.matmul %67, %68, %cst_50 {dimension_numbers = #tpu.dot_dimension_numbers<[1], [0], [0], [1], [0, 0, 1, 1], [], []>} : vector<8x128xbf16>, vector<128x4xbf16>, vector<8x4xf32> -> vector<8x4xf32>
    %c0_51 = arith.constant 0 : index
    %c0_52 = arith.constant 0 : index
    %70 = vector.load %arg35[%c0_51, %c0_52] : memref<1x4xf32, #tpu.memory_space<vmem>>, vector<1x4xf32>
    %71 = vector.broadcast %70 : vector<1x4xf32> to vector<8x4xf32>
    %72 = arith.addf %69, %71 : vector<8x4xf32>
    %73 = arith.negf %72 : vector<8x4xf32>
    %74 = math.exp %73 : vector<8x4xf32>
    %cst_53 = arith.constant 1.000000e+00 : f32
    %75 = vector.broadcast %cst_53 : f32 to vector<8x4xf32>
    %76 = arith.addf %75, %74 : vector<8x4xf32>
    %77 = arith.divf %75, %76 : vector<8x4xf32>
    %c0_54 = arith.constant 0 : index
    %c0_55 = arith.constant 0 : index
    %78 = vector.load %arg36[%c0_54, %c0_55] : memref<8x4xf32, #tpu.memory_space<vmem>>, vector<8x4xf32>
    tpu.vector_store %arg36[%c0_54, %c0_55], %77 {strides = array<i32>} : memref<8x4xf32, #tpu.memory_space<vmem>>, vector<8x4xf32>,
    %c0_56 = arith.constant 0 : index
    %c0_57 = arith.constant 0 : index
    %79 = vector.load %arg2[%c0_56, %c0_57] : memref<2x32xf32, #tpu.memory_space<vmem>>, vector<2x32xf32>
    %c0_58 = arith.constant 0 : index
    %c0_59 = arith.constant 0 : index
    %80 = vector.load %arg3[%c0_58, %c0_59] : memref<2x2xf32, #tpu.memory_space<vmem>>, vector<2x2xf32>
    %c0_60 = arith.constant 0 : index
    %c0_61 = arith.constant 0 : index
    %81 = vector.load %arg17[%c0_60, %c0_61] : memref<1x32xf32, #tpu.memory_space<vmem>>, vector<1x32xf32>
    %c0_62 = arith.constant 0 : index
    %c0_63 = arith.constant 0 : index
    %82 = vector.load %arg18[%c0_62, %c0_63] : memref<1x32xf32, #tpu.memory_space<vmem>>, vector<1x32xf32>
    %c0_64 = arith.constant 0 : index
    %c0_65 = arith.constant 0 : index
    %83 = vector.load %arg19[%c0_64, %c0_65] : memref<2x32xbf16, #tpu.memory_space<vmem>>, vector<2x32xbf16>
    %c0_66 = arith.constant 0 : index
    %c0_67 = arith.constant 0 : index
    %84 = vector.load %arg20[%c0_66, %c0_67] : memref<1x32xf32, #tpu.memory_space<vmem>>, vector<1x32xf32>
    %c0_68 = arith.constant 0 : index
    %c0_69 = arith.constant 0 : index
    %85 = vector.load %arg21[%c0_68, %c0_69] : memref<32x32xbf16, #tpu.memory_space<vmem>>, vector<32x32xbf16>
    %c0_70 = arith.constant 0 : index
    %c0_71 = arith.constant 0 : index
    %86 = vector.load %arg22[%c0_70, %c0_71] : memref<1x32xf32, #tpu.memory_space<vmem>>, vector<1x32xf32>
    %c0_72 = arith.constant 0 : index
    %c0_73 = arith.constant 0 : index
    %87 = vector.load %arg23[%c0_72, %c0_73] : memref<1x32xf32, #tpu.memory_space<vmem>>, vector<1x32xf32>
    %c0_74 = arith.constant 0 : index
    %c0_75 = arith.constant 0 : index
    %88 = vector.load %arg24[%c0_74, %c0_75] : memref<1x32xf32, #tpu.memory_space<vmem>>, vector<1x32xf32>
    %c0_76 = arith.constant 0 : index
    %c0_77 = arith.constant 0 : index
    %89 = vector.load %arg25[%c0_76, %c0_77] : memref<32x32xbf16, #tpu.memory_space<vmem>>, vector<32x32xbf16>
    %c0_78 = arith.constant 0 : index
    %c0_79 = arith.constant 0 : index
    %90 = vector.load %arg26[%c0_78, %c0_79] : memref<32x32xbf16, #tpu.memory_space<vmem>>, vector<32x32xbf16>
    %c0_80 = arith.constant 0 : index
    %c0_81 = arith.constant 0 : index
    %91 = vector.load %arg27[%c0_80, %c0_81] : memref<1x32xf32, #tpu.memory_space<vmem>>, vector<1x32xf32>
    %c0_82 = arith.constant 0 : index
    %c0_83 = arith.constant 0 : index
    %92 = vector.load %arg28[%c0_82, %c0_83] : memref<32x4xbf16, #tpu.memory_space<vmem>>, vector<32x4xbf16>
    %c0_84 = arith.constant 0 : index
    %c0_85 = arith.constant 0 : index
    %93 = vector.load %arg29[%c0_84, %c0_85] : memref<1x4xf32, #tpu.memory_space<vmem>>, vector<1x4xf32>
    %94 = vector.broadcast %81 : vector<1x32xf32> to vector<2x32xf32>
    %95 = arith.mulf %79, %94 : vector<2x32xf32>
    %96 = vector.broadcast %82 : vector<1x32xf32> to vector<2x32xf32>
    %97 = arith.addf %95, %96 : vector<2x32xf32>
    %98 = arith.truncf %80 : vector<2x2xf32> to vector<2x2xbf16>
    %cst_86 = arith.constant dense<0.000000e+00> : vector<2x32xf32>
    %99 = tpu.matmul %98, %83, %cst_86 {dimension_numbers = #tpu.dot_dimension_numbers<[1], [0], [0], [1], [0, 0, 1, 1], [], []>} : vector<2x2xbf16>, vector<2x32xbf16>, vector<2x32xf32> -> vector<2x32xf32>
    %100 = vector.broadcast %84 : vector<1x32xf32> to vector<2x32xf32>
    %101 = arith.addf %99, %100 : vector<2x32xf32>
    %cst_87 = arith.constant 0.000000e+00 : f32
    %102 = vector.broadcast %cst_87 : f32 to vector<2x32xf32>
    %103 = arith.maximumf %101, %102 : vector<2x32xf32>
    %104 = arith.truncf %103 : vector<2x32xf32> to vector<2x32xbf16>
    %cst_88 = arith.constant dense<0.000000e+00> : vector<2x32xf32>
    %105 = tpu.matmul %104, %85, %cst_88 {dimension_numbers = #tpu.dot_dimension_numbers<[1], [0], [0], [1], [0, 0, 1, 1], [], []>} : vector<2x32xbf16>, vector<32x32xbf16>, vector<2x32xf32> -> vector<2x32xf32>
    %106 = vector.broadcast %86 : vector<1x32xf32> to vector<2x32xf32>
    %107 = arith.addf %105, %106 : vector<2x32xf32>
    %108 = vector.broadcast %87 : vector<1x32xf32> to vector<2x32xf32>
    %109 = arith.mulf %107, %108 : vector<2x32xf32>
    %110 = vector.broadcast %88 : vector<1x32xf32> to vector<2x32xf32>
    %111 = arith.addf %109, %110 : vector<2x32xf32>
    %112 = arith.truncf %97 : vector<2x32xf32> to vector<2x32xbf16>
    %cst_89 = arith.constant dense<0.000000e+00> : vector<2x32xf32>
    %113 = tpu.matmul %112, %89, %cst_89 {dimension_numbers = #tpu.dot_dimension_numbers<[1], [0], [0], [1], [0, 0, 1, 1], [], []>} : vector<2x32xbf16>, vector<32x32xbf16>, vector<2x32xf32> -> vector<2x32xf32>
    %114 = arith.truncf %111 : vector<2x32xf32> to vector<2x32xbf16>
    %cst_90 = arith.constant dense<0.000000e+00> : vector<2x32xf32>
    %115 = tpu.matmul %114, %90, %cst_90 {dimension_numbers = #tpu.dot_dimension_numbers<[1], [0], [0], [1], [0, 0, 1, 1], [], []>} : vector<2x32xbf16>, vector<32x32xbf16>, vector<2x32xf32> -> vector<2x32xf32>
    %116 = arith.addf %113, %115 : vector<2x32xf32>
    %117 = vector.broadcast %91 : vector<1x32xf32> to vector<2x32xf32>
    %118 = arith.addf %116, %117 : vector<2x32xf32>
    %cst_91 = arith.constant 0.000000e+00 : f32
    %119 = vector.broadcast %cst_91 : f32 to vector<2x32xf32>
    %120 = arith.maximumf %118, %119 : vector<2x32xf32>
    %121 = arith.truncf %120 : vector<2x32xf32> to vector<2x32xbf16>
    %cst_92 = arith.constant dense<0.000000e+00> : vector<2x4xf32>
    %122 = tpu.matmul %121, %92, %cst_92 {dimension_numbers = #tpu.dot_dimension_numbers<[1], [0], [0], [1], [0, 0, 1, 1], [], []>} : vector<2x32xbf16>, vector<32x4xbf16>, vector<2x4xf32> -> vector<2x4xf32>
    %123 = vector.broadcast %93 : vector<1x4xf32> to vector<2x4xf32>
    %124 = arith.addf %122, %123 : vector<2x4xf32>
    %cst_93 = arith.constant dense<0xFF800000> : vector<2xf32>
    %125 = vector.multi_reduction <maximumf>, %124, %cst_93 [1] : vector<2x4xf32> to vector<2xf32>
    %126 = vector.shape_cast %125 : vector<2xf32> to vector<2x1xf32>
    %127 = vector.broadcast %126 : vector<2x1xf32> to vector<2x4xf32>
    %128 = arith.subf %124, %127 : vector<2x4xf32>
    %129 = math.exp %128 : vector<2x4xf32>
    %cst_94 = arith.constant dense<0.000000e+00> : vector<2xf32>
    %130 = vector.multi_reduction <add>, %129, %cst_94 [1] : vector<2x4xf32> to vector<2xf32>
    %131 = vector.shape_cast %130 : vector<2xf32> to vector<2x1xf32>
    %132 = vector.broadcast %131 : vector<2x1xf32> to vector<2x4xf32>
    %133 = arith.divf %129, %132 : vector<2x4xf32>
    %c0_95 = arith.constant 0 : index
    %c0_96 = arith.constant 0 : index
    %134 = vector.load %arg37[%c0_95, %c0_96] : memref<2x4xf32, #tpu.memory_space<vmem>>, vector<2x4xf32>
    tpu.vector_store %arg37[%c0_95, %c0_96], %133 {strides = array<i32>} : memref<2x4xf32, #tpu.memory_space<vmem>>, vector<2x4xf32>,
    return
  }
}

</mosaic_0001>

<llo_original>
// kernel: samoe_forward.4
$region0: #{samoe_forward.4}
  #allocation0 [shape = 'u32[]', space=smem, size = 0x4, offset = 0x4, fixed_abs, tag = 'smem constant byte address 0x4 - core index']
  #allocation1 [shape = 'u32[72,128]{1,0:T(1,128)}', space=vmem, size = 0x9000, scoped, tag = 'internal scratch']
  #allocation2 [shape = 'bf16[400,320]{1,0:T(8,128)(2,1)}', space=vmem, size = 0x4b000, scoped, tag = 'scratch operand']
  %s0 = inlined_call_operand.vmem [shape: bf16[10,16,404], index: 0, kind: input, shape index: {}]
  %s1 = inlined_call_operand.vmem [shape: bf16[2,8,400], index: 1, kind: input, shape index: {}]
  %s2 = inlined_call_operand.vmem [shape: f32[2,8,1], index: 2, kind: input, shape index: {}]
  %s3 = inlined_call_operand.vmem [shape: bf16[10,8,320], index: 3, kind: output, shape index: {}]
  %s4 = sld [smem:[#allocation0]]
  $region45: #{samoe_forward.4} parent=0
    _
  %s6 = ssub.s32 1, %s4
  %s7 = scalar_select 0, %s6, %s4
  loop: start=0, step=1, limit=12
  $region2: #{samoe_forward.4} parent=0 // loop_pre_header
    _
  $region3: #{samoe_forward.4} parent=0 // loop_header
    %s9 = sphi 0, %s13
    %p10 = scmp.ge.s32.totalorder %s9, 12
    %s19 = sphi 0, %s21
    %s22 = sphi 0, %s19
    %s23 = sphi 0, %s22
    %s39 = sphi 0, %s23
    %s43 = sphi 0, %s43
    %s45 = sphi 0, %s43
    %s46 = sphi 0, %s45
    %s60 = sphi 0, %s46
    %s64 = sphi 0, %s64
    %s66 = sphi 0, %s64
    %s67 = sphi 0, %s66
    %s81 = sphi 0, %s67
    %s87 = sphi 0, %s89
    %s90 = sphi 0, %s87
    %s91 = sphi 0, %s90
    %s107 = sphi 0, %s91
  $region4: #{samoe_forward.4} parent=0 // loop_header_branch
    %12 = sbr.rel (%p10) target = $region8
  $region5: #{samoe_forward.4} parent=0 // loop_body
    %s14 = ssub.s32 %s9, 1
    %s15 = ssub.s32 %s9, 2
    %s16 = sadd.s32 %s9, 1
    %s17 = ssub.s32 %s9, %s16
    %p18 = scmp.eq.s32.totalorder %s17, 0
    %s20 = sadd.s32 %s19, 1
    %s21 = scalar_select %p18, %s19, %s20
    %p24 = pneg %p18
    %p25 = scmp.eq.s32.totalorder %s9, 9
    %p26 = por %p24, %p25
    %p27 = scmp.ne.s32.totalorder %s19, %s22
    %p28 = scmp.eq.s32.totalorder %s9, 0
    %p29 = por %p27, %p28
    %p30 = scmp.ne.s32.totalorder %s19, %s22
    %p31 = scmp.eq.s32.totalorder %s14, 9
    %p32 = por %p30, %p31
    %p33 = scmp.ne.s32.totalorder %s22, %s23
    %p34 = scmp.eq.s32.totalorder %s14, 0
    %p35 = por %p33, %p34
    %p36 = scmp.ne.s32.totalorder %s22, %s23
    %p37 = scmp.eq.s32.totalorder %s15, 9
    %p38 = por %p36, %p37
    %p40 = scmp.ne.s32.totalorder %s23, %s39
    %p41 = scmp.eq.s32.totalorder %s15, 0
    %p42 = por %p40, %p41
    %s44 = sadd.s32 %s43, 1
    %p47 = scmp.eq.s32.totalorder %s9, 9
    %p48 = scmp.ne.s32.totalorder %s43, %s45
    %p49 = scmp.eq.s32.totalorder %s9, 0
    %p50 = por %p48, %p49
    %p51 = scmp.ne.s32.totalorder %s43, %s45
    %p52 = scmp.eq.s32.totalorder %s14, 9
    %p53 = por %p51, %p52
    %p54 = scmp.ne.s32.totalorder %s45, %s46
    %p55 = scmp.eq.s32.totalorder %s14, 0
    %p56 = por %p54, %p55
    %p57 = scmp.ne.s32.totalorder %s45, %s46
    %p58 = scmp.eq.s32.totalorder %s15, 9
    %p59 = por %p57, %p58
    %p61 = scmp.ne.s32.totalorder %s46, %s60
    %p62 = scmp.eq.s32.totalorder %s15, 0
    %p63 = por %p61, %p62
    %s65 = sadd.s32 %s64, 1
    %p68 = scmp.eq.s32.totalorder %s9, 9
    %p69 = scmp.ne.s32.totalorder %s64, %s66
    %p70 = scmp.eq.s32.totalorder %s9, 0
    %p71 = por %p69, %p70
    %p72 = scmp.ne.s32.totalorder %s64, %s66
    %p73 = scmp.eq.s32.totalorder %s14, 9
    %p74 = por %p72, %p73
    %p75 = scmp.ne.s32.totalorder %s66, %s67
    %p76 = scmp.eq.s32.totalorder %s14, 0
    %p77 = por %p75, %p76
    %p78 = scmp.ne.s32.totalorder %s66, %s67
    %p79 = scmp.eq.s32.totalorder %s15, 9
    %p80 = por %p78, %p79
    %p82 = scmp.ne.s32.totalorder %s67, %s81
    %p83 = scmp.eq.s32.totalorder %s15, 0
    %p84 = por %p82, %p83
    %s85 = ssub.s32 %s9, %s16
    %p86 = scmp.eq.s32.totalorder %s85, 0
    %s88 = sadd.s32 %s87, 1
    %s89 = scalar_select %p86, %s87, %s88
    %p92 = pneg %p86
    %p93 = scmp.eq.s32.totalorder %s9, 9
    %p94 = por %p92, %p93
    %p95 = scmp.ne.s32.totalorder %s87, %s90
    %p96 = scmp.eq.s32.totalorder %s9, 0
    %p97 = por %p95, %p96
    %p98 = scmp.ne.s32.totalorder %s87, %s90
    %p99 = scmp.eq.s32.totalorder %s14, 9
    %p100 = por %p98, %p99
    %p101 = scmp.ne.s32.totalorder %s90, %s91
    %p102 = scmp.eq.s32.totalorder %s14, 0
    %p103 = por %p101, %p102
    %p104 = scmp.ne.s32.totalorder %s90, %s91
    %p105 = scmp.eq.s32.totalorder %s15, 9
    %p106 = por %p104, %p105
    %p108 = scmp.ne.s32.totalorder %s91, %s107
    %p109 = scmp.eq.s32.totalorder %s15, 0
    %p110 = por %p108, %p109
    %p111 = scmp.le.s32.totalorder 1, %s9
    %p112 = scmp.lt.s32.totalorder %s9, 11
    %p113 = pnand %p111, %p112
    %p114 = pneg %p113
    // Predicated region
    $region9: #{samoe_forward.4} parent=5 // pred_check
      _
    $region10: #{samoe_forward.4} parent=5 // pred_check_branch
      %116 = sbr.rel (%p113) target = $region12
    $region11: #{samoe_forward.4} parent=5 // pred_region
      %s117 = ssub.s32 %s9, 1
      // Predicated region
      $region13: #{samoe_forward.4} parent=11 // pred_check
        %p118 = pneg %p56
      $region14: #{samoe_forward.4} parent=11 // pred_check_branch
        %120 = sbr.rel (%p118) target = $region16
      $region15: #{samoe_forward.4} parent=11 // pred_region
        _
      $region16: #{samoe_forward.4} parent=11 // pred_fallthru
        _
      // Predicated region
      $region17: #{samoe_forward.4} parent=11 // pred_check
        %p121 = pneg %p77
      $region18: #{samoe_forward.4} parent=11 // pred_check_branch
        %123 = sbr.rel (%p121) target = $region20
      $region19: #{samoe_forward.4} parent=11 // pred_region
        _
      $region20: #{samoe_forward.4} parent=11 // pred_fallthru
        _
    $region12: #{samoe_forward.4} parent=5 // pred_fallthru
      _
    %p124 = scmp.lt.s32.totalorder %s9, 10
    // Predicated region
    $region21: #{samoe_forward.4} parent=5 // pred_check
      %p125 = pneg %p124
    $region22: #{samoe_forward.4} parent=5 // pred_check_branch
      %127 = sbr.rel (%p125) target = $region24
    $region23: #{samoe_forward.4} parent=5 // pred_region
      // Predicated region
      $region25: #{samoe_forward.4} parent=23 // pred_check
        %p128 = pneg %p29
      $region26: #{samoe_forward.4} parent=23 // pred_check_branch
        %130 = sbr.rel (%p128) target = $region28
      $region27: #{samoe_forward.4} parent=23 // pred_region
        %p131 = scmp.lt.s32.totalorder %s9, 9
        %s132 = scalar_select %p131, %s9, 9
        %s133 = smul.addr %s132, 8
        %s134 = smul.addr %s133, 4
        %s135 = scalar_lea.vmem %s0, %s134
      $region28: #{samoe_forward.4} parent=23 // pred_fallthru
        _
    $region24: #{samoe_forward.4} parent=5 // pred_fallthru
      _
    %p136 = scmp.le.s32.totalorder 1, %s9
    %p137 = scmp.lt.s32.totalorder %s9, 11
    %p138 = pnand %p136, %p137
    %p139 = pneg %p138
    // Predicated region
    $region29: #{samoe_forward.4} parent=5 // pred_check
      _
    $region30: #{samoe_forward.4} parent=5 // pred_check_branch
      %141 = sbr.rel (%p138) target = $region32
    $region31: #{samoe_forward.4} parent=5 // pred_region
      %s142 = ssub.s32 %s9, 1
      %p143 = scmp.lt.s32.totalorder %s14, 9
      %s144 = scalar_select %p143, %s14, 9
      %s145 = smul.addr %s144, 8
      %s146 = smul.addr %s145, 4
      %s147 = scalar_lea.vmem %s0, %s146
      %p148 = pneg %p35
      %p149 = pneg %p32
      %p150 = pneg %p56
      %p151 = pneg %p53
      %p152 = pneg %p77
      %p153 = pneg %p74
      %p154 = pneg %p103
      %p155 = pneg %p100
      %p156 = scmp.lt.s32.totalorder %s14, 9
      %s157 = scalar_select %p156, %s14, 9
      %s158 = smul.addr %s157, 3
      %s159 = smul.addr %s158, 4
      %s160 = scalar_lea.vmem %s3, %s159
      %p161 = scmp.lt.s32.totalorder %s14, 9
      %s162 = scalar_select %p161, %s14, 9
      %s163 = smul.addr %s162, 8
      %s164 = smul.addr %s163, 4
      %s165 = scalar_lea.vmem %s0, %s164
      %p166 = scmp.lt.s32.totalorder %s14, 9
      %s167 = scalar_select %p166, %s14, 9
      %s168 = smul.addr %s167, 3
      %s169 = smul.addr %s168, 4
      %s170 = scalar_lea.vmem %s3, %s169
      %p172 = scmp.ge.s32.totalorder %s14, 8
      %s173 = scalar_select %p172, 1, 0
      %s174 = smul.u32 %s173, 4
      %s175 = smul.addr %s174, 4
      %s176 = scalar_lea.vmem %s1, %s175
      %v177 = vld [vmem:[%s176] sm:$0xff]
      %v178 = vld [vmem:[%s176 + $0x8] sm:$0xff]
      %s179 = smul.u32 %s173, 8
      %s180 = scalar_lea.vmem %s2, %s179
      %v181 = vld [vmem:[%s180] sm:$0xff]
      %v182 = vld [vmem:[%s165] sm:$0xff]
      %v183 = vld [vmem:[%s165 + $0x8] sm:$0xf]
      %v184 = vld [vmem:[%s165 + $0x10] sm:$0xff]
      %v185 = vld [vmem:[%s165 + $0x18] sm:$0xf]
      %186 = vst [vmem:[#allocation2] sm:$0xff] %v182
      %vm187 = vcmask 519168
      %188 = vst.msk [vmem:[#allocation2 + $0x8] sm:$0xf] %vm187, %v183
      %189 = vst [vmem:[#allocation2 + $0xc] sm:$0xff] %v184
      %190 = vst.msk [vmem:[#allocation2 + $0x14] sm:$0xf] %vm187, %v185
      %v191 = vld [vmem:[%s165] sm:$0xff]
      %v192 = vld [vmem:[%s165 + $0x8] sm:$0xf]
      %v193 = vld [vmem:[%s165 + $0x10] sm:$0xff]
      %v194 = vld [vmem:[%s165 + $0x18] sm:$0xf]
      %199 = vrot.lane.b32.xlu0 %v191, 127
      %v200 = vpop.permute.xlu0 %199
      %201 = vrot.lane.b32.xlu0 %v192, 127
      %v202 = vpop.permute.xlu0 %201
      %203 = vrot.lane.b32.xlu0 %v193, 127
      %v204 = vpop.permute.xlu0 %203
      %205 = vrot.lane.b32.xlu0 %v194, 127
      %v206 = vpop.permute.xlu0 %205
      %v207 = vrot.slane %v200, 4
      %v208 = vrot.slane %v202, 4
      %v209 = vrot.slane %v204, 4
      %v210 = vrot.slane %v206, 4
      %vm211 = vcmask 1043456
      %v212 = vsel %vm211, %v207, %v208
      %vm213 = vcmask 1039360
      %v214 = vsel %vm213, %v200, %v212
      %v215 = vsel %vm211, %v209, %v210
      %v216 = vsel %vm213, %v204, %v215
      %221 = vst [vmem:[#allocation2 + $0x18] sm:$0xff] %v214
      %222 = vst.msk [vmem:[#allocation2 + $0x20] sm:$0xf] %vm187, %v202
      %223 = vst [vmem:[#allocation2 + $0x24] sm:$0xff] %v216
      %224 = vst.msk [vmem:[#allocation2 + $0x2c] sm:$0xf] %vm187, %v206
      %v225 = vld [vmem:[%s165] sm:$0xff]
      %v226 = vld [vmem:[%s165 + $0x8] sm:$0xf]
      %v227 = vld [vmem:[%s165 + $0x10] sm:$0xff]
      %v228 = vld [vmem:[%s165 + $0x18] sm:$0xf]
      %233 = vrot.lane.b32.xlu0 %v225, 126
      %v234 = vpop.permute.xlu0 %233
      %235 = vrot.lane.b32.xlu0 %v226, 126
      %v236 = vpop.permute.xlu0 %235
      %237 = vrot.lane.b32.xlu0 %v227, 126
      %v238 = vpop.permute.xlu0 %237
      %239 = vrot.lane.b32.xlu0 %v228, 126
      %v240 = vpop.permute.xlu0 %239
      %v241 = vrot.slane %v234, 4
      %v242 = vrot.slane %v236, 4
      %v243 = vrot.slane %v238, 4
      %v244 = vrot.slane %v240, 4
      %v245 = vsel %vm211, %v241, %v242
      %vm246 = vcmask 1031168
      %v247 = vsel %vm246, %v234, %v245
      %v248 = vsel %vm211, %v243, %v244
      %v249 = vsel %vm246, %v238, %v248
      %254 = vst [vmem:[#allocation2 + $0x30] sm:$0xff] %v247
      %255 = vst.msk [vmem:[#allocation2 + $0x38] sm:$0xf] %vm187, %v236
      %256 = vst [vmem:[#allocation2 + $0x3c] sm:$0xff] %v249
      %257 = vst.msk [vmem:[#allocation2 + $0x44] sm:$0xf] %vm187, %v240
      %v258 = vld [vmem:[%s165] sm:$0xff]
      %v259 = vld [vmem:[%s165 + $0x8] sm:$0xf]
      %v260 = vld [vmem:[%s165 + $0x10] sm:$0xff]
      %v261 = vld [vmem:[%s165 + $0x18] sm:$0xf]
      %266 = vrot.lane.b32.xlu0 %v258, 125
      %v267 = vpop.permute.xlu0 %266
      %268 = vrot.lane.b32.xlu0 %v259, 125
      %v269 = vpop.permute.xlu0 %268
      %270 = vrot.lane.b32.xlu0 %v260, 125
      %v271 = vpop.permute.xlu0 %270
      %272 = vrot.lane.b32.xlu0 %v261, 125
      %v273 = vpop.permute.xlu0 %272
      %v274 = vrot.slane %v267, 4
      %v275 = vrot.slane %v269, 4
      %v276 = vrot.slane %v271, 4
      %v277 = vrot.slane %v273, 4
      %v278 = vsel %vm211, %v274, %v275
      %vm279 = vcmask 1022976
      %v280 = vsel %vm279, %v267, %v278
      %v281 = vsel %vm211, %v276, %v277
      %v282 = vsel %vm279, %v271, %v281
      %287 = vst [vmem:[#allocation2 + $0x48] sm:$0xff] %v280
      %288 = vst.msk [vmem:[#allocation2 + $0x50] sm:$0xf] %vm187, %v269
      %289 = vst [vmem:[#allocation2 + $0x54] sm:$0xff] %v282
      %290 = vst.msk [vmem:[#allocation2 + $0x5c] sm:$0xf] %vm187, %v273
      %v291 = vld [vmem:[%s165] sm:$0xff]
      %v292 = vld [vmem:[%s165 + $0x8] sm:$0xf]
      %v293 = vld [vmem:[%s165 + $0x10] sm:$0xff]
      %v294 = vld [vmem:[%s165 + $0x18] sm:$0xf]
      %299 = vrot.lane.b32.xlu0 %v291, 124
      %v300 = vpop.permute.xlu0 %299
      %301 = vrot.lane.b32.xlu0 %v292, 124
      %v302 = vpop.permute.xlu0 %301
      %303 = vrot.lane.b32.xlu0 %v293, 124
      %v304 = vpop.permute.xlu0 %303
      %305 = vrot.lane.b32.xlu0 %v294, 124
      %v306 = vpop.permute.xlu0 %305
      %v307 = vrot.slane %v300, 4
      %v308 = vrot.slane %v302, 4
      %v309 = vrot.slane %v304, 4
      %v310 = vrot.slane %v306, 4
      %v311 = vsel %vm211, %v307, %v308
      %vm312 = vcmask 1014784
      %v313 = vsel %vm312, %v300, %v311
      %v314 = vsel %vm211, %v309, %v310
      %v315 = vsel %vm312, %v304, %v314
      %320 = vst [vmem:[#allocation2 + $0x60] sm:$0xff] %v313
      %321 = vst.msk [vmem:[#allocation2 + $0x68] sm:$0xf] %vm187, %v302
      %322 = vst [vmem:[#allocation2 + $0x6c] sm:$0xff] %v315
      %323 = vst.msk [vmem:[#allocation2 + $0x74] sm:$0xf] %vm187, %v306
      %v324 = vld [vmem:[%s165] sm:$0xff]
      %v325 = vld [vmem:[%s165 + $0x8] sm:$0xf]
      %v326 = vld [vmem:[%s165 + $0x10] sm:$0xff]
      %v327 = vld [vmem:[%s165 + $0x18] sm:$0xf]
      %332 = vrot.lane.b32.xlu0 %v324, 108
      %v333 = vpop.permute.xlu0 %332
      %334 = vrot.lane.b32.xlu0 %v325, 108
      %v335 = vpop.permute.xlu0 %334
      %336 = vrot.lane.b32.xlu0 %v326, 108
      %v337 = vpop.permute.xlu0 %336
      %338 = vrot.lane.b32.xlu0 %v327, 108
      %v339 = vpop.permute.xlu0 %338
      %v340 = vrot.slane %v333, 4
      %v341 = vrot.slane %v335, 4
      %v342 = vrot.slane %v337, 4
      %v343 = vrot.slane %v339, 4
      %v344 = vsel %vm211, %v340, %v341
      %vm345 = vcmask 883712
      %v346 = vsel %vm345, %v333, %v344
      %v347 = vsel %vm211, %v342, %v343
      %v348 = vsel %vm345, %v337, %v347
      %353 = vst [vmem:[#allocation2 + $0x78] sm:$0xff] %v346
      %354 = vst.msk [vmem:[#allocation2 + $0x80] sm:$0xf] %vm187, %v335
      %355 = vst [vmem:[#allocation2 + $0x84] sm:$0xff] %v348
      %356 = vst.msk [vmem:[#allocation2 + $0x8c] sm:$0xf] %vm187, %v339
      %v357 = vld [vmem:[%s165] sm:$0xff]
      %v358 = vld [vmem:[%s165 + $0x8] sm:$0xf]
      %v359 = vld [vmem:[%s165 + $0x10] sm:$0xff]
      %v360 = vld [vmem:[%s165 + $0x18] sm:$0xf]
      %365 = vrot.lane.b32.xlu0 %v357, 107
      %v366 = vpop.permute.xlu0 %365
      %367 = vrot.lane.b32.xlu0 %v358, 107
      %v368 = vpop.permute.xlu0 %367
      %369 = vrot.lane.b32.xlu0 %v359, 107
      %v370 = vpop.permute.xlu0 %369
      %371 = vrot.lane.b32.xlu0 %v360, 107
      %v372 = vpop.permute.xlu0 %371
      %v373 = vrot.slane %v366, 4
      %v374 = vrot.slane %v368, 4
      %v375 = vrot.slane %v370, 4
      %v376 = vrot.slane %v372, 4
      %v377 = vsel %vm211, %v373, %v374
      %vm378 = vcmask 875520
      %v379 = vsel %vm378, %v366, %v377
      %v380 = vsel %vm211, %v375, %v376
      %v381 = vsel %vm378, %v370, %v380
      %386 = vst [vmem:[#allocation2 + $0x90] sm:$0xff] %v379
      %387 = vst.msk [vmem:[#allocation2 + $0x98] sm:$0xf] %vm187, %v368
      %388 = vst [vmem:[#allocation2 + $0x9c] sm:$0xff] %v381
      %389 = vst.msk [vmem:[#allocation2 + $0xa4] sm:$0xf] %vm187, %v372
      %v390 = vld [vmem:[%s165] sm:$0xff]
      %v391 = vld [vmem:[%s165 + $0x8] sm:$0xf]
      %v392 = vld [vmem:[%s165 + $0x10] sm:$0xff]
      %v393 = vld [vmem:[%s165 + $0x18] sm:$0xf]
      %398 = vrot.lane.b32.xlu0 %v390, 106
      %v399 = vpop.permute.xlu0 %398
      %400 = vrot.lane.b32.xlu0 %v391, 106
      %v401 = vpop.permute.xlu0 %400
      %402 = vrot.lane.b32.xlu0 %v392, 106
      %v403 = vpop.permute.xlu0 %402
      %404 = vrot.lane.b32.xlu0 %v393, 106
      %v405 = vpop.permute.xlu0 %404
      %v406 = vrot.slane %v399, 4
      %v407 = vrot.slane %v401, 4
      %v408 = vrot.slane %v403, 4
      %v409 = vrot.slane %v405, 4
      %v410 = vsel %vm211, %v406, %v407
      %vm411 = vcmask 867328
      %v412 = vsel %vm411, %v399, %v410
      %v413 = vsel %vm211, %v408, %v409
      %v414 = vsel %vm411, %v403, %v413
      %419 = vst [vmem:[#allocation2 + $0xa8] sm:$0xff] %v412
      %420 = vst.msk [vmem:[#allocation2 + $0xb0] sm:$0xf] %vm187, %v401
      %421 = vst [vmem:[#allocation2 + $0xb4] sm:$0xff] %v414
      %422 = vst.msk [vmem:[#allocation2 + $0xbc] sm:$0xf] %vm187, %v405
      %v423 = vld [vmem:[%s165] sm:$0xff]
      %v424 = vld [vmem:[%s165 + $0x8] sm:$0xf]
      %v425 = vld [vmem:[%s165 + $0x10] sm:$0xff]
      %v426 = vld [vmem:[%s165 + $0x18] sm:$0xf]
      %431 = vrot.lane.b32.xlu0 %v423, 105
      %v432 = vpop.permute.xlu0 %431
      %433 = vrot.lane.b32.xlu0 %v424, 105
      %v434 = vpop.permute.xlu0 %433
      %435 = vrot.lane.b32.xlu0 %v425, 105
      %v436 = vpop.permute.xlu0 %435
      %437 = vrot.lane.b32.xlu0 %v426, 105
      %v438 = vpop.permute.xlu0 %437
      %v439 = vrot.slane %v432, 4
      %v440 = vrot.slane %v434, 4
      %v441 = vrot.slane %v436, 4
      %v442 = vrot.slane %v438, 4
      %v443 = vsel %vm211, %v439, %v440
      %vm444 = vcmask 859136
      %v445 = vsel %vm444, %v432, %v443
      %v446 = vsel %vm211, %v441, %v442
      %v447 = vsel %vm444, %v436, %v446
      %452 = vst [vmem:[#allocation2 + $0xc0] sm:$0xff] %v445
      %453 = vst.msk [vmem:[#allocation2 + $0xc8] sm:$0xf] %vm187, %v434
      %454 = vst [vmem:[#allocation2 + $0xcc] sm:$0xff] %v447
      %455 = vst.msk [vmem:[#allocation2 + $0xd4] sm:$0xf] %vm187, %v438
      %v456 = vld [vmem:[%s165] sm:$0xff]
      %v457 = vld [vmem:[%s165 + $0x8] sm:$0xf]
      %v458 = vld [vmem:[%s165 + $0x10] sm:$0xff]
      %v459 = vld [vmem:[%s165 + $0x18] sm:$0xf]
      %464 = vrot.lane.b32.xlu0 %v456, 104
      %v465 = vpop.permute.xlu0 %464
      %466 = vrot.lane.b32.xlu0 %v457, 104
      %v467 = vpop.permute.xlu0 %466
      %468 = vrot.lane.b32.xlu0 %v458, 104
      %v469 = vpop.permute.xlu0 %468
      %470 = vrot.lane.b32.xlu0 %v459, 104
      %v471 = vpop.permute.xlu0 %470
      %v472 = vrot.slane %v465, 4
      %v473 = vrot.slane %v467, 4
      %v474 = vrot.slane %v469, 4
      %v475 = vrot.slane %v471, 4
      %v476 = vsel %vm211, %v472, %v473
      %vm477 = vcmask 850944
      %v478 = vsel %vm477, %v465, %v476
      %v479 = vsel %vm211, %v474, %v475
      %v480 = vsel %vm477, %v469, %v479
      %485 = vst [vmem:[#allocation2 + $0xd8] sm:$0xff] %v478
      %486 = vst.msk [vmem:[#allocation2 + $0xe0] sm:$0xf] %vm187, %v467
      %487 = vst [vmem:[#allocation2 + $0xe4] sm:$0xff] %v480
      %488 = vst.msk [vmem:[#allocation2 + $0xec] sm:$0xf] %vm187, %v471
      %v489 = vld [vmem:[%s165] sm:$0xff]
      %v490 = vld [vmem:[%s165 + $0x8] sm:$0xf]
      %v491 = vld [vmem:[%s165 + $0x10] sm:$0xff]
      %v492 = vld [vmem:[%s165 + $0x18] sm:$0xf]
      %497 = vrot.lane.b32.xlu0 %v489, 88
      %v498 = vpop.permute.xlu0 %497
      %499 = vrot.lane.b32.xlu0 %v490, 88
      %v500 = vpop.permute.xlu0 %499
      %501 = vrot.lane.b32.xlu0 %v491, 88
      %v502 = vpop.permute.xlu0 %501
      %503 = vrot.lane.b32.xlu0 %v492, 88
      %v504 = vpop.permute.xlu0 %503
      %v505 = vrot.slane %v498, 4
      %v506 = vrot.slane %v500, 4
      %v507 = vrot.slane %v502, 4
      %v508 = vrot.slane %v504, 4
      %v509 = vsel %vm211, %v505, %v506
      %vm510 = vcmask 719872
      %v511 = vsel %vm510, %v498, %v509
      %v512 = vsel %vm211, %v507, %v508
      %v513 = vsel %vm510, %v502, %v512
      %518 = vst [vmem:[#allocation2 + $0xf0] sm:$0xff] %v511
      %519 = vst.msk [vmem:[#allocation2 + $0xf8] sm:$0xf] %vm187, %v500
      %520 = vst [vmem:[#allocation2 + $0xfc] sm:$0xff] %v513
      %521 = vst.msk [vmem:[#allocation2 + $0x104] sm:$0xf] %vm187, %v504
      %v522 = vld [vmem:[%s165] sm:$0xff]
      %v523 = vld [vmem:[%s165 + $0x8] sm:$0xf]
      %v524 = vld [vmem:[%s165 + $0x10] sm:$0xff]
      %v525 = vld [vmem:[%s165 + $0x18] sm:$0xf]
      %530 = vrot.lane.b32.xlu0 %v522, 87
      %v531 = vpop.permute.xlu0 %530
      %532 = vrot.lane.b32.xlu0 %v523, 87
      %v533 = vpop.permute.xlu0 %532
      %534 = vrot.lane.b32.xlu0 %v524, 87
      %v535 = vpop.permute.xlu0 %534
      %536 = vrot.lane.b32.xlu0 %v525, 87
      %v537 = vpop.permute.xlu0 %536
      %v538 = vrot.slane %v531, 4
      %v539 = vrot.slane %v533, 4
      %v540 = vrot.slane %v535, 4
      %v541 = vrot.slane %v537, 4
      %v542 = vsel %vm211, %v538, %v539
      %vm543 = vcmask 711680
      %v544 = vsel %vm543, %v531, %v542
      %v545 = vsel %vm211, %v540, %v541
      %v546 = vsel %vm543, %v535, %v545
      %551 = vst [vmem:[#allocation2 + $0x108] sm:$0xff] %v544
      %552 = vst.msk [vmem:[#allocation2 + $0x110] sm:$0xf] %vm187, %v533
      %553 = vst [vmem:[#allocation2 + $0x114] sm:$0xff] %v546
      %554 = vst.msk [vmem:[#allocation2 + $0x11c] sm:$0xf] %vm187, %v537
      %v555 = vld [vmem:[%s165] sm:$0xff]
      %v556 = vld [vmem:[%s165 + $0x8] sm:$0xf]
      %v557 = vld [vmem:[%s165 + $0x10] sm:$0xff]
      %v558 = vld [vmem:[%s165 + $0x18] sm:$0xf]
      %563 = vrot.lane.b32.xlu0 %v555, 86
      %v564 = vpop.permute.xlu0 %563
      %565 = vrot.lane.b32.xlu0 %v556, 86
      %v566 = vpop.permute.xlu0 %565
      %567 = vrot.lane.b32.xlu0 %v557, 86
      %v568 = vpop.permute.xlu0 %567
      %569 = vrot.lane.b32.xlu0 %v558, 86
      %v570 = vpop.permute.xlu0 %569
      %v571 = vrot.slane %v564, 4
      %v572 = vrot.slane %v566, 4
      %v573 = vrot.slane %v568, 4
      %v574 = vrot.slane %v570, 4
      %v575 = vsel %vm211, %v571, %v572
      %vm576 = vcmask 703488
      %v577 = vsel %vm576, %v564, %v575
      %v578 = vsel %vm211, %v573, %v574
      %v579 = vsel %vm576, %v568, %v578
      %584 = vst [vmem:[#allocation2 + $0x120] sm:$0xff] %v577
      %585 = vst.msk [vmem:[#allocation2 + $0x128] sm:$0xf] %vm187, %v566
      %586 = vst [vmem:[#allocation2 + $0x12c] sm:$0xff] %v579
      %587 = vst.msk [vmem:[#allocation2 + $0x134] sm:$0xf] %vm187, %v570
      %v588 = vld [vmem:[%s165] sm:$0xff]
      %v589 = vld [vmem:[%s165 + $0x8] sm:$0xf]
      %v590 = vld [vmem:[%s165 + $0x10] sm:$0xff]
      %v591 = vld [vmem:[%s165 + $0x18] sm:$0xf]
      %596 = vrot.lane.b32.xlu0 %v588, 85
      %v597 = vpop.permute.xlu0 %596
      %598 = vrot.lane.b32.xlu0 %v589, 85
      %v599 = vpop.permute.xlu0 %598
      %600 = vrot.lane.b32.xlu0 %v590, 85
      %v601 = vpop.permute.xlu0 %600
      %602 = vrot.lane.b32.xlu0 %v591, 85
      %v603 = vpop.permute.xlu0 %602
      %v604 = vrot.slane %v597, 4
      %v605 = vrot.slane %v599, 4
      %v606 = vrot.slane %v601, 4
      %v607 = vrot.slane %v603, 4
      %v608 = vsel %vm211, %v604, %v605
      %vm609 = vcmask 695296
      %v610 = vsel %vm609, %v597, %v608
      %v611 = vsel %vm211, %v606, %v607
      %v612 = vsel %vm609, %v601, %v611
      %617 = vst [vmem:[#allocation2 + $0x138] sm:$0xff] %v610
      %618 = vst.msk [vmem:[#allocation2 + $0x140] sm:$0xf] %vm187, %v599
      %619 = vst [vmem:[#allocation2 + $0x144] sm:$0xff] %v612
      %620 = vst.msk [vmem:[#allocation2 + $0x14c] sm:$0xf] %vm187, %v603
      %v621 = vld [vmem:[%s165] sm:$0xff]
      %v622 = vld [vmem:[%s165 + $0x8] sm:$0xf]
      %v623 = vld [vmem:[%s165 + $0x10] sm:$0xff]
      %v624 = vld [vmem:[%s165 + $0x18] sm:$0xf]
      %629 = vrot.lane.b32.xlu0 %v621, 84
      %v630 = vpop.permute.xlu0 %629
      %631 = vrot.lane.b32.xlu0 %v622, 84
      %v632 = vpop.permute.xlu0 %631
      %633 = vrot.lane.b32.xlu0 %v623, 84
      %v634 = vpop.permute.xlu0 %633
      %635 = vrot.lane.b32.xlu0 %v624, 84
      %v636 = vpop.permute.xlu0 %635
      %v637 = vrot.slane %v630, 4
      %v638 = vrot.slane %v632, 4
      %v639 = vrot.slane %v634, 4
      %v640 = vrot.slane %v636, 4
      %v641 = vsel %vm211, %v637, %v638
      %vm642 = vcmask 687104
      %v643 = vsel %vm642, %v630, %v641
      %v644 = vsel %vm211, %v639, %v640
      %v645 = vsel %vm642, %v634, %v644
      %650 = vst [vmem:[#allocation2 + $0x150] sm:$0xff] %v643
      %651 = vst.msk [vmem:[#allocation2 + $0x158] sm:$0xf] %vm187, %v632
      %652 = vst [vmem:[#allocation2 + $0x15c] sm:$0xff] %v645
      %653 = vst.msk [vmem:[#allocation2 + $0x164] sm:$0xf] %vm187, %v636
      %v654 = vld [vmem:[%s165] sm:$0xff]
      %v655 = vld [vmem:[%s165 + $0x8] sm:$0xf]
      %v656 = vld [vmem:[%s165 + $0x10] sm:$0xff]
      %v657 = vld [vmem:[%s165 + $0x18] sm:$0xf]
      %662 = vrot.lane.b32.xlu0 %v654, 68
      %v663 = vpop.permute.xlu0 %662
      %664 = vrot.lane.b32.xlu0 %v655, 68
      %v665 = vpop.permute.xlu0 %664
      %666 = vrot.lane.b32.xlu0 %v656, 68
      %v667 = vpop.permute.xlu0 %666
      %668 = vrot.lane.b32.xlu0 %v657, 68
      %v669 = vpop.permute.xlu0 %668
      %v670 = vrot.slane %v663, 4
      %v671 = vrot.slane %v665, 4
      %v672 = vrot.slane %v667, 4
      %v673 = vrot.slane %v669, 4
      %v674 = vsel %vm211, %v670, %v671
      %vm675 = vcmask 556032
      %v676 = vsel %vm675, %v663, %v674
      %v677 = vsel %vm211, %v672, %v673
      %v678 = vsel %vm675, %v667, %v677
      %683 = vst [vmem:[#allocation2 + $0x168] sm:$0xff] %v676
      %684 = vst.msk [vmem:[#allocation2 + $0x170] sm:$0xf] %vm187, %v665
      %685 = vst [vmem:[#allocation2 + $0x174] sm:$0xff] %v678
      %686 = vst.msk [vmem:[#allocation2 + $0x17c] sm:$0xf] %vm187, %v669
      %v687 = vld [vmem:[%s165] sm:$0xff]
      %v688 = vld [vmem:[%s165 + $0x8] sm:$0xf]
      %v689 = vld [vmem:[%s165 + $0x10] sm:$0xff]
      %v690 = vld [vmem:[%s165 + $0x18] sm:$0xf]
      %695 = vrot.lane.b32.xlu0 %v687, 67
      %v696 = vpop.permute.xlu0 %695
      %697 = vrot.lane.b32.xlu0 %v688, 67
      %v698 = vpop.permute.xlu0 %697
      %699 = vrot.lane.b32.xlu0 %v689, 67
      %v700 = vpop.permute.xlu0 %699
      %701 = vrot.lane.b32.xlu0 %v690, 67
      %v702 = vpop.permute.xlu0 %701
      %v703 = vrot.slane %v696, 4
      %v704 = vrot.slane %v698, 4
      %v705 = vrot.slane %v700, 4
      %v706 = vrot.slane %v702, 4
      %v707 = vsel %vm211, %v703, %v704
      %vm708 = vcmask 547840
      %v709 = vsel %vm708, %v696, %v707
      %v710 = vsel %vm211, %v705, %v706
      %v711 = vsel %vm708, %v700, %v710
      %716 = vst [vmem:[#allocation2 + $0x180] sm:$0xff] %v709
      %717 = vst.msk [vmem:[#allocation2 + $0x188] sm:$0xf] %vm187, %v698
      %718 = vst [vmem:[#allocation2 + $0x18c] sm:$0xff] %v711
      %719 = vst.msk [vmem:[#allocation2 + $0x194] sm:$0xf] %vm187, %v702
      %v720 = vld [vmem:[%s165] sm:$0xff]
      %v721 = vld [vmem:[%s165 + $0x8] sm:$0xf]
      %v722 = vld [vmem:[%s165 + $0x10] sm:$0xff]
      %v723 = vld [vmem:[%s165 + $0x18] sm:$0xf]
      %728 = vrot.lane.b32.xlu0 %v720, 66
      %v729 = vpop.permute.xlu0 %728
      %730 = vrot.lane.b32.xlu0 %v721, 66
      %v731 = vpop.permute.xlu0 %730
      %732 = vrot.lane.b32.xlu0 %v722, 66
      %v733 = vpop.permute.xlu0 %732
      %734 = vrot.lane.b32.xlu0 %v723, 66
      %v735 = vpop.permute.xlu0 %734
      %v736 = vrot.slane %v729, 4
      %v737 = vrot.slane %v731, 4
      %v738 = vrot.slane %v733, 4
      %v739 = vrot.slane %v735, 4
      %v740 = vsel %vm211, %v736, %v737
      %vm741 = vcmask 539648
      %v742 = vsel %vm741, %v729, %v740
      %v743 = vsel %vm211, %v738, %v739
      %v744 = vsel %vm741, %v733, %v743
      %749 = vst [vmem:[#allocation2 + $0x198] sm:$0xff] %v742
      %750 = vst.msk [vmem:[#allocation2 + $0x1a0] sm:$0xf] %vm187, %v731
      %751 = vst [vmem:[#allocation2 + $0x1a4] sm:$0xff] %v744
      %752 = vst.msk [vmem:[#allocation2 + $0x1ac] sm:$0xf] %vm187, %v735
      %v753 = vld [vmem:[%s165] sm:$0xff]
      %v754 = vld [vmem:[%s165 + $0x8] sm:$0xf]
      %v755 = vld [vmem:[%s165 + $0x10] sm:$0xff]
      %v756 = vld [vmem:[%s165 + $0x18] sm:$0xf]
      %761 = vrot.lane.b32.xlu0 %v753, 65
      %v762 = vpop.permute.xlu0 %761
      %763 = vrot.lane.b32.xlu0 %v754, 65
      %v764 = vpop.permute.xlu0 %763
      %765 = vrot.lane.b32.xlu0 %v755, 65
      %v766 = vpop.permute.xlu0 %765
      %767 = vrot.lane.b32.xlu0 %v756, 65
      %v768 = vpop.permute.xlu0 %767
      %v769 = vrot.slane %v762, 4
      %v770 = vrot.slane %v764, 4
      %v771 = vrot.slane %v766, 4
      %v772 = vrot.slane %v768, 4
      %v773 = vsel %vm211, %v769, %v770
      %vm774 = vcmask 531456
      %v775 = vsel %vm774, %v762, %v773
      %v776 = vsel %vm211, %v771, %v772
      %v777 = vsel %vm774, %v766, %v776
      %782 = vst [vmem:[#allocation2 + $0x1b0] sm:$0xff] %v775
      %783 = vst.msk [vmem:[#allocation2 + $0x1b8] sm:$0xf] %vm187, %v764
      %784 = vst [vmem:[#allocation2 + $0x1bc] sm:$0xff] %v777
      %785 = vst.msk [vmem:[#allocation2 + $0x1c4] sm:$0xf] %vm187, %v768
      %v786 = vld [vmem:[%s165] sm:$0xff]
      %v787 = vld [vmem:[%s165 + $0x8] sm:$0xf]
      %v788 = vld [vmem:[%s165 + $0x10] sm:$0xff]
      %v789 = vld [vmem:[%s165 + $0x18] sm:$0xf]
      %794 = vrot.lane.b32.xlu0 %v786, 64
      %v795 = vpop.permute.xlu0 %794
      %796 = vrot.lane.b32.xlu0 %v787, 64
      %v797 = vpop.permute.xlu0 %796
      %798 = vrot.lane.b32.xlu0 %v788, 64
      %v799 = vpop.permute.xlu0 %798
      %800 = vrot.lane.b32.xlu0 %v789, 64
      %v801 = vpop.permute.xlu0 %800
      %v802 = vrot.slane %v795, 4
      %v803 = vrot.slane %v797, 4
      %v804 = vrot.slane %v799, 4
      %v805 = vrot.slane %v801, 4
      %v806 = vsel %vm211, %v802, %v803
      %vm807 = vcmask 523264
      %v808 = vsel %vm807, %v795, %v806
      %v809 = vsel %vm211, %v804, %v805
      %v810 = vsel %vm807, %v799, %v809
      %815 = vst [vmem:[#allocation2 + $0x1c8] sm:$0xff] %v808
      %816 = vst.msk [vmem:[#allocation2 + $0x1d0] sm:$0xf] %vm187, %v797
      %817 = vst [vmem:[#allocation2 + $0x1d4] sm:$0xff] %v810
      %818 = vst.msk [vmem:[#allocation2 + $0x1dc] sm:$0xf] %vm187, %v801
      %v819 = vld [vmem:[%s165] sm:$0xff]
      %v820 = vld [vmem:[%s165 + $0x8] sm:$0xff]
      %v821 = vld [vmem:[%s165 + $0x10] sm:$0xff]
      %v822 = vld [vmem:[%s165 + $0x18] sm:$0xff]
      %827 = vrot.lane.b32.xlu0 %v819, 48
      %v828 = vpop.permute.xlu0 %827
      %829 = vrot.lane.b32.xlu0 %v820, 48
      %v830 = vpop.permute.xlu0 %829
      %831 = vrot.lane.b32.xlu0 %v821, 48
      %v832 = vpop.permute.xlu0 %831
      %833 = vrot.lane.b32.xlu0 %v822, 48
      %v834 = vpop.permute.xlu0 %833
      %v835 = vrot.slane %v828, 4
      %v836 = vrot.slane %v830, 4
      %v837 = vrot.slane %v832, 4
      %v838 = vrot.slane %v834, 4
      %v839 = vsel %vm211, %v835, %v836
      %vm840 = vcmask 392192
      %v841 = vsel %vm840, %v828, %v839
      %v842 = vsel %vm840, %v830, %v836
      %v843 = vsel %vm211, %v837, %v838
      %v844 = vsel %vm840, %v832, %v843
      %v845 = vsel %vm840, %v834, %v838
      %850 = vst [vmem:[#allocation2 + $0x1e0] sm:$0xff] %v841
      %851 = vst.msk [vmem:[#allocation2 + $0x1e8] sm:$0xf] %vm187, %v842
      %852 = vst [vmem:[#allocation2 + $0x1ec] sm:$0xff] %v844
      %853 = vst.msk [vmem:[#allocation2 + $0x1f4] sm:$0xf] %vm187, %v845
      %v854 = vld [vmem:[%s165] sm:$0xff]
      %v855 = vld [vmem:[%s165 + $0x8] sm:$0xff]
      %v856 = vld [vmem:[%s165 + $0x10] sm:$0xff]
      %v857 = vld [vmem:[%s165 + $0x18] sm:$0xff]
      %862 = vrot.lane.b32.xlu0 %v854, 47
      %v863 = vpop.permute.xlu0 %862
      %864 = vrot.lane.b32.xlu0 %v855, 47
      %v865 = vpop.permute.xlu0 %864
      %866 = vrot.lane.b32.xlu0 %v856, 47
      %v867 = vpop.permute.xlu0 %866
      %868 = vrot.lane.b32.xlu0 %v857, 47
      %v869 = vpop.permute.xlu0 %868
      %v870 = vrot.slane %v863, 4
      %v871 = vrot.slane %v865, 4
      %v872 = vrot.slane %v867, 4
      %v873 = vrot.slane %v869, 4
      %v874 = vsel %vm211, %v870, %v871
      %vm875 = vcmask 384000
      %v876 = vsel %vm875, %v863, %v874
      %v877 = vsel %vm875, %v865, %v871
      %v878 = vsel %vm211, %v872, %v873
      %v879 = vsel %vm875, %v867, %v878
      %v880 = vsel %vm875, %v869, %v873
      %885 = vst [vmem:[#allocation2 + $0x1f8] sm:$0xff] %v876
      %886 = vst.msk [vmem:[#allocation2 + $0x200] sm:$0xf] %vm187, %v877
      %887 = vst [vmem:[#allocation2 + $0x204] sm:$0xff] %v879
      %888 = vst.msk [vmem:[#allocation2 + $0x20c] sm:$0xf] %vm187, %v880
      %v889 = vld [vmem:[%s165] sm:$0xff]
      %v890 = vld [vmem:[%s165 + $0x8] sm:$0xff]
      %v891 = vld [vmem:[%s165 + $0x10] sm:$0xff]
      %v892 = vld [vmem:[%s165 + $0x18] sm:$0xff]
      %897 = vrot.lane.b32.xlu0 %v889, 46
      %v898 = vpop.permute.xlu0 %897
      %899 = vrot.lane.b32.xlu0 %v890, 46
      %v900 = vpop.permute.xlu0 %899
      %901 = vrot.lane.b32.xlu0 %v891, 46
      %v902 = vpop.permute.xlu0 %901
      %903 = vrot.lane.b32.xlu0 %v892, 46
      %v904 = vpop.permute.xlu0 %903
      %v905 = vrot.slane %v898, 4
      %v906 = vrot.slane %v900, 4
      %v907 = vrot.slane %v902, 4
      %v908 = vrot.slane %v904, 4
      %v909 = vsel %vm211, %v905, %v906
      %vm910 = vcmask 375808
      %v911 = vsel %vm910, %v898, %v909
      %v912 = vsel %vm910, %v900, %v906
      %v913 = vsel %vm211, %v907, %v908
      %v914 = vsel %vm910, %v902, %v913
      %v915 = vsel %vm910, %v904, %v908
      %920 = vst [vmem:[#allocation2 + $0x210] sm:$0xff] %v911
      %921 = vst.msk [vmem:[#allocation2 + $0x218] sm:$0xf] %vm187, %v912
      %922 = vst [vmem:[#allocation2 + $0x21c] sm:$0xff] %v914
      %923 = vst.msk [vmem:[#allocation2 + $0x224] sm:$0xf] %vm187, %v915
      %v924 = vld [vmem:[%s165] sm:$0xff]
      %v925 = vld [vmem:[%s165 + $0x8] sm:$0xff]
      %v926 = vld [vmem:[%s165 + $0x10] sm:$0xff]
      %v927 = vld [vmem:[%s165 + $0x18] sm:$0xff]
      %932 = vrot.lane.b32.xlu0 %v924, 45
      %v933 = vpop.permute.xlu0 %932
      %934 = vrot.lane.b32.xlu0 %v925, 45
      %v935 = vpop.permute.xlu0 %934
      %936 = vrot.lane.b32.xlu0 %v926, 45
      %v937 = vpop.permute.xlu0 %936
      %938 = vrot.lane.b32.xlu0 %v927, 45
      %v939 = vpop.permute.xlu0 %938
      %v940 = vrot.slane %v933, 4
      %v941 = vrot.slane %v935, 4
      %v942 = vrot.slane %v937, 4
      %v943 = vrot.slane %v939, 4
      %v944 = vsel %vm211, %v940, %v941
      %vm945 = vcmask 367616
      %v946 = vsel %vm945, %v933, %v944
      %v947 = vsel %vm945, %v935, %v941
      %v948 = vsel %vm211, %v942, %v943
      %v949 = vsel %vm945, %v937, %v948
      %v950 = vsel %vm945, %v939, %v943
      %955 = vst [vmem:[#allocation2 + $0x228] sm:$0xff] %v946
      %956 = vst.msk [vmem:[#allocation2 + $0x230] sm:$0xf] %vm187, %v947
      %957 = vst [vmem:[#allocation2 + $0x234] sm:$0xff] %v949
      %958 = vst.msk [vmem:[#allocation2 + $0x23c] sm:$0xf] %vm187, %v950
      %v959 = vld [vmem:[%s165] sm:$0xff]
      %v960 = vld [vmem:[%s165 + $0x8] sm:$0xff]
      %v961 = vld [vmem:[%s165 + $0x10] sm:$0xff]
      %v962 = vld [vmem:[%s165 + $0x18] sm:$0xff]
      %967 = vrot.lane.b32.xlu0 %v959, 44
      %v968 = vpop.permute.xlu0 %967
      %969 = vrot.lane.b32.xlu0 %v960, 44
      %v970 = vpop.permute.xlu0 %969
      %971 = vrot.lane.b32.xlu0 %v961, 44
      %v972 = vpop.permute.xlu0 %971
      %973 = vrot.lane.b32.xlu0 %v962, 44
      %v974 = vpop.permute.xlu0 %973
      %v975 = vrot.slane %v968, 4
      %v976 = vrot.slane %v970, 4
      %v977 = vrot.slane %v972, 4
      %v978 = vrot.slane %v974, 4
      %v979 = vsel %vm211, %v975, %v976
      %vm980 = vcmask 359424
      %v981 = vsel %vm980, %v968, %v979
      %v982 = vsel %vm980, %v970, %v976
      %v983 = vsel %vm211, %v977, %v978
      %v984 = vsel %vm980, %v972, %v983
      %v985 = vsel %vm980, %v974, %v978
      %990 = vst [vmem:[#allocation2 + $0x240] sm:$0xff] %v981
      %991 = vst.msk [vmem:[#allocation2 + $0x248] sm:$0xf] %vm187, %v982
      %992 = vst [vmem:[#allocation2 + $0x24c] sm:$0xff] %v984
      %993 = vst.msk [vmem:[#allocation2 + $0x254] sm:$0xf] %vm187, %v985
      %v994 = vld [vmem:[#allocation2] sm:$0xff]
      %v995 = vld [vmem:[#allocation2 + $0x8] sm:$0xf]
      %v996 = vld [vmem:[#allocation2 + $0xc] sm:$0xff]
      %v997 = vld [vmem:[#allocation2 + $0x14] sm:$0xf]
      %v998 = vld [vmem:[#allocation2 + $0x18] sm:$0xff]
      %v999 = vld [vmem:[#allocation2 + $0x20] sm:$0xf]
      %v1000 = vld [vmem:[#allocation2 + $0x24] sm:$0xff]
      %v1001 = vld [vmem:[#allocation2 + $0x2c] sm:$0xf]
      %v1002 = vld [vmem:[#allocation2 + $0x30] sm:$0xff]
      %v1003 = vld [vmem:[#allocation2 + $0x38] sm:$0xf]
      %v1004 = vld [vmem:[#allocation2 + $0x3c] sm:$0xff]
      %v1005 = vld [vmem:[#allocation2 + $0x44] sm:$0xf]
      %v1006 = vld [vmem:[#allocation2 + $0x48] sm:$0xff]
      %v1007 = vld [vmem:[#allocation2 + $0x50] sm:$0xf]
      %v1008 = vld [vmem:[#allocation2 + $0x54] sm:$0xff]
      %v1009 = vld [vmem:[#allocation2 + $0x5c] sm:$0xf]
      %v1010 = vld [vmem:[#allocation2 + $0x60] sm:$0xff]
      %v1011 = vld [vmem:[#allocation2 + $0x68] sm:$0xf]
      %v1012 = vld [vmem:[#allocation2 + $0x6c] sm:$0xff]
      %v1013 = vld [vmem:[#allocation2 + $0x74] sm:$0xf]
      %v1014 = vld [vmem:[#allocation2 + $0x78] sm:$0xff]
      %v1015 = vld [vmem:[#allocation2 + $0x80] sm:$0xf]
      %v1016 = vld [vmem:[#allocation2 + $0x84] sm:$0xff]
      %v1017 = vld [vmem:[#allocation2 + $0x8c] sm:$0xf]
      %v1018 = vld [vmem:[#allocation2 + $0x90] sm:$0xff]
      %v1019 = vld [vmem:[#allocation2 + $0x98] sm:$0xf]
      %v1020 = vld [vmem:[#allocation2 + $0x9c] sm:$0xff]
      %v1021 = vld [vmem:[#allocation2 + $0xa4] sm:$0xf]
      %v1022 = vld [vmem:[#allocation2 + $0xa8] sm:$0xff]
      %v1023 = vld [vmem:[#allocation2 + $0xb0] sm:$0xf]
      %v1024 = vld [vmem:[#allocation2 + $0xb4] sm:$0xff]
      %v1025 = vld [vmem:[#allocation2 + $0xbc] sm:$0xf]
      %v1026 = vld [vmem:[#allocation2 + $0xc0] sm:$0xff]
      %v1027 = vld [vmem:[#allocation2 + $0xc8] sm:$0xf]
      %v1028 = vld [vmem:[#allocation2 + $0xcc] sm:$0xff]
      %v1029 = vld [vmem:[#allocation2 + $0xd4] sm:$0xf]
      %v1030 = vld [vmem:[#allocation2 + $0xd8] sm:$0xff]
      %v1031 = vld [vmem:[#allocation2 + $0xe0] sm:$0xf]
      %v1032 = vld [vmem:[#allocation2 + $0xe4] sm:$0xff]
      %v1033 = vld [vmem:[#allocation2 + $0xec] sm:$0xf]
      %v1034 = vld [vmem:[#allocation2 + $0xf0] sm:$0xff]
      %v1035 = vld [vmem:[#allocation2 + $0xf8] sm:$0xf]
      %v1036 = vld [vmem:[#allocation2 + $0xfc] sm:$0xff]
      %v1037 = vld [vmem:[#allocation2 + $0x104] sm:$0xf]
      %v1038 = vld [vmem:[#allocation2 + $0x108] sm:$0xff]
      %v1039 = vld [vmem:[#allocation2 + $0x110] sm:$0xf]
      %v1040 = vld [vmem:[#allocation2 + $0x114] sm:$0xff]
      %v1041 = vld [vmem:[#allocation2 + $0x11c] sm:$0xf]
      %v1042 = vld [vmem:[#allocation2 + $0x120] sm:$0xff]
      %v1043 = vld [vmem:[#allocation2 + $0x128] sm:$0xf]
      %v1044 = vld [vmem:[#allocation2 + $0x12c] sm:$0xff]
      %v1045 = vld [vmem:[#allocation2 + $0x134] sm:$0xf]
      %v1046 = vld [vmem:[#allocation2 + $0x138] sm:$0xff]
      %v1047 = vld [vmem:[#allocation2 + $0x140] sm:$0xf]
      %v1048 = vld [vmem:[#allocation2 + $0x144] sm:$0xff]
      %v1049 = vld [vmem:[#allocation2 + $0x14c] sm:$0xf]
      %v1050 = vld [vmem:[#allocation2 + $0x150] sm:$0xff]
      %v1051 = vld [vmem:[#allocation2 + $0x158] sm:$0xf]
      %v1052 = vld [vmem:[#allocation2 + $0x15c] sm:$0xff]
      %v1053 = vld [vmem:[#allocation2 + $0x164] sm:$0xf]
      %v1054 = vld [vmem:[#allocation2 + $0x168] sm:$0xff]
      %v1055 = vld [vmem:[#allocation2 + $0x170] sm:$0xf]
      %v1056 = vld [vmem:[#allocation2 + $0x174] sm:$0xff]
      %v1057 = vld [vmem:[#allocation2 + $0x17c] sm:$0xf]
      %v1058 = vld [vmem:[#allocation2 + $0x180] sm:$0xff]
      %v1059 = vld [vmem:[#allocation2 + $0x188] sm:$0xf]
      %v1060 = vld [vmem:[#allocation2 + $0x18c] sm:$0xff]
      %v1061 = vld [vmem:[#allocation2 + $0x194] sm:$0xf]
      %v1062 = vld [vmem:[#allocation2 + $0x198] sm:$0xff]
      %v1063 = vld [vmem:[#allocation2 + $0x1a0] sm:$0xf]
      %v1064 = vld [vmem:[#allocation2 + $0x1a4] sm:$0xff]
      %v1065 = vld [vmem:[#allocation2 + $0x1ac] sm:$0xf]
      %v1066 = vld [vmem:[#allocation2 + $0x1b0] sm:$0xff]
      %v1067 = vld [vmem:[#allocation2 + $0x1b8] sm:$0xf]
      %v1068 = vld [vmem:[#allocation2 + $0x1bc] sm:$0xff]
      %v1069 = vld [vmem:[#allocation2 + $0x1c4] sm:$0xf]
      %v1070 = vld [vmem:[#allocation2 + $0x1c8] sm:$0xff]
      %v1071 = vld [vmem:[#allocation2 + $0x1d0] sm:$0xf]
      %v1072 = vld [vmem:[#allocation2 + $0x1d4] sm:$0xff]
      %v1073 = vld [vmem:[#allocation2 + $0x1dc] sm:$0xf]
      %v1074 = vld [vmem:[#allocation2 + $0x1e0] sm:$0xff]
      %v1075 = vld [vmem:[#allocation2 + $0x1e8] sm:$0xf]
      %v1076 = vld [vmem:[#allocation2 + $0x1ec] sm:$0xff]
      %v1077 = vld [vmem:[#allocation2 + $0x1f4] sm:$0xf]
      %v1078 = vld [vmem:[#allocation2 + $0x1f8] sm:$0xff]
      %v1079 = vld [vmem:[#allocation2 + $0x200] sm:$0xf]
      %v1080 = vld [vmem:[#allocation2 + $0x204] sm:$0xff]
      %v1081 = vld [vmem:[#allocation2 + $0x20c] sm:$0xf]
      %v1082 = vld [vmem:[#allocation2 + $0x210] sm:$0xff]
      %v1083 = vld [vmem:[#allocation2 + $0x218] sm:$0xf]
      %v1084 = vld [vmem:[#allocation2 + $0x21c] sm:$0xff]
      %v1085 = vld [vmem:[#allocation2 + $0x224] sm:$0xf]
      %v1086 = vld [vmem:[#allocation2 + $0x228] sm:$0xff]
      %v1087 = vld [vmem:[#allocation2 + $0x230] sm:$0xf]
      %v1088 = vld [vmem:[#allocation2 + $0x234] sm:$0xff]
      %v1089 = vld [vmem:[#allocation2 + $0x23c] sm:$0xf]
      %v1090 = vld [vmem:[#allocation2 + $0x240] sm:$0xff]
      %v1091 = vld [vmem:[#allocation2 + $0x248] sm:$0xf]
      %v1092 = vld [vmem:[#allocation2 + $0x24c] sm:$0xff]
      %v1093 = vld [vmem:[#allocation2 + $0x254] sm:$0xf]
      %1095 = vset.pattern.permute.xlu0 0
      %1096 = vperm.xlu0 %1095, %v181
      %v1097 = vpop.permute.xlu0 %1096
      %v1101 = vunpack.c.l.b16 %v177
      %v1102 = vunpack.c.h.b16 %v177
      %v1103 = vunpack.c.l.b16 %v178
      %v1104 = vunpack.c.h.b16 %v178
      %v1105 = vpack.c.b16 %v1101, %v1101
      %v1106 = vpack.c.b16 %v1102, %v1102
      %v1107 = vpack.c.b16 %v1103, %v1103
      %v1108 = vpack.c.b16 %v1104, %v1104
      %v1212 = vunpack.c.l.b16 %v994
      %v1213 = vunpack.c.h.b16 %v994
      %v1214 = vunpack.c.l.b16 %v995
      %v1215 = vunpack.c.l.b16 %v996
      %v1216 = vunpack.c.h.b16 %v996
      %v1217 = vunpack.c.l.b16 %v997
      %v1218 = vunpack.c.l.b16 %v998
      %v1219 = vunpack.c.h.b16 %v998
      %v1220 = vunpack.c.l.b16 %v999
      %v1221 = vunpack.c.l.b16 %v1000
      %v1222 = vunpack.c.h.b16 %v1000
      %v1223 = vunpack.c.l.b16 %v1001
      %v1224 = vunpack.c.l.b16 %v1002
      %v1225 = vunpack.c.h.b16 %v1002
      %v1226 = vunpack.c.l.b16 %v1003
      %v1227 = vunpack.c.l.b16 %v1004
      %v1228 = vunpack.c.h.b16 %v1004
      %v1229 = vunpack.c.l.b16 %v1005
      %v1230 = vunpack.c.l.b16 %v1006
      %v1231 = vunpack.c.h.b16 %v1006
      %v1232 = vunpack.c.l.b16 %v1007
      %v1233 = vunpack.c.l.b16 %v1008
      %v1234 = vunpack.c.h.b16 %v1008
      %v1235 = vunpack.c.l.b16 %v1009
      %v1236 = vunpack.c.l.b16 %v1010
      %v1237 = vunpack.c.h.b16 %v1010
      %v1238 = vunpack.c.l.b16 %v1011
      %v1239 = vunpack.c.l.b16 %v1012
      %v1240 = vunpack.c.h.b16 %v1012
      %v1241 = vunpack.c.l.b16 %v1013
      %v1242 = vunpack.c.l.b16 %v1014
      %v1243 = vunpack.c.h.b16 %v1014
      %v1244 = vunpack.c.l.b16 %v1015
      %v1245 = vunpack.c.l.b16 %v1016
      %v1246 = vunpack.c.h.b16 %v1016
      %v1247 = vunpack.c.l.b16 %v1017
      %v1248 = vunpack.c.l.b16 %v1018
      %v1249 = vunpack.c.h.b16 %v1018
      %v1250 = vunpack.c.l.b16 %v1019
      %v1251 = vunpack.c.l.b16 %v1020
      %v1252 = vunpack.c.h.b16 %v1020
      %v1253 = vunpack.c.l.b16 %v1021
      %v1254 = vunpack.c.l.b16 %v1022
      %v1255 = vunpack.c.h.b16 %v1022
      %v1256 = vunpack.c.l.b16 %v1023
      %v1257 = vunpack.c.l.b16 %v1024
      %v1258 = vunpack.c.h.b16 %v1024
      %v1259 = vunpack.c.l.b16 %v1025
      %v1260 = vunpack.c.l.b16 %v1026
      %v1261 = vunpack.c.h.b16 %v1026
      %v1262 = vunpack.c.l.b16 %v1027
      %v1263 = vunpack.c.l.b16 %v1028
      %v1264 = vunpack.c.h.b16 %v1028
      %v1265 = vunpack.c.l.b16 %v1029
      %v1266 = vunpack.c.l.b16 %v1030
      %v1267 = vunpack.c.h.b16 %v1030
      %v1268 = vunpack.c.l.b16 %v1031
      %v1269 = vunpack.c.l.b16 %v1032
      %v1270 = vunpack.c.h.b16 %v1032
      %v1271 = vunpack.c.l.b16 %v1033
      %v1272 = vunpack.c.l.b16 %v1034
      %v1273 = vunpack.c.h.b16 %v1034
      %v1274 = vunpack.c.l.b16 %v1035
      %v1275 = vunpack.c.l.b16 %v1036
      %v1276 = vunpack.c.h.b16 %v1036
      %v1277 = vunpack.c.l.b16 %v1037
      %v1278 = vunpack.c.l.b16 %v1038
      %v1279 = vunpack.c.h.b16 %v1038
      %v1280 = vunpack.c.l.b16 %v1039
      %v1281 = vunpack.c.l.b16 %v1040
      %v1282 = vunpack.c.h.b16 %v1040
      %v1283 = vunpack.c.l.b16 %v1041
      %v1284 = vunpack.c.l.b16 %v1042
      %v1285 = vunpack.c.h.b16 %v1042
      %v1286 = vunpack.c.l.b16 %v1043
      %v1287 = vunpack.c.l.b16 %v1044
      %v1288 = vunpack.c.h.b16 %v1044
      %v1289 = vunpack.c.l.b16 %v1045
      %v1290 = vunpack.c.l.b16 %v1046
      %v1291 = vunpack.c.h.b16 %v1046
      %v1292 = vunpack.c.l.b16 %v1047
      %v1293 = vunpack.c.l.b16 %v1048
      %v1294 = vunpack.c.h.b16 %v1048
      %v1295 = vunpack.c.l.b16 %v1049
      %v1296 = vunpack.c.l.b16 %v1050
      %v1297 = vunpack.c.h.b16 %v1050
      %v1298 = vunpack.c.l.b16 %v1051
      %v1299 = vunpack.c.l.b16 %v1052
      %v1300 = vunpack.c.h.b16 %v1052
      %v1301 = vunpack.c.l.b16 %v1053
      %v1302 = vunpack.c.l.b16 %v1054
      %v1303 = vunpack.c.h.b16 %v1054
      %v1304 = vunpack.c.l.b16 %v1055
      %v1305 = vunpack.c.l.b16 %v1056
      %v1306 = vunpack.c.h.b16 %v1056
      %v1307 = vunpack.c.l.b16 %v1057
      %v1308 = vunpack.c.l.b16 %v1058
      %v1309 = vunpack.c.h.b16 %v1058
      %v1310 = vunpack.c.l.b16 %v1059
      %v1311 = vunpack.c.l.b16 %v1060
      %v1312 = vunpack.c.h.b16 %v1060
      %v1313 = vunpack.c.l.b16 %v1061
      %v1314 = vunpack.c.l.b16 %v1062
      %v1315 = vunpack.c.h.b16 %v1062
      %v1316 = vunpack.c.l.b16 %v1063
      %v1317 = vunpack.c.l.b16 %v1064
      %v1318 = vunpack.c.h.b16 %v1064
      %v1319 = vunpack.c.l.b16 %v1065
      %v1320 = vunpack.c.l.b16 %v1066
      %v1321 = vunpack.c.h.b16 %v1066
      %v1322 = vunpack.c.l.b16 %v1067
      %v1323 = vunpack.c.l.b16 %v1068
      %v1324 = vunpack.c.h.b16 %v1068
      %v1325 = vunpack.c.l.b16 %v1069
      %v1326 = vunpack.c.l.b16 %v1070
      %v1327 = vunpack.c.h.b16 %v1070
      %v1328 = vunpack.c.l.b16 %v1071
      %v1329 = vunpack.c.l.b16 %v1072
      %v1330 = vunpack.c.h.b16 %v1072
      %v1331 = vunpack.c.l.b16 %v1073
      %v1332 = vunpack.c.l.b16 %v1074
      %v1333 = vunpack.c.h.b16 %v1074
      %v1334 = vunpack.c.l.b16 %v1075
      %v1335 = vunpack.c.l.b16 %v1076
      %v1336 = vunpack.c.h.b16 %v1076
      %v1337 = vunpack.c.l.b16 %v1077
      %v1338 = vunpack.c.l.b16 %v1078
      %v1339 = vunpack.c.h.b16 %v1078
      %v1340 = vunpack.c.l.b16 %v1079
      %v1341 = vunpack.c.l.b16 %v1080
      %v1342 = vunpack.c.h.b16 %v1080
      %v1343 = vunpack.c.l.b16 %v1081
      %v1344 = vunpack.c.l.b16 %v1082
      %v1345 = vunpack.c.h.b16 %v1082
      %v1346 = vunpack.c.l.b16 %v1083
      %v1347 = vunpack.c.l.b16 %v1084
      %v1348 = vunpack.c.h.b16 %v1084
      %v1349 = vunpack.c.l.b16 %v1085
      %v1350 = vunpack.c.l.b16 %v1086
      %v1351 = vunpack.c.h.b16 %v1086
      %v1352 = vunpack.c.l.b16 %v1087
      %v1353 = vunpack.c.l.b16 %v1088
      %v1354 = vunpack.c.h.b16 %v1088
      %v1355 = vunpack.c.l.b16 %v1089
      %v1356 = vunpack.c.l.b16 %v1090
      %v1357 = vunpack.c.h.b16 %v1090
      %v1358 = vunpack.c.l.b16 %v1091
      %v1359 = vunpack.c.l.b16 %v1092
      %v1360 = vunpack.c.h.b16 %v1092
      %v1361 = vunpack.c.l.b16 %v1093
      %v1362 = vpack.c.b16 %v1215, %v1212
      %v1363 = vpack.c.b16 %v1216, %v1213
      %v1364 = vpack.c.b16 %v1217, %v1214
      %v1365 = vpack.c.b16 %v1221, %v1218
      %v1366 = vpack.c.b16 %v1222, %v1219
      %v1367 = vpack.c.b16 %v1223, %v1220
      %v1368 = vpack.c.b16 %v1227, %v1224
      %v1369 = vpack.c.b16 %v1228, %v1225
      %v1370 = vpack.c.b16 %v1229, %v1226
      %v1371 = vpack.c.b16 %v1233, %v1230
      %v1372 = vpack.c.b16 %v1234, %v1231
      %v1373 = vpack.c.b16 %v1235, %v1232
      %v1374 = vpack.c.b16 %v1239, %v1236
      %v1375 = vpack.c.b16 %v1240, %v1237
      %v1376 = vpack.c.b16 %v1241, %v1238
      %v1377 = vpack.c.b16 %v1245, %v1242
      %v1378 = vpack.c.b16 %v1246, %v1243
      %v1379 = vpack.c.b16 %v1247, %v1244
      %v1380 = vpack.c.b16 %v1251, %v1248
      %v1381 = vpack.c.b16 %v1252, %v1249
      %v1382 = vpack.c.b16 %v1253, %v1250
      %v1383 = vpack.c.b16 %v1257, %v1254
      %v1384 = vpack.c.b16 %v1258, %v1255
      %v1385 = vpack.c.b16 %v1259, %v1256
      %v1386 = vpack.c.b16 %v1263, %v1260
      %v1387 = vpack.c.b16 %v1264, %v1261
      %v1388 = vpack.c.b16 %v1265, %v1262
      %v1389 = vpack.c.b16 %v1269, %v1266
      %v1390 = vpack.c.b16 %v1270, %v1267
      %v1391 = vpack.c.b16 %v1271, %v1268
      %v1392 = vpack.c.b16 %v1275, %v1272
      %v1393 = vpack.c.b16 %v1276, %v1273
      %v1394 = vpack.c.b16 %v1277, %v1274
      %v1395 = vpack.c.b16 %v1281, %v1278
      %v1396 = vpack.c.b16 %v1282, %v1279
      %v1397 = vpack.c.b16 %v1283, %v1280
      %v1398 = vpack.c.b16 %v1287, %v1284
      %v1399 = vpack.c.b16 %v1288, %v1285
      %v1400 = vpack.c.b16 %v1289, %v1286
      %v1401 = vpack.c.b16 %v1293, %v1290
      %v1402 = vpack.c.b16 %v1294, %v1291
      %v1403 = vpack.c.b16 %v1295, %v1292
      %v1404 = vpack.c.b16 %v1299, %v1296
      %v1405 = vpack.c.b16 %v1300, %v1297
      %v1406 = vpack.c.b16 %v1301, %v1298
      %v1407 = vpack.c.b16 %v1305, %v1302
      %v1408 = vpack.c.b16 %v1306, %v1303
      %v1409 = vpack.c.b16 %v1307, %v1304
      %v1410 = vpack.c.b16 %v1311, %v1308
      %v1411 = vpack.c.b16 %v1312, %v1309
      %v1412 = vpack.c.b16 %v1313, %v1310
      %v1413 = vpack.c.b16 %v1317, %v1314
      %v1414 = vpack.c.b16 %v1318, %v1315
      %v1415 = vpack.c.b16 %v1319, %v1316
      %v1416 = vpack.c.b16 %v1323, %v1320
      %v1417 = vpack.c.b16 %v1324, %v1321
      %v1418 = vpack.c.b16 %v1325, %v1322
      %v1419 = vpack.c.b16 %v1329, %v1326
      %v1420 = vpack.c.b16 %v1330, %v1327
      %v1421 = vpack.c.b16 %v1331, %v1328
      %v1422 = vpack.c.b16 %v1335, %v1332
      %v1423 = vpack.c.b16 %v1336, %v1333
      %v1424 = vpack.c.b16 %v1337, %v1334
      %v1425 = vpack.c.b16 %v1341, %v1338
      %v1426 = vpack.c.b16 %v1342, %v1339
      %v1427 = vpack.c.b16 %v1343, %v1340
      %v1428 = vpack.c.b16 %v1347, %v1344
      %v1429 = vpack.c.b16 %v1348, %v1345
      %v1430 = vpack.c.b16 %v1349, %v1346
      %v1431 = vpack.c.b16 %v1353, %v1350
      %v1432 = vpack.c.b16 %v1354, %v1351
      %v1433 = vpack.c.b16 %v1355, %v1352
      %v1434 = vpack.c.b16 %v1359, %v1356
      %v1435 = vpack.c.b16 %v1360, %v1357
      %v1436 = vpack.c.b16 %v1361, %v1358
      %vm1512 = vcmask 130048
      %v1514 = vsel %vm1512, %v1108, 0
      %1516 = vmatpush.bf16.msra.mxu0 %v1383
      %1517 = vmatpush.bf16.msra.mxu0 %v1380
      %1518 = vmatpush.bf16.msra.mxu0 %v1377
      %1519 = vmatpush.bf16.msra.mxu0 %v1374
      %1520 = vmatpush.bf16.msra.mxu0 %v1371
      %1521 = vmatpush.bf16.msra.mxu0 %v1368
      %1522 = vmatpush.bf16.msra.mxu0 %v1365
      %1523 = vmatpush.bf16.msra.mxu0 %v1362
      %1524 = vmatmul.bf16.gmra.mxu0 %v1105
      %v1525 = vpop.f32.mrf.mxu0
      %v1526 = vadd.f32 %v1097, %v1525
      %v1527 = vpop.f32.mrf.mxu0
      %1528 = vdwg.mxu0
      %1529 = vmatpush.bf16.msra.mxu0 %v1407
      %1530 = vmatpush.bf16.msra.mxu0 %v1404
      %1531 = vmatpush.bf16.msra.mxu0 %v1401
      %1532 = vmatpush.bf16.msra.mxu0 %v1398
      %1533 = vmatpush.bf16.msra.mxu0 %v1395
      %1534 = vmatpush.bf16.msra.mxu0 %v1392
      %1535 = vmatpush.bf16.msra.mxu0 %v1389
      %1536 = vmatpush.bf16.msra.mxu0 %v1386
      %1537 = vmatmul.bf16.gmra.mxu0 %v1106
      %v1538 = vpop.f32.mrf.mxu0
      %v1539 = vadd.f32 %v1526, %v1538
      %v1540 = vpop.f32.mrf.mxu0
      %1541 = vdwg.mxu0
      %1542 = vmatpush.bf16.msra.mxu0 %v1431
      %1543 = vmatpush.bf16.msra.mxu0 %v1428
      %1544 = vmatpush.bf16.msra.mxu0 %v1425
      %1545 = vmatpush.bf16.msra.mxu0 %v1422
      %1546 = vmatpush.bf16.msra.mxu0 %v1419
      %1547 = vmatpush.bf16.msra.mxu0 %v1416
      %1548 = vmatpush.bf16.msra.mxu0 %v1413
      %1549 = vmatpush.bf16.msra.mxu0 %v1410
      %1550 = vmatmul.bf16.gmra.mxu0 %v1107
      %v1551 = vpop.f32.mrf.mxu0
      %v1552 = vadd.f32 %v1539, %v1551
      %v1553 = vpop.f32.mrf.mxu0
      %1554 = vdwg.mxu0
      %1555 = vmatpush.bf16.msra.mxu0 0
      %1556 = vmatpush.bf16.msra.mxu0 0
      %1557 = vmatpush.bf16.msra.mxu0 0
      %1558 = vmatpush.bf16.msra.mxu0 0
      %1559 = vmatpush.bf16.msra.mxu0 0
      %1560 = vmatpush.bf16.msra.mxu0 0
      %1561 = vmatpush.bf16.msra.mxu0 0
      %1562 = vmatpush.bf16.msra.mxu0 %v1434
      %1563 = vmatmul.bf16.gmra.mxu0 %v1514
      %v1564 = vpop.f32.mrf.mxu0
      %v1565 = vadd.f32 %v1552, %v1564
      %v1566 = vpop.f32.mrf.mxu0
      %1567 = vdwg.mxu0
      %1568 = vmatpush.bf16.msra.mxu0 %v1384
      %1569 = vmatpush.bf16.msra.mxu0 %v1381
      %1570 = vmatpush.bf16.msra.mxu0 %v1378
      %1571 = vmatpush.bf16.msra.mxu0 %v1375
      %1572 = vmatpush.bf16.msra.mxu0 %v1372
      %1573 = vmatpush.bf16.msra.mxu0 %v1369
      %1574 = vmatpush.bf16.msra.mxu0 %v1366
      %1575 = vmatpush.bf16.msra.mxu0 %v1363
      %1576 = vmatmul.bf16.gmra.mxu0 %v1105
      %v1577 = vpop.f32.mrf.mxu0
      %v1578 = vadd.f32 %v1097, %v1577
      %v1579 = vpop.f32.mrf.mxu0
      %1580 = vdwg.mxu0
      %1581 = vmatpush.bf16.msra.mxu0 %v1408
      %1582 = vmatpush.bf16.msra.mxu0 %v1405
      %1583 = vmatpush.bf16.msra.mxu0 %v1402
      %1584 = vmatpush.bf16.msra.mxu0 %v1399
      %1585 = vmatpush.bf16.msra.mxu0 %v1396
      %1586 = vmatpush.bf16.msra.mxu0 %v1393
      %1587 = vmatpush.bf16.msra.mxu0 %v1390
      %1588 = vmatpush.bf16.msra.mxu0 %v1387
      %1589 = vmatmul.bf16.gmra.mxu0 %v1106
      %v1590 = vpop.f32.mrf.mxu0
      %v1591 = vadd.f32 %v1578, %v1590
      %v1592 = vpop.f32.mrf.mxu0
      %1593 = vdwg.mxu0
      %1594 = vmatpush.bf16.msra.mxu0 %v1432
      %1595 = vmatpush.bf16.msra.mxu0 %v1429
      %1596 = vmatpush.bf16.msra.mxu0 %v1426
      %1597 = vmatpush.bf16.msra.mxu0 %v1423
      %1598 = vmatpush.bf16.msra.mxu0 %v1420
      %1599 = vmatpush.bf16.msra.mxu0 %v1417
      %1600 = vmatpush.bf16.msra.mxu0 %v1414
      %1601 = vmatpush.bf16.msra.mxu0 %v1411
      %1602 = vmatmul.bf16.gmra.mxu0 %v1107
      %v1603 = vpop.f32.mrf.mxu0
      %v1604 = vadd.f32 %v1591, %v1603
      %v1605 = vpop.f32.mrf.mxu0
      %1606 = vdwg.mxu0
      %1607 = vmatpush.bf16.msra.mxu0 0
      %1608 = vmatpush.bf16.msra.mxu0 0
      %1609 = vmatpush.bf16.msra.mxu0 0
      %1610 = vmatpush.bf16.msra.mxu0 0
      %1611 = vmatpush.bf16.msra.mxu0 0
      %1612 = vmatpush.bf16.msra.mxu0 0
      %1613 = vmatpush.bf16.msra.mxu0 0
      %1614 = vmatpush.bf16.msra.mxu0 %v1435
      %1615 = vmatmul.bf16.gmra.mxu0 %v1514
      %v1616 = vpop.f32.mrf.mxu0
      %v1617 = vadd.f32 %v1604, %v1616
      %v1618 = vpop.f32.mrf.mxu0
      %1619 = vdwg.mxu0
      %1620 = vmatpush.bf16.msra.mxu0 %v1385
      %1621 = vmatpush.bf16.msra.mxu0 %v1382
      %1622 = vmatpush.bf16.msra.mxu0 %v1379
      %1623 = vmatpush.bf16.msra.mxu0 %v1376
      %1624 = vmatpush.bf16.msra.mxu0 %v1373
      %1625 = vmatpush.bf16.msra.mxu0 %v1370
      %1626 = vmatpush.bf16.msra.mxu0 %v1367
      %1627 = vmatpush.bf16.msra.mxu0 %v1364
      %1628 = vmatmul.bf16.gmra.mxu0 %v1105
      %v1629 = vpop.f32.mrf.mxu0
      %v1630 = vadd.f32 %v1097, %v1629
      %v1631 = vpop.f32.mrf.mxu0
      %1632 = vdwg.mxu0
      %1633 = vmatpush.bf16.msra.mxu0 %v1409
      %1634 = vmatpush.bf16.msra.mxu0 %v1406
      %1635 = vmatpush.bf16.msra.mxu0 %v1403
      %1636 = vmatpush.bf16.msra.mxu0 %v1400
      %1637 = vmatpush.bf16.msra.mxu0 %v1397
      %1638 = vmatpush.bf16.msra.mxu0 %v1394
      %1639 = vmatpush.bf16.msra.mxu0 %v1391
      %1640 = vmatpush.bf16.msra.mxu0 %v1388
      %1641 = vmatmul.bf16.gmra.mxu0 %v1106
      %v1642 = vpop.f32.mrf.mxu0
      %v1643 = vadd.f32 %v1630, %v1642
      %v1644 = vpop.f32.mrf.mxu0
      %1645 = vdwg.mxu0
      %1646 = vmatpush.bf16.msra.mxu0 %v1433
      %1647 = vmatpush.bf16.msra.mxu0 %v1430
      %1648 = vmatpush.bf16.msra.mxu0 %v1427
      %1649 = vmatpush.bf16.msra.mxu0 %v1424
      %1650 = vmatpush.bf16.msra.mxu0 %v1421
      %1651 = vmatpush.bf16.msra.mxu0 %v1418
      %1652 = vmatpush.bf16.msra.mxu0 %v1415
      %1653 = vmatpush.bf16.msra.mxu0 %v1412
      %1654 = vmatmul.bf16.gmra.mxu0 %v1107
      %v1655 = vpop.f32.mrf.mxu0
      %v1656 = vadd.f32 %v1643, %v1655
      %v1657 = vpop.f32.mrf.mxu0
      %1658 = vdwg.mxu0
      %1659 = vmatpush.bf16.msra.mxu0 0
      %1660 = vmatpush.bf16.msra.mxu0 0
      %1661 = vmatpush.bf16.msra.mxu0 0
      %1662 = vmatpush.bf16.msra.mxu0 0
      %1663 = vmatpush.bf16.msra.mxu0 0
      %1664 = vmatpush.bf16.msra.mxu0 0
      %1665 = vmatpush.bf16.msra.mxu0 0
      %1666 = vmatpush.bf16.msra.mxu0 %v1436
      %1667 = vmatmul.bf16.gmra.mxu0 %v1514
      %v1668 = vpop.f32.mrf.mxu0
      %v1669 = vadd.f32 %v1656, %v1668
      %v1670 = vpop.f32.mrf.mxu0
      %1671 = vdwg.mxu0
      %v1672 = vmax.f32 %v1565, 0.0
      %v1673 = vmax.f32 %v1617, 0.0
      %v1674 = vmax.f32 %v1669, 0.0
      %v1675 = vpack.c.bf16 %v1673, %v1672
      %v1676 = vpack.c.bf16 %v1674, %v1674
      %1677 = vst [vmem:[%s170] sm:$0xff] %v1675
      %1678 = vst.msk [vmem:[%s170 + $0x8] sm:$0xf] %vm187, %v1676
      %p1679 = scmp.lt.s32.totalorder %s14, 9
      %s1680 = scalar_select %p1679, %s14, 9
      %s1681 = smul.addr %s1680, 3
      %s1682 = smul.addr %s1681, 4
      %s1683 = scalar_lea.vmem %s3, %s1682
      // Predicated region
      $region33: #{samoe_forward.4} parent=31 // pred_check
        %p1684 = pneg %p100
      $region34: #{samoe_forward.4} parent=31 // pred_check_branch
        %1686 = sbr.rel (%p1684) target = $region36
      $region35: #{samoe_forward.4} parent=31 // pred_region
        _
      $region36: #{samoe_forward.4} parent=31 // pred_fallthru
        _
    $region32: #{samoe_forward.4} parent=5 // pred_fallthru
      _
    %p1687 = scmp.le.s32.totalorder 2, %s9
    // Predicated region
    $region37: #{samoe_forward.4} parent=5 // pred_check
      %p1688 = pneg %p1687
    $region38: #{samoe_forward.4} parent=5 // pred_check_branch
      %1690 = sbr.rel (%p1688) target = $region40
    $region39: #{samoe_forward.4} parent=5 // pred_region
      %s1691 = ssub.s32 %s9, 2
      // Predicated region
      $region41: #{samoe_forward.4} parent=39 // pred_check
        %p1692 = pneg %p106
      $region42: #{samoe_forward.4} parent=39 // pred_check_branch
        %1694 = sbr.rel (%p1692) target = $region44
      $region43: #{samoe_forward.4} parent=39 // pred_region
        %p1695 = scmp.lt.s32.totalorder %s15, 9
        %s1696 = scalar_select %p1695, %s15, 9
        %s1697 = smul.addr %s1696, 3
        %s1698 = smul.addr %s1697, 4
        %s1699 = scalar_lea.vmem %s3, %s1698
      $region44: #{samoe_forward.4} parent=39 // pred_fallthru
        _
    $region40: #{samoe_forward.4} parent=5 // pred_fallthru
      _
  $region6: #{samoe_forward.4} parent=0 // loop_footer
    %s13 = sadd.s32 1, %s9
  $region7: #{samoe_forward.4} parent=0 // loop_footer_branch
    %8 = sbr.rel target = $region3
  $region8: #{samoe_forward.4} parent=0 // loop_exit
    _

// kernel: samoe_forward.5
$region0: #{samoe_forward.5}
  #allocation0 [shape = 'u32[]', space=smem, size = 0x4, offset = 0x4, fixed_abs, tag = 'smem constant byte address 0x4 - core index']
  #allocation1 [shape = 'u32[72,128]{1,0:T(1,128)}', space=vmem, size = 0x9000, scoped, tag = 'internal scratch']
  #allocation2 [shape = 'bf16[144,80]{1,0:T(8,128)(2,1)}', space=vmem, size = 0x9000, scoped, tag = 'scratch operand']
  %s0 = inlined_call_operand.vmem [shape: bf16[10,16,102], index: 0, kind: input, shape index: {}]
  %s1 = inlined_call_operand.vmem [shape: bf16[2,16,144], index: 1, kind: input, shape index: {}]
  %s2 = inlined_call_operand.vmem [shape: f32[2,16,1], index: 2, kind: input, shape index: {}]
  %s3 = inlined_call_operand.vmem [shape: bf16[10,16,80], index: 3, kind: output, shape index: {}]
  %s4 = sld [smem:[#allocation0]]
  $region45: #{samoe_forward.5} parent=0
    _
  %s6 = ssub.s32 1, %s4
  %s7 = scalar_select 0, %s6, %s4
  loop: start=0, step=1, limit=12
  $region2: #{samoe_forward.5} parent=0 // loop_pre_header
    _
  $region3: #{samoe_forward.5} parent=0 // loop_header
    %s9 = sphi 0, %s13
    %p10 = scmp.ge.s32.totalorder %s9, 12
    %s19 = sphi 0, %s21
    %s22 = sphi 0, %s19
    %s23 = sphi 0, %s22
    %s39 = sphi 0, %s23
    %s43 = sphi 0, %s43
    %s45 = sphi 0, %s43
    %s46 = sphi 0, %s45
    %s60 = sphi 0, %s46
    %s64 = sphi 0, %s64
    %s66 = sphi 0, %s64
    %s67 = sphi 0, %s66
    %s81 = sphi 0, %s67
    %s87 = sphi 0, %s89
    %s90 = sphi 0, %s87
    %s91 = sphi 0, %s90
    %s107 = sphi 0, %s91
  $region4: #{samoe_forward.5} parent=0 // loop_header_branch
    %12 = sbr.rel (%p10) target = $region8
  $region5: #{samoe_forward.5} parent=0 // loop_body
    %s14 = ssub.s32 %s9, 1
    %s15 = ssub.s32 %s9, 2
    %s16 = sadd.s32 %s9, 1
    %s17 = ssub.s32 %s9, %s16
    %p18 = scmp.eq.s32.totalorder %s17, 0
    %s20 = sadd.s32 %s19, 1
    %s21 = scalar_select %p18, %s19, %s20
    %p24 = pneg %p18
    %p25 = scmp.eq.s32.totalorder %s9, 9
    %p26 = por %p24, %p25
    %p27 = scmp.ne.s32.totalorder %s19, %s22
    %p28 = scmp.eq.s32.totalorder %s9, 0
    %p29 = por %p27, %p28
    %p30 = scmp.ne.s32.totalorder %s19, %s22
    %p31 = scmp.eq.s32.totalorder %s14, 9
    %p32 = por %p30, %p31
    %p33 = scmp.ne.s32.totalorder %s22, %s23
    %p34 = scmp.eq.s32.totalorder %s14, 0
    %p35 = por %p33, %p34
    %p36 = scmp.ne.s32.totalorder %s22, %s23
    %p37 = scmp.eq.s32.totalorder %s15, 9
    %p38 = por %p36, %p37
    %p40 = scmp.ne.s32.totalorder %s23, %s39
    %p41 = scmp.eq.s32.totalorder %s15, 0
    %p42 = por %p40, %p41
    %s44 = sadd.s32 %s43, 1
    %p47 = scmp.eq.s32.totalorder %s9, 9
    %p48 = scmp.ne.s32.totalorder %s43, %s45
    %p49 = scmp.eq.s32.totalorder %s9, 0
    %p50 = por %p48, %p49
    %p51 = scmp.ne.s32.totalorder %s43, %s45
    %p52 = scmp.eq.s32.totalorder %s14, 9
    %p53 = por %p51, %p52
    %p54 = scmp.ne.s32.totalorder %s45, %s46
    %p55 = scmp.eq.s32.totalorder %s14, 0
    %p56 = por %p54, %p55
    %p57 = scmp.ne.s32.totalorder %s45, %s46
    %p58 = scmp.eq.s32.totalorder %s15, 9
    %p59 = por %p57, %p58
    %p61 = scmp.ne.s32.totalorder %s46, %s60
    %p62 = scmp.eq.s32.totalorder %s15, 0
    %p63 = por %p61, %p62
    %s65 = sadd.s32 %s64, 1
    %p68 = scmp.eq.s32.totalorder %s9, 9
    %p69 = scmp.ne.s32.totalorder %s64, %s66
    %p70 = scmp.eq.s32.totalorder %s9, 0
    %p71 = por %p69, %p70
    %p72 = scmp.ne.s32.totalorder %s64, %s66
    %p73 = scmp.eq.s32.totalorder %s14, 9
    %p74 = por %p72, %p73
    %p75 = scmp.ne.s32.totalorder %s66, %s67
    %p76 = scmp.eq.s32.totalorder %s14, 0
    %p77 = por %p75, %p76
    %p78 = scmp.ne.s32.totalorder %s66, %s67
    %p79 = scmp.eq.s32.totalorder %s15, 9
    %p80 = por %p78, %p79
    %p82 = scmp.ne.s32.totalorder %s67, %s81
    %p83 = scmp.eq.s32.totalorder %s15, 0
    %p84 = por %p82, %p83
    %s85 = ssub.s32 %s9, %s16
    %p86 = scmp.eq.s32.totalorder %s85, 0
    %s88 = sadd.s32 %s87, 1
    %s89 = scalar_select %p86, %s87, %s88
    %p92 = pneg %p86
    %p93 = scmp.eq.s32.totalorder %s9, 9
    %p94 = por %p92, %p93
    %p95 = scmp.ne.s32.totalorder %s87, %s90
    %p96 = scmp.eq.s32.totalorder %s9, 0
    %p97 = por %p95, %p96
    %p98 = scmp.ne.s32.totalorder %s87, %s90
    %p99 = scmp.eq.s32.totalorder %s14, 9
    %p100 = por %p98, %p99
    %p101 = scmp.ne.s32.totalorder %s90, %s91
    %p102 = scmp.eq.s32.totalorder %s14, 0
    %p103 = por %p101, %p102
    %p104 = scmp.ne.s32.totalorder %s90, %s91
    %p105 = scmp.eq.s32.totalorder %s15, 9
    %p106 = por %p104, %p105
    %p108 = scmp.ne.s32.totalorder %s91, %s107
    %p109 = scmp.eq.s32.totalorder %s15, 0
    %p110 = por %p108, %p109
    %p111 = scmp.le.s32.totalorder 1, %s9
    %p112 = scmp.lt.s32.totalorder %s9, 11
    %p113 = pnand %p111, %p112
    %p114 = pneg %p113
    // Predicated region
    $region9: #{samoe_forward.5} parent=5 // pred_check
      _
    $region10: #{samoe_forward.5} parent=5 // pred_check_branch
      %116 = sbr.rel (%p113) target = $region12
    $region11: #{samoe_forward.5} parent=5 // pred_region
      %s117 = ssub.s32 %s9, 1
      // Predicated region
      $region13: #{samoe_forward.5} parent=11 // pred_check
        %p118 = pneg %p56
      $region14: #{samoe_forward.5} parent=11 // pred_check_branch
        %120 = sbr.rel (%p118) target = $region16
      $region15: #{samoe_forward.5} parent=11 // pred_region
        _
      $region16: #{samoe_forward.5} parent=11 // pred_fallthru
        _
      // Predicated region
      $region17: #{samoe_forward.5} parent=11 // pred_check
        %p121 = pneg %p77
      $region18: #{samoe_forward.5} parent=11 // pred_check_branch
        %123 = sbr.rel (%p121) target = $region20
      $region19: #{samoe_forward.5} parent=11 // pred_region
        _
      $region20: #{samoe_forward.5} parent=11 // pred_fallthru
        _
    $region12: #{samoe_forward.5} parent=5 // pred_fallthru
      _
    %p124 = scmp.lt.s32.totalorder %s9, 10
    // Predicated region
    $region21: #{samoe_forward.5} parent=5 // pred_check
      %p125 = pneg %p124
    $region22: #{samoe_forward.5} parent=5 // pred_check_branch
      %127 = sbr.rel (%p125) target = $region24
    $region23: #{samoe_forward.5} parent=5 // pred_region
      // Predicated region
      $region25: #{samoe_forward.5} parent=23 // pred_check
        %p128 = pneg %p29
      $region26: #{samoe_forward.5} parent=23 // pred_check_branch
        %130 = sbr.rel (%p128) target = $region28
      $region27: #{samoe_forward.5} parent=23 // pred_region
        %p131 = scmp.lt.s32.totalorder %s9, 9
        %s132 = scalar_select %p131, %s9, 9
        %s133 = smul.addr %s132, 2
        %s134 = smul.addr %s133, 4
        %s135 = scalar_lea.vmem %s0, %s134
      $region28: #{samoe_forward.5} parent=23 // pred_fallthru
        _
    $region24: #{samoe_forward.5} parent=5 // pred_fallthru
      _
    %p136 = scmp.le.s32.totalorder 1, %s9
    %p137 = scmp.lt.s32.totalorder %s9, 11
    %p138 = pnand %p136, %p137
    %p139 = pneg %p138
    // Predicated region
    $region29: #{samoe_forward.5} parent=5 // pred_check
      _
    $region30: #{samoe_forward.5} parent=5 // pred_check_branch
      %141 = sbr.rel (%p138) target = $region32
    $region31: #{samoe_forward.5} parent=5 // pred_region
      %s142 = ssub.s32 %s9, 1
      %p143 = scmp.lt.s32.totalorder %s14, 9
      %s144 = scalar_select %p143, %s14, 9
      %s145 = smul.addr %s144, 2
      %s146 = smul.addr %s145, 4
      %s147 = scalar_lea.vmem %s0, %s146
      %p148 = pneg %p35
      %p149 = pneg %p32
      %p150 = pneg %p56
      %p151 = pneg %p53
      %p152 = pneg %p77
      %p153 = pneg %p74
      %p154 = pneg %p103
      %p155 = pneg %p100
      %p156 = scmp.lt.s32.totalorder %s14, 9
      %s157 = scalar_select %p156, %s14, 9
      %s158 = smul.addr %s157, 2
      %s159 = smul.addr %s158, 4
      %s160 = scalar_lea.vmem %s3, %s159
      %p161 = scmp.lt.s32.totalorder %s14, 9
      %s162 = scalar_select %p161, %s14, 9
      %s163 = smul.addr %s162, 2
      %s164 = smul.addr %s163, 4
      %s165 = scalar_lea.vmem %s0, %s164
      %p166 = scmp.lt.s32.totalorder %s14, 9
      %s167 = scalar_select %p166, %s14, 9
      %s168 = smul.addr %s167, 2
      %s169 = smul.addr %s168, 4
      %s170 = scalar_lea.vmem %s3, %s169
      %p172 = scmp.ge.s32.totalorder %s14, 8
      %s173 = scalar_select %p172, 1, 0
      %s174 = smul.u32 %s173, 4
      %s175 = smul.addr %s174, 4
      %s176 = scalar_lea.vmem %s1, %s175
      %v177 = vld [vmem:[%s176] sm:$0xff]
      %v178 = vld [vmem:[%s176 + $0x8] sm:$0xff]
      %s179 = smul.u32 %s173, 16
      %s180 = scalar_lea.vmem %s2, %s179
      %v181 = vld [vmem:[%s180] sm:$0xff]
      %v182 = vld [vmem:[%s180 + $0x8] sm:$0xff]
      %v183 = vld [vmem:[%s165] sm:$0xf]
      %v184 = vld [vmem:[%s165 + $0x4] sm:$0xf]
      %vm185 = vcmask 650240
      %186 = vst.msk [vmem:[#allocation2] sm:$0xf] %vm185, %v183
      %187 = vst.msk [vmem:[#allocation2 + $0x4] sm:$0xf] %vm185, %v184
      %v188 = vld [vmem:[%s165] sm:$0xf]
      %v189 = vld [vmem:[%s165 + $0x4] sm:$0xf]
      %192 = vrot.lane.b32.xlu0 %v188, 127
      %v193 = vpop.permute.xlu0 %192
      %194 = vrot.lane.b32.xlu0 %v189, 127
      %v195 = vpop.permute.xlu0 %194
      %198 = vst.msk [vmem:[#allocation2 + $0x8] sm:$0xf] %vm185, %v193
      %199 = vst.msk [vmem:[#allocation2 + $0xc] sm:$0xf] %vm185, %v195
      %v200 = vld [vmem:[%s165] sm:$0xf]
      %v201 = vld [vmem:[%s165 + $0x4] sm:$0xf]
      %204 = vrot.lane.b32.xlu0 %v200, 126
      %v205 = vpop.permute.xlu0 %204
      %206 = vrot.lane.b32.xlu0 %v201, 126
      %v207 = vpop.permute.xlu0 %206
      %210 = vst.msk [vmem:[#allocation2 + $0x10] sm:$0xf] %vm185, %v205
      %211 = vst.msk [vmem:[#allocation2 + $0x14] sm:$0xf] %vm185, %v207
      %v212 = vld [vmem:[%s165] sm:$0xf]
      %v213 = vld [vmem:[%s165 + $0x4] sm:$0xf]
      %216 = vrot.lane.b32.xlu0 %v212, 118
      %v217 = vpop.permute.xlu0 %216
      %218 = vrot.lane.b32.xlu0 %v213, 118
      %v219 = vpop.permute.xlu0 %218
      %222 = vst.msk [vmem:[#allocation2 + $0x18] sm:$0xf] %vm185, %v217
      %223 = vst.msk [vmem:[#allocation2 + $0x1c] sm:$0xf] %vm185, %v219
      %v224 = vld [vmem:[%s165] sm:$0xf]
      %v225 = vld [vmem:[%s165 + $0x4] sm:$0xf]
      %228 = vrot.lane.b32.xlu0 %v224, 117
      %v229 = vpop.permute.xlu0 %228
      %230 = vrot.lane.b32.xlu0 %v225, 117
      %v231 = vpop.permute.xlu0 %230
      %234 = vst.msk [vmem:[#allocation2 + $0x20] sm:$0xf] %vm185, %v229
      %235 = vst.msk [vmem:[#allocation2 + $0x24] sm:$0xf] %vm185, %v231
      %v236 = vld [vmem:[%s165] sm:$0xf]
      %v237 = vld [vmem:[%s165 + $0x4] sm:$0xf]
      %240 = vrot.lane.b32.xlu0 %v236, 116
      %v241 = vpop.permute.xlu0 %240
      %242 = vrot.lane.b32.xlu0 %v237, 116
      %v243 = vpop.permute.xlu0 %242
      %246 = vst.msk [vmem:[#allocation2 + $0x28] sm:$0xf] %vm185, %v241
      %247 = vst.msk [vmem:[#allocation2 + $0x2c] sm:$0xf] %vm185, %v243
      %v248 = vld [vmem:[%s165] sm:$0xf]
      %v249 = vld [vmem:[%s165 + $0x4] sm:$0xf]
      %252 = vrot.lane.b32.xlu0 %v248, 108
      %v253 = vpop.permute.xlu0 %252
      %254 = vrot.lane.b32.xlu0 %v249, 108
      %v255 = vpop.permute.xlu0 %254
      %258 = vst.msk [vmem:[#allocation2 + $0x30] sm:$0xf] %vm185, %v253
      %259 = vst.msk [vmem:[#allocation2 + $0x34] sm:$0xf] %vm185, %v255
      %v260 = vld [vmem:[%s165] sm:$0xf]
      %v261 = vld [vmem:[%s165 + $0x4] sm:$0xf]
      %264 = vrot.lane.b32.xlu0 %v260, 107
      %v265 = vpop.permute.xlu0 %264
      %266 = vrot.lane.b32.xlu0 %v261, 107
      %v267 = vpop.permute.xlu0 %266
      %270 = vst.msk [vmem:[#allocation2 + $0x38] sm:$0xf] %vm185, %v265
      %271 = vst.msk [vmem:[#allocation2 + $0x3c] sm:$0xf] %vm185, %v267
      %v272 = vld [vmem:[%s165] sm:$0xf]
      %v273 = vld [vmem:[%s165 + $0x4] sm:$0xf]
      %276 = vrot.lane.b32.xlu0 %v272, 106
      %v277 = vpop.permute.xlu0 %276
      %278 = vrot.lane.b32.xlu0 %v273, 106
      %v279 = vpop.permute.xlu0 %278
      %282 = vst.msk [vmem:[#allocation2 + $0x40] sm:$0xf] %vm185, %v277
      %283 = vst.msk [vmem:[#allocation2 + $0x44] sm:$0xf] %vm185, %v279
      %v284 = vld [vmem:[#allocation2] sm:$0xf]
      %v285 = vld [vmem:[#allocation2 + $0x4] sm:$0xf]
      %v286 = vld [vmem:[#allocation2 + $0x8] sm:$0xf]
      %v287 = vld [vmem:[#allocation2 + $0xc] sm:$0xf]
      %v288 = vld [vmem:[#allocation2 + $0x10] sm:$0xf]
      %v289 = vld [vmem:[#allocation2 + $0x14] sm:$0xf]
      %v290 = vld [vmem:[#allocation2 + $0x18] sm:$0xf]
      %v291 = vld [vmem:[#allocation2 + $0x1c] sm:$0xf]
      %v292 = vld [vmem:[#allocation2 + $0x20] sm:$0xf]
      %v293 = vld [vmem:[#allocation2 + $0x24] sm:$0xf]
      %v294 = vld [vmem:[#allocation2 + $0x28] sm:$0xf]
      %v295 = vld [vmem:[#allocation2 + $0x2c] sm:$0xf]
      %v296 = vld [vmem:[#allocation2 + $0x30] sm:$0xf]
      %v297 = vld [vmem:[#allocation2 + $0x34] sm:$0xf]
      %v298 = vld [vmem:[#allocation2 + $0x38] sm:$0xf]
      %v299 = vld [vmem:[#allocation2 + $0x3c] sm:$0xf]
      %v300 = vld [vmem:[#allocation2 + $0x40] sm:$0xf]
      %v301 = vld [vmem:[#allocation2 + $0x44] sm:$0xf]
      %303 = vset.pattern.permute.xlu0 0
      %304 = vperm.xlu0 %303, %v181
      %v305 = vpop.permute.xlu0 %304
      %308 = vset.pattern.permute.xlu0 0
      %309 = vperm.xlu0 %308, %v182
      %v310 = vpop.permute.xlu0 %309
      %v314 = vunpack.c.l.b16 %v177
      %v315 = vunpack.c.h.b16 %v177
      %v316 = vunpack.c.l.b16 %v178
      %v317 = vunpack.c.h.b16 %v178
      %v318 = vpack.c.b16 %v316, %v314
      %v319 = vpack.c.b16 %v317, %v315
      %v339 = vunpack.c.l.b16 %v284
      %v340 = vunpack.c.l.b16 %v285
      %v341 = vunpack.c.l.b16 %v286
      %v342 = vunpack.c.l.b16 %v287
      %v343 = vunpack.c.l.b16 %v288
      %v344 = vunpack.c.l.b16 %v289
      %v345 = vunpack.c.l.b16 %v290
      %v346 = vunpack.c.l.b16 %v291
      %v347 = vunpack.c.l.b16 %v292
      %v348 = vunpack.c.l.b16 %v293
      %v349 = vunpack.c.l.b16 %v294
      %v350 = vunpack.c.l.b16 %v295
      %v351 = vunpack.c.l.b16 %v296
      %v352 = vunpack.c.l.b16 %v297
      %v353 = vunpack.c.l.b16 %v298
      %v354 = vunpack.c.l.b16 %v299
      %v355 = vunpack.c.l.b16 %v300
      %v356 = vunpack.c.l.b16 %v301
      %v357 = vpack.c.b16 %v340, %v339
      %v358 = vpack.c.b16 %v342, %v341
      %v359 = vpack.c.b16 %v344, %v343
      %v360 = vpack.c.b16 %v346, %v345
      %v361 = vpack.c.b16 %v348, %v347
      %v362 = vpack.c.b16 %v350, %v349
      %v363 = vpack.c.b16 %v352, %v351
      %v364 = vpack.c.b16 %v354, %v353
      %v365 = vpack.c.b16 %v356, %v355
      %vm375 = vcmask 130048
      %v377 = vsel %vm375, %v319, 0
      %379 = vmatpush.bf16.msra.mxu0 %v364
      %380 = vmatpush.bf16.msra.mxu0 %v363
      %381 = vmatpush.bf16.msra.mxu0 %v362
      %382 = vmatpush.bf16.msra.mxu0 %v361
      %383 = vmatpush.bf16.msra.mxu0 %v360
      %384 = vmatpush.bf16.msra.mxu0 %v359
      %385 = vmatpush.bf16.msra.mxu0 %v358
      %386 = vmatpush.bf16.msra.mxu0 %v357
      %387 = vmatmul.bf16.gmra.mxu0 %v318
      %v388 = vpop.f32.mrf.mxu0
      %v389 = vadd.f32 %v305, %v388
      %v390 = vpop.f32.mrf.mxu0
      %v391 = vadd.f32 %v310, %v390
      %392 = vdwg.mxu0
      %393 = vmatpush.bf16.msra.mxu0 0
      %394 = vmatpush.bf16.msra.mxu0 0
      %395 = vmatpush.bf16.msra.mxu0 0
      %396 = vmatpush.bf16.msra.mxu0 0
      %397 = vmatpush.bf16.msra.mxu0 0
      %398 = vmatpush.bf16.msra.mxu0 0
      %399 = vmatpush.bf16.msra.mxu0 0
      %400 = vmatpush.bf16.msra.mxu0 %v365
      %401 = vmatmul.bf16.gmra.mxu0 %v377
      %v402 = vpop.f32.mrf.mxu0
      %v403 = vadd.f32 %v389, %v402
      %v404 = vpop.f32.mrf.mxu0
      %v405 = vadd.f32 %v391, %v404
      %406 = vdwg.mxu0
      %v407 = vmax.f32 %v403, 0.0
      %v408 = vmax.f32 %v405, 0.0
      %v409 = vpack.c.bf16 %v407, %v407
      %v410 = vpack.c.bf16 %v408, %v408
      %411 = vst.msk [vmem:[%s170] sm:$0xf] %vm185, %v409
      %412 = vst.msk [vmem:[%s170 + $0x4] sm:$0xf] %vm185, %v410
      %p413 = scmp.lt.s32.totalorder %s14, 9
      %s414 = scalar_select %p413, %s14, 9
      %s415 = smul.addr %s414, 2
      %s416 = smul.addr %s415, 4
      %s417 = scalar_lea.vmem %s3, %s416
      // Predicated region
      $region33: #{samoe_forward.5} parent=31 // pred_check
        %p418 = pneg %p100
      $region34: #{samoe_forward.5} parent=31 // pred_check_branch
        %420 = sbr.rel (%p418) target = $region36
      $region35: #{samoe_forward.5} parent=31 // pred_region
        _
      $region36: #{samoe_forward.5} parent=31 // pred_fallthru
        _
    $region32: #{samoe_forward.5} parent=5 // pred_fallthru
      _
    %p421 = scmp.le.s32.totalorder 2, %s9
    // Predicated region
    $region37: #{samoe_forward.5} parent=5 // pred_check
      %p422 = pneg %p421
    $region38: #{samoe_forward.5} parent=5 // pred_check_branch
      %424 = sbr.rel (%p422) target = $region40
    $region39: #{samoe_forward.5} parent=5 // pred_region
      %s425 = ssub.s32 %s9, 2
      // Predicated region
      $region41: #{samoe_forward.5} parent=39 // pred_check
        %p426 = pneg %p106
      $region42: #{samoe_forward.5} parent=39 // pred_check_branch
        %428 = sbr.rel (%p426) target = $region44
      $region43: #{samoe_forward.5} parent=39 // pred_region
        %p429 = scmp.lt.s32.totalorder %s15, 9
        %s430 = scalar_select %p429, %s15, 9
        %s431 = smul.addr %s430, 2
        %s432 = smul.addr %s431, 4
        %s433 = scalar_lea.vmem %s3, %s432
      $region44: #{samoe_forward.5} parent=39 // pred_fallthru
        _
    $region40: #{samoe_forward.5} parent=5 // pred_fallthru
      _
  $region6: #{samoe_forward.5} parent=0 // loop_footer
    %s13 = sadd.s32 1, %s9
  $region7: #{samoe_forward.5} parent=0 // loop_footer_branch
    %8 = sbr.rel target = $region3
  $region8: #{samoe_forward.5} parent=0 // loop_exit
    _

// kernel: samoe_forward.6
$region0: #{samoe_forward.6}
  #allocation0 [shape = 'u32[]', space=smem, size = 0x4, offset = 0x4, fixed_abs, tag = 'smem constant byte address 0x4 - core index']
  #allocation1 [shape = 'u32[72,128]{1,0:T(1,128)}', space=vmem, size = 0x9000, scoped, tag = 'internal scratch']
  #allocation2 [shape = 'bf16[144,24]{1,0:T(8,128)(2,1)}', space=vmem, size = 0x9000, scoped, tag = 'scratch operand']
  %s0 = inlined_call_operand.vmem [shape: bf16[10,16,38], index: 0, kind: input, shape index: {}]
  %s1 = inlined_call_operand.vmem [shape: bf16[2,32,144], index: 1, kind: input, shape index: {}]
  %s2 = inlined_call_operand.vmem [shape: f32[2,32,1], index: 2, kind: input, shape index: {}]
  %s3 = inlined_call_operand.vmem [shape: bf16[10,32,24], index: 3, kind: output, shape index: {}]
  %s4 = sld [smem:[#allocation0]]
  $region45: #{samoe_forward.6} parent=0
    _
  %s6 = ssub.s32 1, %s4
  %s7 = scalar_select 0, %s6, %s4
  loop: start=0, step=1, limit=12
  $region2: #{samoe_forward.6} parent=0 // loop_pre_header
    _
  $region3: #{samoe_forward.6} parent=0 // loop_header
    %s9 = sphi 0, %s13
    %p10 = scmp.ge.s32.totalorder %s9, 12
    %s19 = sphi 0, %s21
    %s22 = sphi 0, %s19
    %s23 = sphi 0, %s22
    %s39 = sphi 0, %s23
    %s43 = sphi 0, %s43
    %s45 = sphi 0, %s43
    %s46 = sphi 0, %s45
    %s60 = sphi 0, %s46
    %s64 = sphi 0, %s64
    %s66 = sphi 0, %s64
    %s67 = sphi 0, %s66
    %s81 = sphi 0, %s67
    %s87 = sphi 0, %s89
    %s90 = sphi 0, %s87
    %s91 = sphi 0, %s90
    %s107 = sphi 0, %s91
  $region4: #{samoe_forward.6} parent=0 // loop_header_branch
    %12 = sbr.rel (%p10) target = $region8
  $region5: #{samoe_forward.6} parent=0 // loop_body
    %s14 = ssub.s32 %s9, 1
    %s15 = ssub.s32 %s9, 2
    %s16 = sadd.s32 %s9, 1
    %s17 = ssub.s32 %s9, %s16
    %p18 = scmp.eq.s32.totalorder %s17, 0
    %s20 = sadd.s32 %s19, 1
    %s21 = scalar_select %p18, %s19, %s20
    %p24 = pneg %p18
    %p25 = scmp.eq.s32.totalorder %s9, 9
    %p26 = por %p24, %p25
    %p27 = scmp.ne.s32.totalorder %s19, %s22
    %p28 = scmp.eq.s32.totalorder %s9, 0
    %p29 = por %p27, %p28
    %p30 = scmp.ne.s32.totalorder %s19, %s22
    %p31 = scmp.eq.s32.totalorder %s14, 9
    %p32 = por %p30, %p31
    %p33 = scmp.ne.s32.totalorder %s22, %s23
    %p34 = scmp.eq.s32.totalorder %s14, 0
    %p35 = por %p33, %p34
    %p36 = scmp.ne.s32.totalorder %s22, %s23
    %p37 = scmp.eq.s32.totalorder %s15, 9
    %p38 = por %p36, %p37
    %p40 = scmp.ne.s32.totalorder %s23, %s39
    %p41 = scmp.eq.s32.totalorder %s15, 0
    %p42 = por %p40, %p41
    %s44 = sadd.s32 %s43, 1
    %p47 = scmp.eq.s32.totalorder %s9, 9
    %p48 = scmp.ne.s32.totalorder %s43, %s45
    %p49 = scmp.eq.s32.totalorder %s9, 0
    %p50 = por %p48, %p49
    %p51 = scmp.ne.s32.totalorder %s43, %s45
    %p52 = scmp.eq.s32.totalorder %s14, 9
    %p53 = por %p51, %p52
    %p54 = scmp.ne.s32.totalorder %s45, %s46
    %p55 = scmp.eq.s32.totalorder %s14, 0
    %p56 = por %p54, %p55
    %p57 = scmp.ne.s32.totalorder %s45, %s46
    %p58 = scmp.eq.s32.totalorder %s15, 9
    %p59 = por %p57, %p58
    %p61 = scmp.ne.s32.totalorder %s46, %s60
    %p62 = scmp.eq.s32.totalorder %s15, 0
    %p63 = por %p61, %p62
    %s65 = sadd.s32 %s64, 1
    %p68 = scmp.eq.s32.totalorder %s9, 9
    %p69 = scmp.ne.s32.totalorder %s64, %s66
    %p70 = scmp.eq.s32.totalorder %s9, 0
    %p71 = por %p69, %p70
    %p72 = scmp.ne.s32.totalorder %s64, %s66
    %p73 = scmp.eq.s32.totalorder %s14, 9
    %p74 = por %p72, %p73
    %p75 = scmp.ne.s32.totalorder %s66, %s67
    %p76 = scmp.eq.s32.totalorder %s14, 0
    %p77 = por %p75, %p76
    %p78 = scmp.ne.s32.totalorder %s66, %s67
    %p79 = scmp.eq.s32.totalorder %s15, 9
    %p80 = por %p78, %p79
    %p82 = scmp.ne.s32.totalorder %s67, %s81
    %p83 = scmp.eq.s32.totalorder %s15, 0
    %p84 = por %p82, %p83
    %s85 = ssub.s32 %s9, %s16
    %p86 = scmp.eq.s32.totalorder %s85, 0
    %s88 = sadd.s32 %s87, 1
    %s89 = scalar_select %p86, %s87, %s88
    %p92 = pneg %p86
    %p93 = scmp.eq.s32.totalorder %s9, 9
    %p94 = por %p92, %p93
    %p95 = scmp.ne.s32.totalorder %s87, %s90
    %p96 = scmp.eq.s32.totalorder %s9, 0
    %p97 = por %p95, %p96
    %p98 = scmp.ne.s32.totalorder %s87, %s90
    %p99 = scmp.eq.s32.totalorder %s14, 9
    %p100 = por %p98, %p99
    %p101 = scmp.ne.s32.totalorder %s90, %s91
    %p102 = scmp.eq.s32.totalorder %s14, 0
    %p103 = por %p101, %p102
    %p104 = scmp.ne.s32.totalorder %s90, %s91
    %p105 = scmp.eq.s32.totalorder %s15, 9
    %p106 = por %p104, %p105
    %p108 = scmp.ne.s32.totalorder %s91, %s107
    %p109 = scmp.eq.s32.totalorder %s15, 0
    %p110 = por %p108, %p109
    %p111 = scmp.le.s32.totalorder 1, %s9
    %p112 = scmp.lt.s32.totalorder %s9, 11
    %p113 = pnand %p111, %p112
    %p114 = pneg %p113
    // Predicated region
    $region9: #{samoe_forward.6} parent=5 // pred_check
      _
    $region10: #{samoe_forward.6} parent=5 // pred_check_branch
      %116 = sbr.rel (%p113) target = $region12
    $region11: #{samoe_forward.6} parent=5 // pred_region
      %s117 = ssub.s32 %s9, 1
      // Predicated region
      $region13: #{samoe_forward.6} parent=11 // pred_check
        %p118 = pneg %p56
      $region14: #{samoe_forward.6} parent=11 // pred_check_branch
        %120 = sbr.rel (%p118) target = $region16
      $region15: #{samoe_forward.6} parent=11 // pred_region
        _
      $region16: #{samoe_forward.6} parent=11 // pred_fallthru
        _
      // Predicated region
      $region17: #{samoe_forward.6} parent=11 // pred_check
        %p121 = pneg %p77
      $region18: #{samoe_forward.6} parent=11 // pred_check_branch
        %123 = sbr.rel (%p121) target = $region20
      $region19: #{samoe_forward.6} parent=11 // pred_region
        _
      $region20: #{samoe_forward.6} parent=11 // pred_fallthru
        _
    $region12: #{samoe_forward.6} parent=5 // pred_fallthru
      _
    %p124 = scmp.lt.s32.totalorder %s9, 10
    // Predicated region
    $region21: #{samoe_forward.6} parent=5 // pred_check
      %p125 = pneg %p124
    $region22: #{samoe_forward.6} parent=5 // pred_check_branch
      %127 = sbr.rel (%p125) target = $region24
    $region23: #{samoe_forward.6} parent=5 // pred_region
      // Predicated region
      $region25: #{samoe_forward.6} parent=23 // pred_check
        %p128 = pneg %p29
      $region26: #{samoe_forward.6} parent=23 // pred_check_branch
        %130 = sbr.rel (%p128) target = $region28
      $region27: #{samoe_forward.6} parent=23 // pred_region
        %p131 = scmp.lt.s32.totalorder %s9, 9
        %s132 = scalar_select %p131, %s9, 9
        %s133 = smul.addr %s132, 2
        %s134 = smul.addr %s133, 4
        %s135 = scalar_lea.vmem %s0, %s134
      $region28: #{samoe_forward.6} parent=23 // pred_fallthru
        _
    $region24: #{samoe_forward.6} parent=5 // pred_fallthru
      _
    %p136 = scmp.le.s32.totalorder 1, %s9
    %p137 = scmp.lt.s32.totalorder %s9, 11
    %p138 = pnand %p136, %p137
    %p139 = pneg %p138
    // Predicated region
    $region29: #{samoe_forward.6} parent=5 // pred_check
      _
    $region30: #{samoe_forward.6} parent=5 // pred_check_branch
      %141 = sbr.rel (%p138) target = $region32
    $region31: #{samoe_forward.6} parent=5 // pred_region
      %s142 = ssub.s32 %s9, 1
      %p143 = scmp.lt.s32.totalorder %s14, 9
      %s144 = scalar_select %p143, %s14, 9
      %s145 = smul.addr %s144, 2
      %s146 = smul.addr %s145, 4
      %s147 = scalar_lea.vmem %s0, %s146
      %p148 = pneg %p35
      %p149 = pneg %p32
      %p150 = pneg %p56
      %p151 = pneg %p53
      %p152 = pneg %p77
      %p153 = pneg %p74
      %p154 = pneg %p103
      %p155 = pneg %p100
      %p156 = scmp.lt.s32.totalorder %s14, 9
      %s157 = scalar_select %p156, %s14, 9
      %s158 = smul.addr %s157, 4
      %s159 = smul.addr %s158, 4
      %s160 = scalar_lea.vmem %s3, %s159
      %p161 = scmp.lt.s32.totalorder %s14, 9
      %s162 = scalar_select %p161, %s14, 9
      %s163 = smul.addr %s162, 2
      %s164 = smul.addr %s163, 4
      %s165 = scalar_lea.vmem %s0, %s164
      %p166 = scmp.lt.s32.totalorder %s14, 9
      %s167 = scalar_select %p166, %s14, 9
      %s168 = smul.addr %s167, 4
      %s169 = smul.addr %s168, 4
      %s170 = scalar_lea.vmem %s3, %s169
      %p172 = scmp.ge.s32.totalorder %s14, 8
      %s173 = scalar_select %p172, 1, 0
      %s174 = smul.u32 %s173, 8
      %s175 = smul.addr %s174, 4
      %s176 = scalar_lea.vmem %s1, %s175
      %v177 = vld [vmem:[%s176] sm:$0xff]
      %v178 = vld [vmem:[%s176 + $0x8] sm:$0xff]
      %v179 = vld [vmem:[%s176 + $0x10] sm:$0xff]
      %v180 = vld [vmem:[%s176 + $0x18] sm:$0xff]
      %s181 = smul.u32 %s173, 32
      %s182 = scalar_lea.vmem %s2, %s181
      %v183 = vld [vmem:[%s182] sm:$0xff]
      %v184 = vld [vmem:[%s182 + $0x8] sm:$0xff]
      %v185 = vld [vmem:[%s182 + $0x10] sm:$0xff]
      %v186 = vld [vmem:[%s182 + $0x18] sm:$0xff]
      %v187 = vld [vmem:[%s165] sm:$0xf]
      %v188 = vld [vmem:[%s165 + $0x4] sm:$0xf]
      %vm189 = vcmask 191488
      %190 = vst.msk [vmem:[#allocation2] sm:$0xf] %vm189, %v187
      %191 = vst.msk [vmem:[#allocation2 + $0x4] sm:$0xf] %vm189, %v188
      %v192 = vld [vmem:[%s165] sm:$0xf]
      %v193 = vld [vmem:[%s165 + $0x4] sm:$0xf]
      %196 = vrot.lane.b32.xlu0 %v192, 127
      %v197 = vpop.permute.xlu0 %196
      %198 = vrot.lane.b32.xlu0 %v193, 127
      %v199 = vpop.permute.xlu0 %198
      %202 = vst.msk [vmem:[#allocation2 + $0x8] sm:$0xf] %vm189, %v197
      %203 = vst.msk [vmem:[#allocation2 + $0xc] sm:$0xf] %vm189, %v199
      %v204 = vld [vmem:[%s165] sm:$0xf]
      %v205 = vld [vmem:[%s165 + $0x4] sm:$0xf]
      %208 = vrot.lane.b32.xlu0 %v204, 126
      %v209 = vpop.permute.xlu0 %208
      %210 = vrot.lane.b32.xlu0 %v205, 126
      %v211 = vpop.permute.xlu0 %210
      %214 = vst.msk [vmem:[#allocation2 + $0x10] sm:$0xf] %vm189, %v209
      %215 = vst.msk [vmem:[#allocation2 + $0x14] sm:$0xf] %vm189, %v211
      %v216 = vld [vmem:[%s165] sm:$0xf]
      %v217 = vld [vmem:[%s165 + $0x4] sm:$0xf]
      %220 = vrot.lane.b32.xlu0 %v216, 122
      %v221 = vpop.permute.xlu0 %220
      %222 = vrot.lane.b32.xlu0 %v217, 122
      %v223 = vpop.permute.xlu0 %222
      %226 = vst.msk [vmem:[#allocation2 + $0x18] sm:$0xf] %vm189, %v221
      %227 = vst.msk [vmem:[#allocation2 + $0x1c] sm:$0xf] %vm189, %v223
      %v228 = vld [vmem:[%s165] sm:$0xf]
      %v229 = vld [vmem:[%s165 + $0x4] sm:$0xf]
      %232 = vrot.lane.b32.xlu0 %v228, 121
      %v233 = vpop.permute.xlu0 %232
      %234 = vrot.lane.b32.xlu0 %v229, 121
      %v235 = vpop.permute.xlu0 %234
      %238 = vst.msk [vmem:[#allocation2 + $0x20] sm:$0xf] %vm189, %v233
      %239 = vst.msk [vmem:[#allocation2 + $0x24] sm:$0xf] %vm189, %v235
      %v240 = vld [vmem:[%s165] sm:$0xf]
      %v241 = vld [vmem:[%s165 + $0x4] sm:$0xf]
      %244 = vrot.lane.b32.xlu0 %v240, 120
      %v245 = vpop.permute.xlu0 %244
      %246 = vrot.lane.b32.xlu0 %v241, 120
      %v247 = vpop.permute.xlu0 %246
      %250 = vst.msk [vmem:[#allocation2 + $0x28] sm:$0xf] %vm189, %v245
      %251 = vst.msk [vmem:[#allocation2 + $0x2c] sm:$0xf] %vm189, %v247
      %v252 = vld [vmem:[%s165] sm:$0xf]
      %v253 = vld [vmem:[%s165 + $0x4] sm:$0xf]
      %256 = vrot.lane.b32.xlu0 %v252, 116
      %v257 = vpop.permute.xlu0 %256
      %258 = vrot.lane.b32.xlu0 %v253, 116
      %v259 = vpop.permute.xlu0 %258
      %262 = vst.msk [vmem:[#allocation2 + $0x30] sm:$0xf] %vm189, %v257
      %263 = vst.msk [vmem:[#allocation2 + $0x34] sm:$0xf] %vm189, %v259
      %v264 = vld [vmem:[%s165] sm:$0xf]
      %v265 = vld [vmem:[%s165 + $0x4] sm:$0xf]
      %268 = vrot.lane.b32.xlu0 %v264, 115
      %v269 = vpop.permute.xlu0 %268
      %270 = vrot.lane.b32.xlu0 %v265, 115
      %v271 = vpop.permute.xlu0 %270
      %274 = vst.msk [vmem:[#allocation2 + $0x38] sm:$0xf] %vm189, %v269
      %275 = vst.msk [vmem:[#allocation2 + $0x3c] sm:$0xf] %vm189, %v271
      %v276 = vld [vmem:[%s165] sm:$0xf]
      %v277 = vld [vmem:[%s165 + $0x4] sm:$0xf]
      %280 = vrot.lane.b32.xlu0 %v276, 114
      %v281 = vpop.permute.xlu0 %280
      %282 = vrot.lane.b32.xlu0 %v277, 114
      %v283 = vpop.permute.xlu0 %282
      %286 = vst.msk [vmem:[#allocation2 + $0x40] sm:$0xf] %vm189, %v281
      %287 = vst.msk [vmem:[#allocation2 + $0x44] sm:$0xf] %vm189, %v283
      %v288 = vld [vmem:[#allocation2] sm:$0xf]
      %v289 = vld [vmem:[#allocation2 + $0x4] sm:$0xf]
      %v290 = vld [vmem:[#allocation2 + $0x8] sm:$0xf]
      %v291 = vld [vmem:[#allocation2 + $0xc] sm:$0xf]
      %v292 = vld [vmem:[#allocation2 + $0x10] sm:$0xf]
      %v293 = vld [vmem:[#allocation2 + $0x14] sm:$0xf]
      %v294 = vld [vmem:[#allocation2 + $0x18] sm:$0xf]
      %v295 = vld [vmem:[#allocation2 + $0x1c] sm:$0xf]
      %v296 = vld [vmem:[#allocation2 + $0x20] sm:$0xf]
      %v297 = vld [vmem:[#allocation2 + $0x24] sm:$0xf]
      %v298 = vld [vmem:[#allocation2 + $0x28] sm:$0xf]
      %v299 = vld [vmem:[#allocation2 + $0x2c] sm:$0xf]
      %v300 = vld [vmem:[#allocation2 + $0x30] sm:$0xf]
      %v301 = vld [vmem:[#allocation2 + $0x34] sm:$0xf]
      %v302 = vld [vmem:[#allocation2 + $0x38] sm:$0xf]
      %v303 = vld [vmem:[#allocation2 + $0x3c] sm:$0xf]
      %v304 = vld [vmem:[#allocation2 + $0x40] sm:$0xf]
      %v305 = vld [vmem:[#allocation2 + $0x44] sm:$0xf]
      %307 = vset.pattern.permute.xlu0 0
      %308 = vperm.xlu0 %307, %v183
      %v309 = vpop.permute.xlu0 %308
      %312 = vset.pattern.permute.xlu0 0
      %313 = vperm.xlu0 %312, %v184
      %v314 = vpop.permute.xlu0 %313
      %317 = vset.pattern.permute.xlu0 0
      %318 = vperm.xlu0 %317, %v185
      %v319 = vpop.permute.xlu0 %318
      %322 = vset.pattern.permute.xlu0 0
      %323 = vperm.xlu0 %322, %v186
      %v324 = vpop.permute.xlu0 %323
      %v330 = vunpack.c.l.b16 %v177
      %v331 = vunpack.c.h.b16 %v177
      %v332 = vunpack.c.l.b16 %v178
      %v333 = vunpack.c.h.b16 %v178
      %v334 = vunpack.c.l.b16 %v179
      %v335 = vunpack.c.h.b16 %v179
      %v336 = vunpack.c.l.b16 %v180
      %v337 = vunpack.c.h.b16 %v180
      %v338 = vpack.c.b16 %v332, %v330
      %v339 = vpack.c.b16 %v333, %v331
      %v340 = vpack.c.b16 %v336, %v334
      %v341 = vpack.c.b16 %v337, %v335
      %v362 = vunpack.c.l.b16 %v288
      %v363 = vunpack.c.l.b16 %v289
      %v364 = vunpack.c.l.b16 %v290
      %v365 = vunpack.c.l.b16 %v291
      %v366 = vunpack.c.l.b16 %v292
      %v367 = vunpack.c.l.b16 %v293
      %v368 = vunpack.c.l.b16 %v294
      %v369 = vunpack.c.l.b16 %v295
      %v370 = vunpack.c.l.b16 %v296
      %v371 = vunpack.c.l.b16 %v297
      %v372 = vunpack.c.l.b16 %v298
      %v373 = vunpack.c.l.b16 %v299
      %v374 = vunpack.c.l.b16 %v300
      %v375 = vunpack.c.l.b16 %v301
      %v376 = vunpack.c.l.b16 %v302
      %v377 = vunpack.c.l.b16 %v303
      %v378 = vunpack.c.l.b16 %v304
      %v379 = vunpack.c.l.b16 %v305
      %v380 = vpack.c.b16 %v363, %v362
      %v381 = vpack.c.b16 %v365, %v364
      %v382 = vpack.c.b16 %v367, %v366
      %v383 = vpack.c.b16 %v369, %v368
      %v384 = vpack.c.b16 %v371, %v370
      %v385 = vpack.c.b16 %v373, %v372
      %v386 = vpack.c.b16 %v375, %v374
      %v387 = vpack.c.b16 %v377, %v376
      %v388 = vpack.c.b16 %v379, %v378
      %vm398 = vcmask 130048
      %v400 = vsel %vm398, %v339, 0
      %v403 = vsel %vm398, %v341, 0
      %405 = vmatpush.bf16.msra.mxu0 %v387
      %406 = vmatpush.bf16.msra.mxu0 %v386
      %407 = vmatpush.bf16.msra.mxu0 %v385
      %408 = vmatpush.bf16.msra.mxu0 %v384
      %409 = vmatpush.bf16.msra.mxu0 %v383
      %410 = vmatpush.bf16.msra.mxu0 %v382
      %411 = vmatpush.bf16.msra.mxu0 %v381
      %412 = vmatpush.bf16.msra.mxu0 %v380
      %413 = vmatmul.bf16.gmra.mxu0 %v338
      %v414 = vpop.f32.mrf.mxu0
      %v415 = vadd.f32 %v309, %v414
      %v416 = vpop.f32.mrf.mxu0
      %v417 = vadd.f32 %v314, %v416
      %418 = vmatmul.bf16.gmra.mxu0 %v340
      %v419 = vpop.f32.mrf.mxu0
      %v420 = vadd.f32 %v319, %v419
      %v421 = vpop.f32.mrf.mxu0
      %v422 = vadd.f32 %v324, %v421
      %423 = vdwg.mxu0
      %424 = vmatpush.bf16.msra.mxu0 0
      %425 = vmatpush.bf16.msra.mxu0 0
      %426 = vmatpush.bf16.msra.mxu0 0
      %427 = vmatpush.bf16.msra.mxu0 0
      %428 = vmatpush.bf16.msra.mxu0 0
      %429 = vmatpush.bf16.msra.mxu0 0
      %430 = vmatpush.bf16.msra.mxu0 0
      %431 = vmatpush.bf16.msra.mxu0 %v388
      %432 = vmatmul.bf16.gmra.mxu0 %v400
      %v433 = vpop.f32.mrf.mxu0
      %v434 = vadd.f32 %v415, %v433
      %v435 = vpop.f32.mrf.mxu0
      %v436 = vadd.f32 %v417, %v435
      %437 = vmatmul.bf16.gmra.mxu0 %v403
      %v438 = vpop.f32.mrf.mxu0
      %v439 = vadd.f32 %v420, %v438
      %v440 = vpop.f32.mrf.mxu0
      %v441 = vadd.f32 %v422, %v440
      %442 = vdwg.mxu0
      %v443 = vmax.f32 %v434, 0.0
      %v444 = vmax.f32 %v436, 0.0
      %v445 = vmax.f32 %v439, 0.0
      %v446 = vmax.f32 %v441, 0.0
      %v447 = vpack.c.bf16 %v443, %v443
      %v448 = vpack.c.bf16 %v444, %v444
      %v449 = vpack.c.bf16 %v445, %v445
      %v450 = vpack.c.bf16 %v446, %v446
      %451 = vst.msk [vmem:[%s170] sm:$0xf] %vm189, %v447
      %452 = vst.msk [vmem:[%s170 + $0x4] sm:$0xf] %vm189, %v448
      %453 = vst.msk [vmem:[%s170 + $0x8] sm:$0xf] %vm189, %v449
      %454 = vst.msk [vmem:[%s170 + $0xc] sm:$0xf] %vm189, %v450
      %p455 = scmp.lt.s32.totalorder %s14, 9
      %s456 = scalar_select %p455, %s14, 9
      %s457 = smul.addr %s456, 4
      %s458 = smul.addr %s457, 4
      %s459 = scalar_lea.vmem %s3, %s458
      // Predicated region
      $region33: #{samoe_forward.6} parent=31 // pred_check
        %p460 = pneg %p100
      $region34: #{samoe_forward.6} parent=31 // pred_check_branch
        %462 = sbr.rel (%p460) target = $region36
      $region35: #{samoe_forward.6} parent=31 // pred_region
        _
      $region36: #{samoe_forward.6} parent=31 // pred_fallthru
        _
    $region32: #{samoe_forward.6} parent=5 // pred_fallthru
      _
    %p463 = scmp.le.s32.totalorder 2, %s9
    // Predicated region
    $region37: #{samoe_forward.6} parent=5 // pred_check
      %p464 = pneg %p463
    $region38: #{samoe_forward.6} parent=5 // pred_check_branch
      %466 = sbr.rel (%p464) target = $region40
    $region39: #{samoe_forward.6} parent=5 // pred_region
      %s467 = ssub.s32 %s9, 2
      // Predicated region
      $region41: #{samoe_forward.6} parent=39 // pred_check
        %p468 = pneg %p106
      $region42: #{samoe_forward.6} parent=39 // pred_check_branch
        %470 = sbr.rel (%p468) target = $region44
      $region43: #{samoe_forward.6} parent=39 // pred_region
        %p471 = scmp.lt.s32.totalorder %s15, 9
        %s472 = scalar_select %p471, %s15, 9
        %s473 = smul.addr %s472, 4
        %s474 = smul.addr %s473, 4
        %s475 = scalar_lea.vmem %s3, %s474
      $region44: #{samoe_forward.6} parent=39 // pred_fallthru
        _
    $region40: #{samoe_forward.6} parent=5 // pred_fallthru
      _
  $region6: #{samoe_forward.6} parent=0 // loop_footer
    %s13 = sadd.s32 1, %s9
  $region7: #{samoe_forward.6} parent=0 // loop_footer_branch
    %8 = sbr.rel target = $region3
  $region8: #{samoe_forward.6} parent=0 // loop_exit
    _

// kernel: samoe_forward.7
$region0: #{samoe_forward.7}
  #allocation0 [shape = 'u32[]', space=smem, size = 0x4, offset = 0x4, fixed_abs, tag = 'smem constant byte address 0x4 - core index']
  #allocation1 [shape = 'u32[72,128]{1,0:T(1,128)}', space=vmem, size = 0x9000, scoped, tag = 'internal scratch']
  %s0 = inlined_call_operand.smem [shape: u32[38], index: -1, kind: input, shape index: {}]
  %s1 = sld [smem:[%s0]]
  %s2 = scalar_lea.smem %s0, 1
  %s3 = sld [smem:[%s2]]
  %s4 = scalar_lea.smem %s0, 2
  %s5 = sld [smem:[%s4]]
  %s6 = scalar_lea.smem %s0, 3
  %s7 = sld [smem:[%s6]]
  %s8 = scalar_lea.smem %s0, 4
  %s9 = sld [smem:[%s8]]
  %s10 = scalar_lea.smem %s0, 5
  %s11 = sld [smem:[%s10]]
  %s12 = scalar_lea.smem %s0, 6
  %s13 = sld [smem:[%s12]]
  %s14 = scalar_lea.smem %s0, 7
  %s15 = sld [smem:[%s14]]
  %s16 = scalar_lea.smem %s0, 8
  %s17 = sld [smem:[%s16]]
  %s18 = scalar_lea.smem %s0, 9
  %s19 = sld [smem:[%s18]]
  %s20 = scalar_lea.smem %s0, 10
  %s21 = sld [smem:[%s20]]
  %s22 = scalar_lea.smem %s0, 11
  %s23 = sld [smem:[%s22]]
  %s24 = scalar_lea.smem %s0, 12
  %s25 = sld [smem:[%s24]]
  %s26 = scalar_lea.smem %s0, 13
  %s27 = sld [smem:[%s26]]
  %s28 = scalar_lea.smem %s0, 14
  %s29 = sld [smem:[%s28]]
  %s30 = scalar_lea.smem %s0, 15
  %s31 = sld [smem:[%s30]]
  %s32 = scalar_lea.smem %s0, 16
  %s33 = sld [smem:[%s32]]
  %s34 = scalar_lea.smem %s0, 17
  %s35 = sld [smem:[%s34]]
  %s36 = scalar_lea.smem %s0, 18
  %s37 = sld [smem:[%s36]]
  %s38 = scalar_lea.smem %s0, 19
  %s39 = sld [smem:[%s38]]
  %s40 = scalar_lea.smem %s0, 20
  %s41 = sld [smem:[%s40]]
  %s42 = scalar_lea.smem %s0, 21
  %s43 = sld [smem:[%s42]]
  %s44 = scalar_lea.smem %s0, 22
  %s45 = sld [smem:[%s44]]
  %s46 = scalar_lea.smem %s0, 23
  %s47 = sld [smem:[%s46]]
  %s48 = scalar_lea.smem %s0, 24
  %s49 = sld [smem:[%s48]]
  %s50 = scalar_lea.smem %s0, 25
  %s51 = sld [smem:[%s50]]
  %s52 = scalar_lea.smem %s0, 26
  %s53 = sld [smem:[%s52]]
  %s54 = scalar_lea.smem %s0, 27
  %s55 = sld [smem:[%s54]]
  %s56 = scalar_lea.smem %s0, 28
  %s57 = sld [smem:[%s56]]
  %s58 = scalar_lea.smem %s0, 29
  %s59 = sld [smem:[%s58]]
  %s60 = scalar_lea.smem %s0, 30
  %s61 = sld [smem:[%s60]]
  %s62 = scalar_lea.smem %s0, 31
  %s63 = sld [smem:[%s62]]
  %s64 = scalar_lea.smem %s0, 32
  %s65 = sld [smem:[%s64]]
  %s66 = scalar_lea.smem %s0, 33
  %s67 = sld [smem:[%s66]]
  %s68 = scalar_lea.smem %s0, 34
  %s69 = sld [smem:[%s68]]
  %s70 = scalar_lea.smem %s0, 35
  %s71 = sld [smem:[%s70]]
  %s72 = scalar_lea.smem %s0, 36
  %s73 = sld [smem:[%s72]]
  %s74 = scalar_lea.smem %s0, 37
  %s75 = sld [smem:[%s74]]
  %76 = xla_tuple %s73, %s75
  %s77 = sld [smem:[#allocation0]]
  $region162: #{samoe_forward.7} parent=0
    _
  %s79 = ssub.s32 1, %s77
  %s80 = scalar_select 0, %s79, %s77
  // Predicated region
  $region2: #{samoe_forward.7} parent=0 // pred_check
    _
  $region3: #{samoe_forward.7} parent=0 // pred_check_branch
    %82 = sbr.rel (0) target = $region5
  $region4: #{samoe_forward.7} parent=0 // pred_region
    _
  $region5: #{samoe_forward.7} parent=0 // pred_fallthru
    _
  // Predicated region
  $region6: #{samoe_forward.7} parent=0 // pred_check
    _
  $region7: #{samoe_forward.7} parent=0 // pred_check_branch
    %84 = sbr.rel (0) target = $region9
  $region8: #{samoe_forward.7} parent=0 // pred_region
    _
  $region9: #{samoe_forward.7} parent=0 // pred_fallthru
    _
  // Predicated region
  $region10: #{samoe_forward.7} parent=0 // pred_check
    _
  $region11: #{samoe_forward.7} parent=0 // pred_check_branch
    %86 = sbr.rel (0) target = $region13
  $region12: #{samoe_forward.7} parent=0 // pred_region
    _
  $region13: #{samoe_forward.7} parent=0 // pred_fallthru
    _
  // Predicated region
  $region14: #{samoe_forward.7} parent=0 // pred_check
    _
  $region15: #{samoe_forward.7} parent=0 // pred_check_branch
    %88 = sbr.rel (0) target = $region17
  $region16: #{samoe_forward.7} parent=0 // pred_region
    _
  $region17: #{samoe_forward.7} parent=0 // pred_fallthru
    _
  // Predicated region
  $region18: #{samoe_forward.7} parent=0 // pred_check
    _
  $region19: #{samoe_forward.7} parent=0 // pred_check_branch
    %90 = sbr.rel (0) target = $region21
  $region20: #{samoe_forward.7} parent=0 // pred_region
    _
  $region21: #{samoe_forward.7} parent=0 // pred_fallthru
    _
  // Predicated region
  $region22: #{samoe_forward.7} parent=0 // pred_check
    _
  $region23: #{samoe_forward.7} parent=0 // pred_check_branch
    %92 = sbr.rel (0) target = $region25
  $region24: #{samoe_forward.7} parent=0 // pred_region
    _
  $region25: #{samoe_forward.7} parent=0 // pred_fallthru
    _
  // Predicated region
  $region26: #{samoe_forward.7} parent=0 // pred_check
    _
  $region27: #{samoe_forward.7} parent=0 // pred_check_branch
    %94 = sbr.rel (0) target = $region29
  $region28: #{samoe_forward.7} parent=0 // pred_region
    _
  $region29: #{samoe_forward.7} parent=0 // pred_fallthru
    _
  // Predicated region
  $region30: #{samoe_forward.7} parent=0 // pred_check
    _
  $region31: #{samoe_forward.7} parent=0 // pred_check_branch
    %96 = sbr.rel (0) target = $region33
  $region32: #{samoe_forward.7} parent=0 // pred_region
    _
  $region33: #{samoe_forward.7} parent=0 // pred_fallthru
    _
  // Predicated region
  $region34: #{samoe_forward.7} parent=0 // pred_check
    _
  $region35: #{samoe_forward.7} parent=0 // pred_check_branch
    %98 = sbr.rel (0) target = $region37
  $region36: #{samoe_forward.7} parent=0 // pred_region
    _
  $region37: #{samoe_forward.7} parent=0 // pred_fallthru
    _
  // Predicated region
  $region38: #{samoe_forward.7} parent=0 // pred_check
    _
  $region39: #{samoe_forward.7} parent=0 // pred_check_branch
    %100 = sbr.rel (0) target = $region41
  $region40: #{samoe_forward.7} parent=0 // pred_region
    _
  $region41: #{samoe_forward.7} parent=0 // pred_fallthru
    _
  // Predicated region
  $region42: #{samoe_forward.7} parent=0 // pred_check
    _
  $region43: #{samoe_forward.7} parent=0 // pred_check_branch
    %102 = sbr.rel (0) target = $region45
  $region44: #{samoe_forward.7} parent=0 // pred_region
    _
  $region45: #{samoe_forward.7} parent=0 // pred_fallthru
    _
  // Predicated region
  $region46: #{samoe_forward.7} parent=0 // pred_check
    _
  $region47: #{samoe_forward.7} parent=0 // pred_check_branch
    %104 = sbr.rel (0) target = $region49
  $region48: #{samoe_forward.7} parent=0 // pred_region
    _
  $region49: #{samoe_forward.7} parent=0 // pred_fallthru
    _
  // Predicated region
  $region50: #{samoe_forward.7} parent=0 // pred_check
    _
  $region51: #{samoe_forward.7} parent=0 // pred_check_branch
    %106 = sbr.rel (0) target = $region53
  $region52: #{samoe_forward.7} parent=0 // pred_region
    _
  $region53: #{samoe_forward.7} parent=0 // pred_fallthru
    _
  // Predicated region
  $region54: #{samoe_forward.7} parent=0 // pred_check
    _
  $region55: #{samoe_forward.7} parent=0 // pred_check_branch
    %108 = sbr.rel (0) target = $region57
  $region56: #{samoe_forward.7} parent=0 // pred_region
    _
  $region57: #{samoe_forward.7} parent=0 // pred_fallthru
    _
  // Predicated region
  $region58: #{samoe_forward.7} parent=0 // pred_check
    _
  $region59: #{samoe_forward.7} parent=0 // pred_check_branch
    %110 = sbr.rel (0) target = $region61
  $region60: #{samoe_forward.7} parent=0 // pred_region
    _
  $region61: #{samoe_forward.7} parent=0 // pred_fallthru
    _
  // Predicated region
  $region62: #{samoe_forward.7} parent=0 // pred_check
    _
  $region63: #{samoe_forward.7} parent=0 // pred_check_branch
    %112 = sbr.rel (0) target = $region65
  $region64: #{samoe_forward.7} parent=0 // pred_region
    _
  $region65: #{samoe_forward.7} parent=0 // pred_fallthru
    _
  // Predicated region
  $region66: #{samoe_forward.7} parent=0 // pred_check
    _
  $region67: #{samoe_forward.7} parent=0 // pred_check_branch
    %114 = sbr.rel (0) target = $region69
  $region68: #{samoe_forward.7} parent=0 // pred_region
    _
  $region69: #{samoe_forward.7} parent=0 // pred_fallthru
    _
  // Predicated region
  $region70: #{samoe_forward.7} parent=0 // pred_check
    _
  $region71: #{samoe_forward.7} parent=0 // pred_check_branch
    %116 = sbr.rel (0) target = $region73
  $region72: #{samoe_forward.7} parent=0 // pred_region
    _
  $region73: #{samoe_forward.7} parent=0 // pred_fallthru
    _
  // Predicated region
  $region74: #{samoe_forward.7} parent=0 // pred_check
    _
  $region75: #{samoe_forward.7} parent=0 // pred_check_branch
    %118 = sbr.rel (0) target = $region77
  $region76: #{samoe_forward.7} parent=0 // pred_region
    _
  $region77: #{samoe_forward.7} parent=0 // pred_fallthru
    _
  // Predicated region
  $region78: #{samoe_forward.7} parent=0 // pred_check
    _
  $region79: #{samoe_forward.7} parent=0 // pred_check_branch
    %120 = sbr.rel (0) target = $region81
  $region80: #{samoe_forward.7} parent=0 // pred_region
    _
  $region81: #{samoe_forward.7} parent=0 // pred_fallthru
    _
  // Predicated region
  $region82: #{samoe_forward.7} parent=0 // pred_check
    _
  $region83: #{samoe_forward.7} parent=0 // pred_check_branch
    %122 = sbr.rel (0) target = $region85
  $region84: #{samoe_forward.7} parent=0 // pred_region
    _
  $region85: #{samoe_forward.7} parent=0 // pred_fallthru
    _
  // Predicated region
  $region86: #{samoe_forward.7} parent=0 // pred_check
    _
  $region87: #{samoe_forward.7} parent=0 // pred_check_branch
    %124 = sbr.rel (0) target = $region89
  $region88: #{samoe_forward.7} parent=0 // pred_region
    _
  $region89: #{samoe_forward.7} parent=0 // pred_fallthru
    _
  // Predicated region
  $region90: #{samoe_forward.7} parent=0 // pred_check
    _
  $region91: #{samoe_forward.7} parent=0 // pred_check_branch
    %126 = sbr.rel (0) target = $region93
  $region92: #{samoe_forward.7} parent=0 // pred_region
    _
  $region93: #{samoe_forward.7} parent=0 // pred_fallthru
    _
  // Predicated region
  $region94: #{samoe_forward.7} parent=0 // pred_check
    _
  $region95: #{samoe_forward.7} parent=0 // pred_check_branch
    %128 = sbr.rel (0) target = $region97
  $region96: #{samoe_forward.7} parent=0 // pred_region
    _
  $region97: #{samoe_forward.7} parent=0 // pred_fallthru
    _
  // Predicated region
  $region98: #{samoe_forward.7} parent=0 // pred_check
    _
  $region99: #{samoe_forward.7} parent=0 // pred_check_branch
    %130 = sbr.rel (0) target = $region101
  $region100: #{samoe_forward.7} parent=0 // pred_region
    _
  $region101: #{samoe_forward.7} parent=0 // pred_fallthru
    _
  // Predicated region
  $region102: #{samoe_forward.7} parent=0 // pred_check
    _
  $region103: #{samoe_forward.7} parent=0 // pred_check_branch
    %132 = sbr.rel (0) target = $region105
  $region104: #{samoe_forward.7} parent=0 // pred_region
    _
  $region105: #{samoe_forward.7} parent=0 // pred_fallthru
    _
  // Predicated region
  $region106: #{samoe_forward.7} parent=0 // pred_check
    _
  $region107: #{samoe_forward.7} parent=0 // pred_check_branch
    %134 = sbr.rel (0) target = $region109
  $region108: #{samoe_forward.7} parent=0 // pred_region
    _
  $region109: #{samoe_forward.7} parent=0 // pred_fallthru
    _
  // Predicated region
  $region110: #{samoe_forward.7} parent=0 // pred_check
    _
  $region111: #{samoe_forward.7} parent=0 // pred_check_branch
    %136 = sbr.rel (0) target = $region113
  $region112: #{samoe_forward.7} parent=0 // pred_region
    _
  $region113: #{samoe_forward.7} parent=0 // pred_fallthru
    _
  // Predicated region
  $region114: #{samoe_forward.7} parent=0 // pred_check
    _
  $region115: #{samoe_forward.7} parent=0 // pred_check_branch
    %138 = sbr.rel (0) target = $region117
  $region116: #{samoe_forward.7} parent=0 // pred_region
    _
  $region117: #{samoe_forward.7} parent=0 // pred_fallthru
    _
  // Predicated region
  $region118: #{samoe_forward.7} parent=0 // pred_check
    _
  $region119: #{samoe_forward.7} parent=0 // pred_check_branch
    %140 = sbr.rel (0) target = $region121
  $region120: #{samoe_forward.7} parent=0 // pred_region
    _
  $region121: #{samoe_forward.7} parent=0 // pred_fallthru
    _
  // Predicated region
  $region122: #{samoe_forward.7} parent=0 // pred_check
    _
  $region123: #{samoe_forward.7} parent=0 // pred_check_branch
    %142 = sbr.rel (0) target = $region125
  $region124: #{samoe_forward.7} parent=0 // pred_region
    _
  $region125: #{samoe_forward.7} parent=0 // pred_fallthru
    _
  // Predicated region
  $region126: #{samoe_forward.7} parent=0 // pred_check
    _
  $region127: #{samoe_forward.7} parent=0 // pred_check_branch
    %144 = sbr.rel (0) target = $region129
  $region128: #{samoe_forward.7} parent=0 // pred_region
    _
  $region129: #{samoe_forward.7} parent=0 // pred_fallthru
    _
  // Predicated region
  $region130: #{samoe_forward.7} parent=0 // pred_check
    _
  $region131: #{samoe_forward.7} parent=0 // pred_check_branch
    %146 = sbr.rel (0) target = $region133
  $region132: #{samoe_forward.7} parent=0 // pred_region
    _
  $region133: #{samoe_forward.7} parent=0 // pred_fallthru
    _
  // Predicated region
  $region134: #{samoe_forward.7} parent=0 // pred_check
    _
  $region135: #{samoe_forward.7} parent=0 // pred_check_branch
    %148 = sbr.rel (0) target = $region137
  $region136: #{samoe_forward.7} parent=0 // pred_region
    _
  $region137: #{samoe_forward.7} parent=0 // pred_fallthru
    _
  // Predicated region
  $region138: #{samoe_forward.7} parent=0 // pred_check
    _
  $region139: #{samoe_forward.7} parent=0 // pred_check_branch
    %150 = sbr.rel (0) target = $region141
  $region140: #{samoe_forward.7} parent=0 // pred_region
    _
  $region141: #{samoe_forward.7} parent=0 // pred_fallthru
    _
  // Predicated region
  $region142: #{samoe_forward.7} parent=0 // pred_check
    _
  $region143: #{samoe_forward.7} parent=0 // pred_check_branch
    %152 = sbr.rel (0) target = $region145
  $region144: #{samoe_forward.7} parent=0 // pred_region
    _
  $region145: #{samoe_forward.7} parent=0 // pred_fallthru
    _
  %v154 = vld [vmem:[%s1] sm:$0xff]
  %v155 = vld [vmem:[%s3] sm:$0xff]
  %v156 = vld [vmem:[%s9] sm:$0x1]
  %v157 = vld [vmem:[%s11] sm:$0x1]
  %v158 = vld [vmem:[%s13] sm:$0x1]
  %v159 = vld [vmem:[%s15] sm:$0x1]
  %v160 = vld [vmem:[%s17] sm:$0xf]
  %v161 = vld [vmem:[%s17 + $0x4] sm:$0xf]
  %v162 = vld [vmem:[%s17 + $0x8] sm:$0xf]
  %v163 = vld [vmem:[%s17 + $0xc] sm:$0xf]
  %v164 = vld [vmem:[%s19] sm:$0x1]
  %v165 = vld [vmem:[%s21] sm:$0x1]
  %v166 = vld [vmem:[%s23] sm:$0x1]
  %v167 = vld [vmem:[%s25] sm:$0xf]
  %v168 = vld [vmem:[%s25 + $0x4] sm:$0xf]
  %v169 = vld [vmem:[%s25 + $0x8] sm:$0xf]
  %v170 = vld [vmem:[%s25 + $0xc] sm:$0xf]
  %v171 = vld [vmem:[%s27] sm:$0xf]
  %v172 = vld [vmem:[%s27 + $0x4] sm:$0xf]
  %v173 = vld [vmem:[%s27 + $0x8] sm:$0xf]
  %v174 = vld [vmem:[%s27 + $0xc] sm:$0xf]
  %v175 = vld [vmem:[%s29] sm:$0x1]
  %v176 = vld [vmem:[%s31] sm:$0xf]
  %v177 = vld [vmem:[%s31 + $0x4] sm:$0xf]
  %v178 = vld [vmem:[%s31 + $0x8] sm:$0xf]
  %v179 = vld [vmem:[%s31 + $0xc] sm:$0xf]
  %v180 = vld [vmem:[%s33] sm:$0x1]
  %v182 = vperm.slane %v156, 0
  %v184 = vmul.f32 %v154, %v182
  %v186 = vperm.slane %v157, 0
  %v188 = vadd.f32 %v184, %v186
  %v189 = vpack.c.bf16 %v155, %v155
  %v191 = vperm.slane %v159, 0
  %vm193 = vcmask 15360
  %v195 = vsel %vm193, %v189, 0
  %vm197 = vcmask 1040384
  %v199 = vsel %vm197, %v158, 0
  %201 = vmatpush.bf16.msra.mxu0 0
  %202 = vmatpush.bf16.msra.mxu0 0
  %203 = vmatpush.bf16.msra.mxu0 0
  %204 = vmatpush.bf16.msra.mxu0 0
  %205 = vmatpush.bf16.msra.mxu0 0
  %206 = vmatpush.bf16.msra.mxu0 0
  %207 = vmatpush.bf16.msra.mxu0 0
  %208 = vmatpush.bf16.msra.mxu0 %v199
  %209 = vmatmul.bf16.gmra.mxu0 %v195
  %v210 = vpop.f32.mrf.mxu0
  %v211 = vadd.f32 %v191, %v210
  %v212 = vpop.f32.mrf.mxu0
  %213 = vdwg.mxu0
  %v214 = vmax.f32 %v211, 0.0
  %v215 = vpack.c.bf16 %v214, %v214
  %v217 = vperm.slane %v164, 0
  %v223 = vunpack.c.l.b16 %v160
  %v224 = vunpack.c.l.b16 %v161
  %v225 = vunpack.c.l.b16 %v162
  %v226 = vunpack.c.l.b16 %v163
  %v227 = vpack.c.b16 %v224, %v223
  %v228 = vpack.c.b16 %v226, %v225
  %vm231 = vcmask 261120
  %v233 = vsel %vm231, %v215, 0
  %235 = vmatpush.bf16.msra.mxu0 0
  %236 = vmatpush.bf16.msra.mxu0 0
  %237 = vmatpush.bf16.msra.mxu0 0
  %238 = vmatpush.bf16.msra.mxu0 0
  %239 = vmatpush.bf16.msra.mxu0 0
  %240 = vmatpush.bf16.msra.mxu0 0
  %241 = vmatpush.bf16.msra.mxu0 %v228
  %242 = vmatpush.bf16.msra.mxu0 %v227
  %243 = vmatmul.bf16.gmra.mxu0 %v233
  %v244 = vpop.f32.mrf.mxu0
  %v245 = vadd.f32 %v217, %v244
  %v246 = vpop.f32.mrf.mxu0
  %247 = vdwg.mxu0
  %v249 = vperm.slane %v165, 0
  %v251 = vmul.f32 %v245, %v249
  %v253 = vperm.slane %v166, 0
  %v255 = vadd.f32 %v251, %v253
  %v256 = vpack.c.bf16 %v188, %v188
  %v257 = vpack.c.bf16 %v255, %v255
  %v262 = vunpack.c.l.b16 %v171
  %v263 = vunpack.c.l.b16 %v172
  %v264 = vunpack.c.l.b16 %v173
  %v265 = vunpack.c.l.b16 %v174
  %v266 = vpack.c.b16 %v263, %v262
  %v267 = vpack.c.b16 %v265, %v264
  %v271 = vsel %vm231, %v257, 0
  %273 = vmatpush.bf16.msra.mxu0 0
  %274 = vmatpush.bf16.msra.mxu0 0
  %275 = vmatpush.bf16.msra.mxu0 0
  %276 = vmatpush.bf16.msra.mxu0 0
  %277 = vmatpush.bf16.msra.mxu0 0
  %278 = vmatpush.bf16.msra.mxu0 0
  %279 = vmatpush.bf16.msra.mxu0 %v267
  %280 = vmatpush.bf16.msra.mxu0 %v266
  %281 = vmatmul.bf16.gmra.mxu0 %v271
  %v282 = vpop.f32.mrf.mxu0
  %v283 = vadd.f32 0.0, %v282
  %v284 = vpop.f32.mrf.mxu0
  %285 = vdwg.mxu0
  %v290 = vunpack.c.l.b16 %v167
  %v291 = vunpack.c.l.b16 %v168
  %v292 = vunpack.c.l.b16 %v169
  %v293 = vunpack.c.l.b16 %v170
  %v294 = vpack.c.b16 %v291, %v290
  %v295 = vpack.c.b16 %v293, %v292
  %v299 = vsel %vm231, %v256, 0
  %301 = vmatpush.bf16.msra.mxu0 0
  %302 = vmatpush.bf16.msra.mxu0 0
  %303 = vmatpush.bf16.msra.mxu0 0
  %304 = vmatpush.bf16.msra.mxu0 0
  %305 = vmatpush.bf16.msra.mxu0 0
  %306 = vmatpush.bf16.msra.mxu0 0
  %307 = vmatpush.bf16.msra.mxu0 %v295
  %308 = vmatpush.bf16.msra.mxu0 %v294
  %309 = vmatmul.bf16.gmra.mxu0 %v299
  %v310 = vpop.f32.mrf.mxu0
  %v311 = vadd.f32 %v283, %v310
  %v312 = vpop.f32.mrf.mxu0
  %313 = vdwg.mxu0
  %v315 = vperm.slane %v175, 0
  %v317 = vadd.f32 %v311, %v315
  %v318 = vmax.f32 %v317, 0.0
  %v319 = vpack.c.bf16 %v318, %v318
  %v321 = vperm.slane %v180, 0
  %v327 = vunpack.c.l.b16 %v176
  %v328 = vunpack.c.l.b16 %v177
  %v329 = vunpack.c.l.b16 %v178
  %v330 = vunpack.c.l.b16 %v179
  %v331 = vpack.c.b16 %v328, %v327
  %v332 = vpack.c.b16 %v330, %v329
  %v336 = vsel %vm231, %v319, 0
  %338 = vmatpush.bf16.msra.mxu0 0
  %339 = vmatpush.bf16.msra.mxu0 0
  %340 = vmatpush.bf16.msra.mxu0 0
  %341 = vmatpush.bf16.msra.mxu0 0
  %342 = vmatpush.bf16.msra.mxu0 0
  %343 = vmatpush.bf16.msra.mxu0 0
  %344 = vmatpush.bf16.msra.mxu0 %v332
  %345 = vmatpush.bf16.msra.mxu0 %v331
  %346 = vmatmul.bf16.gmra.mxu0 %v336
  %v347 = vpop.f32.mrf.mxu0
  %v348 = vadd.f32 %v321, %v347
  %v349 = vpop.f32.mrf.mxu0
  %350 = vdwg.mxu0
  %v351 = vxor.u32 %v348, 2147483648
  %v352 = vmul.f32 %v351, 1.442695
  %v353 = vpow.pop %v352
  %v354 = vadd.f32 %v353, 1.0
  %v355 = vrcp.pop %v354
  %v356 = vmul.f32 %v354, %v355
  %v357 = vsub.f32 1.0, %v356
  %v358 = vmul.f32 %v355, %v357
  %v359 = vadd.f32 %v355, %v358
  %vm360 = vweird.f32 %v354
  %vm361 = vweird.f32 %v355
  %vm362 = vmor %vm360, %vm361
  %v363 = vsel %vm362, %v355, %v359
  %v364 = vand.u32 2147483647, %v354
  %vm365 = vcmp.eq.f32.partialorder %v364, 8.507059e+37
  %v366 = vand.u32 %v354, 2147483648
  %v367 = vor.u32 1.1754944e-38, %v366
  %v368 = vsel %vm365, %v367, %v363
  %v369 = vmul.f32 1.0, %v368
  %v370 = vpack.c.bf16 %v369, %v369
  %v371 = vld [vmem:[%s61] sm:$0xf]
  %v372 = vld [vmem:[%s61 + $0x4] sm:$0xf]
  %v373 = vld [vmem:[%s61 + $0x8] sm:$0xf]
  %v374 = vld [vmem:[%s61 + $0xc] sm:$0xf]
  %v375 = vld [vmem:[%s63] sm:$0x1]
  %v377 = vperm.slane %v375, 0
  %v383 = vunpack.c.l.b16 %v371
  %v384 = vunpack.c.l.b16 %v372
  %v385 = vunpack.c.l.b16 %v373
  %v386 = vunpack.c.l.b16 %v374
  %v387 = vpack.c.b16 %v384, %v383
  %v388 = vpack.c.b16 %v386, %v385
  %v392 = vsel %vm231, %v370, 0
  %394 = vmatpush.bf16.msra.mxu0 0
  %395 = vmatpush.bf16.msra.mxu0 0
  %396 = vmatpush.bf16.msra.mxu0 0
  %397 = vmatpush.bf16.msra.mxu0 0
  %398 = vmatpush.bf16.msra.mxu0 0
  %399 = vmatpush.bf16.msra.mxu0 0
  %400 = vmatpush.bf16.msra.mxu0 %v388
  %401 = vmatpush.bf16.msra.mxu0 %v387
  %402 = vmatmul.bf16.gmra.mxu0 %v392
  %v403 = vpop.f32.mrf.mxu0
  %v404 = vadd.f32 %v377, %v403
  %v405 = vpop.f32.mrf.mxu0
  %406 = vdwg.mxu0
  %v407 = vmax.f32 %v404, 0.0
  %v408 = vpack.c.bf16 %v407, %v407
  %v409 = vld [vmem:[%s65] sm:$0xf]
  %v410 = vld [vmem:[%s65 + $0x4] sm:$0xf]
  %v411 = vld [vmem:[%s65 + $0x8] sm:$0xf]
  %v412 = vld [vmem:[%s65 + $0xc] sm:$0xf]
  %v413 = vld [vmem:[%s65 + $0x10] sm:$0xf]
  %v414 = vld [vmem:[%s65 + $0x14] sm:$0xf]
  %v415 = vld [vmem:[%s65 + $0x18] sm:$0xf]
  %v416 = vld [vmem:[%s65 + $0x1c] sm:$0xf]
  %v417 = vld [vmem:[%s65 + $0x20] sm:$0xf]
  %v418 = vld [vmem:[%s65 + $0x24] sm:$0xf]
  %v419 = vld [vmem:[%s65 + $0x28] sm:$0xf]
  %v420 = vld [vmem:[%s65 + $0x2c] sm:$0xf]
  %v421 = vld [vmem:[%s65 + $0x30] sm:$0xf]
  %v422 = vld [vmem:[%s65 + $0x34] sm:$0xf]
  %v423 = vld [vmem:[%s65 + $0x38] sm:$0xf]
  %v424 = vld [vmem:[%s65 + $0x3c] sm:$0xf]
  %v425 = vld [vmem:[%s67] sm:$0x1]
  %v427 = vperm.slane %v425, 0
  %v445 = vunpack.c.l.b16 %v409
  %v446 = vunpack.c.l.b16 %v410
  %v447 = vunpack.c.l.b16 %v411
  %v448 = vunpack.c.l.b16 %v412
  %v449 = vunpack.c.l.b16 %v413
  %v450 = vunpack.c.l.b16 %v414
  %v451 = vunpack.c.l.b16 %v415
  %v452 = vunpack.c.l.b16 %v416
  %v453 = vunpack.c.l.b16 %v417
  %v454 = vunpack.c.l.b16 %v418
  %v455 = vunpack.c.l.b16 %v419
  %v456 = vunpack.c.l.b16 %v420
  %v457 = vunpack.c.l.b16 %v421
  %v458 = vunpack.c.l.b16 %v422
  %v459 = vunpack.c.l.b16 %v423
  %v460 = vunpack.c.l.b16 %v424
  %v461 = vpack.c.b16 %v446, %v445
  %v462 = vpack.c.b16 %v448, %v447
  %v463 = vpack.c.b16 %v450, %v449
  %v464 = vpack.c.b16 %v452, %v451
  %v465 = vpack.c.b16 %v454, %v453
  %v466 = vpack.c.b16 %v456, %v455
  %v467 = vpack.c.b16 %v458, %v457
  %v468 = vpack.c.b16 %v460, %v459
  %477 = vmatpush.bf16.msra.mxu0 %v468
  %478 = vmatpush.bf16.msra.mxu0 %v467
  %479 = vmatpush.bf16.msra.mxu0 %v466
  %480 = vmatpush.bf16.msra.mxu0 %v465
  %481 = vmatpush.bf16.msra.mxu0 %v464
  %482 = vmatpush.bf16.msra.mxu0 %v463
  %483 = vmatpush.bf16.msra.mxu0 %v462
  %484 = vmatpush.bf16.msra.mxu0 %v461
  %485 = vmatmul.bf16.gmra.mxu0 %v408
  %v486 = vpop.f32.mrf.mxu0
  %v487 = vadd.f32 %v427, %v486
  %v488 = vpop.f32.mrf.mxu0
  %489 = vdwg.mxu0
  %v490 = vmax.f32 %v487, 0.0
  %v491 = vpack.c.bf16 %v490, %v490
  %v492 = vld [vmem:[%s69] sm:$0xf]
  %v493 = vld [vmem:[%s69 + $0x4] sm:$0xf]
  %v494 = vld [vmem:[%s69 + $0x8] sm:$0xf]
  %v495 = vld [vmem:[%s69 + $0xc] sm:$0xf]
  %v496 = vld [vmem:[%s69 + $0x10] sm:$0xf]
  %v497 = vld [vmem:[%s69 + $0x14] sm:$0xf]
  %v498 = vld [vmem:[%s69 + $0x18] sm:$0xf]
  %v499 = vld [vmem:[%s69 + $0x1c] sm:$0xf]
  %v500 = vld [vmem:[%s69 + $0x20] sm:$0xf]
  %v501 = vld [vmem:[%s69 + $0x24] sm:$0xf]
  %v502 = vld [vmem:[%s69 + $0x28] sm:$0xf]
  %v503 = vld [vmem:[%s69 + $0x2c] sm:$0xf]
  %v504 = vld [vmem:[%s69 + $0x30] sm:$0xf]
  %v505 = vld [vmem:[%s69 + $0x34] sm:$0xf]
  %v506 = vld [vmem:[%s69 + $0x38] sm:$0xf]
  %v507 = vld [vmem:[%s69 + $0x3c] sm:$0xf]
  %v508 = vld [vmem:[%s71] sm:$0x1]
  %v510 = vperm.slane %v508, 0
  %v528 = vunpack.c.l.b16 %v492
  %v529 = vunpack.c.l.b16 %v493
  %v530 = vunpack.c.l.b16 %v494
  %v531 = vunpack.c.l.b16 %v495
  %v532 = vunpack.c.l.b16 %v496
  %v533 = vunpack.c.l.b16 %v497
  %v534 = vunpack.c.l.b16 %v498
  %v535 = vunpack.c.l.b16 %v499
  %v536 = vunpack.c.l.b16 %v500
  %v537 = vunpack.c.l.b16 %v501
  %v538 = vunpack.c.l.b16 %v502
  %v539 = vunpack.c.l.b16 %v503
  %v540 = vunpack.c.l.b16 %v504
  %v541 = vunpack.c.l.b16 %v505
  %v542 = vunpack.c.l.b16 %v506
  %v543 = vunpack.c.l.b16 %v507
  %v544 = vpack.c.b16 %v529, %v528
  %v545 = vpack.c.b16 %v531, %v530
  %v546 = vpack.c.b16 %v533, %v532
  %v547 = vpack.c.b16 %v535, %v534
  %v548 = vpack.c.b16 %v537, %v536
  %v549 = vpack.c.b16 %v539, %v538
  %v550 = vpack.c.b16 %v541, %v540
  %v551 = vpack.c.b16 %v543, %v542
  %560 = vmatpush.bf16.msra.mxu0 %v551
  %561 = vmatpush.bf16.msra.mxu0 %v550
  %562 = vmatpush.bf16.msra.mxu0 %v549
  %563 = vmatpush.bf16.msra.mxu0 %v548
  %564 = vmatpush.bf16.msra.mxu0 %v547
  %565 = vmatpush.bf16.msra.mxu0 %v546
  %566 = vmatpush.bf16.msra.mxu0 %v545
  %567 = vmatpush.bf16.msra.mxu0 %v544
  %568 = vmatmul.bf16.gmra.mxu0 %v491
  %v569 = vpop.f32.mrf.mxu0
  %v570 = vadd.f32 %v510, %v569
  %v571 = vpop.f32.mrf.mxu0
  %572 = vdwg.mxu0
  %v573 = vxor.u32 %v570, 2147483648
  %v574 = vmul.f32 %v573, 1.442695
  %v575 = vpow.pop %v574
  %v576 = vadd.f32 %v575, 1.0
  %v577 = vrcp.pop %v576
  %v578 = vmul.f32 %v576, %v577
  %v579 = vsub.f32 1.0, %v578
  %v580 = vmul.f32 %v577, %v579
  %v581 = vadd.f32 %v577, %v580
  %vm582 = vweird.f32 %v576
  %vm583 = vweird.f32 %v577
  %vm584 = vmor %vm582, %vm583
  %v585 = vsel %vm584, %v577, %v581
  %v586 = vand.u32 2147483647, %v576
  %vm587 = vcmp.eq.f32.partialorder %v586, 8.507059e+37
  %v588 = vand.u32 %v576, 2147483648
  %v589 = vor.u32 1.1754944e-38, %v588
  %v590 = vsel %vm587, %v589, %v585
  %v591 = vmul.f32 1.0, %v590
  %vm592 = vcmask 31744
  %593 = vst.msk [vmem:[%s73] sm:$0xff] %vm592, %v591
  %v594 = vld [vmem:[%s5] sm:$0x3]
  %v595 = vld [vmem:[%s7] sm:$0x3]
  %v596 = vld [vmem:[%s35] sm:$0x1]
  %v597 = vld [vmem:[%s37] sm:$0x1]
  %v598 = vld [vmem:[%s39] sm:$0x1]
  %v599 = vld [vmem:[%s41] sm:$0x1]
  %v600 = vld [vmem:[%s43] sm:$0xf]
  %v601 = vld [vmem:[%s43 + $0x4] sm:$0xf]
  %v602 = vld [vmem:[%s43 + $0x8] sm:$0xf]
  %v603 = vld [vmem:[%s43 + $0xc] sm:$0xf]
  %v604 = vld [vmem:[%s45] sm:$0x1]
  %v605 = vld [vmem:[%s47] sm:$0x1]
  %v606 = vld [vmem:[%s49] sm:$0x1]
  %v607 = vld [vmem:[%s51] sm:$0xf]
  %v608 = vld [vmem:[%s51 + $0x4] sm:$0xf]
  %v609 = vld [vmem:[%s51 + $0x8] sm:$0xf]
  %v610 = vld [vmem:[%s51 + $0xc] sm:$0xf]
  %v611 = vld [vmem:[%s53] sm:$0xf]
  %v612 = vld [vmem:[%s53 + $0x4] sm:$0xf]
  %v613 = vld [vmem:[%s53 + $0x8] sm:$0xf]
  %v614 = vld [vmem:[%s53 + $0xc] sm:$0xf]
  %v615 = vld [vmem:[%s55] sm:$0x1]
  %v616 = vld [vmem:[%s57] sm:$0xf]
  %v617 = vld [vmem:[%s57 + $0x4] sm:$0xf]
  %v618 = vld [vmem:[%s57 + $0x8] sm:$0xf]
  %v619 = vld [vmem:[%s57 + $0xc] sm:$0xf]
  %v620 = vld [vmem:[%s59] sm:$0x1]
  %v622 = vperm.slane %v596, 0
  %v624 = vmul.f32 %v594, %v622
  %v626 = vperm.slane %v597, 0
  %v628 = vadd.f32 %v624, %v626
  %v629 = vpack.c.bf16 %v595, %v595
  %v631 = vperm.slane %v599, 0
  %v634 = vsel %vm193, %v629, 0
  %v637 = vsel %vm197, %v598, 0
  %639 = vmatpush.bf16.msra.mxu0 0
  %640 = vmatpush.bf16.msra.mxu0 0
  %641 = vmatpush.bf16.msra.mxu0 0
  %642 = vmatpush.bf16.msra.mxu0 0
  %643 = vmatpush.bf16.msra.mxu0 0
  %644 = vmatpush.bf16.msra.mxu0 0
  %645 = vmatpush.bf16.msra.mxu0 0
  %646 = vmatpush.bf16.msra.mxu0 %v637
  %647 = vmatmul.bf16.gmra.mxu0 %v634
  %v648 = vpop.f32.mrf.mxu0
  %v649 = vadd.f32 %v631, %v648
  %v650 = vpop.f32.mrf.mxu0
  %651 = vdwg.mxu0
  %v652 = vmax.f32 %v649, 0.0
  %v653 = vpack.c.bf16 %v652, %v652
  %v655 = vperm.slane %v604, 0
  %v661 = vunpack.c.l.b16 %v600
  %v662 = vunpack.c.l.b16 %v601
  %v663 = vunpack.c.l.b16 %v602
  %v664 = vunpack.c.l.b16 %v603
  %v665 = vpack.c.b16 %v662, %v661
  %v666 = vpack.c.b16 %v664, %v663
  %v670 = vsel %vm231, %v653, 0
  %672 = vmatpush.bf16.msra.mxu0 0
  %673 = vmatpush.bf16.msra.mxu0 0
  %674 = vmatpush.bf16.msra.mxu0 0
  %675 = vmatpush.bf16.msra.mxu0 0
  %676 = vmatpush.bf16.msra.mxu0 0
  %677 = vmatpush.bf16.msra.mxu0 0
  %678 = vmatpush.bf16.msra.mxu0 %v666
  %679 = vmatpush.bf16.msra.mxu0 %v665
  %680 = vmatmul.bf16.gmra.mxu0 %v670
  %v681 = vpop.f32.mrf.mxu0
  %v682 = vadd.f32 %v655, %v681
  %v683 = vpop.f32.mrf.mxu0
  %684 = vdwg.mxu0
  %v686 = vperm.slane %v605, 0
  %v688 = vmul.f32 %v682, %v686
  %v690 = vperm.slane %v606, 0
  %v692 = vadd.f32 %v688, %v690
  %v693 = vpack.c.bf16 %v628, %v628
  %v694 = vpack.c.bf16 %v692, %v692
  %v699 = vunpack.c.l.b16 %v611
  %v700 = vunpack.c.l.b16 %v612
  %v701 = vunpack.c.l.b16 %v613
  %v702 = vunpack.c.l.b16 %v614
  %v703 = vpack.c.b16 %v700, %v699
  %v704 = vpack.c.b16 %v702, %v701
  %v708 = vsel %vm231, %v694, 0
  %710 = vmatpush.bf16.msra.mxu0 0
  %711 = vmatpush.bf16.msra.mxu0 0
  %712 = vmatpush.bf16.msra.mxu0 0
  %713 = vmatpush.bf16.msra.mxu0 0
  %714 = vmatpush.bf16.msra.mxu0 0
  %715 = vmatpush.bf16.msra.mxu0 0
  %716 = vmatpush.bf16.msra.mxu0 %v704
  %717 = vmatpush.bf16.msra.mxu0 %v703
  %718 = vmatmul.bf16.gmra.mxu0 %v708
  %v719 = vpop.f32.mrf.mxu0
  %v720 = vadd.f32 0.0, %v719
  %v721 = vpop.f32.mrf.mxu0
  %722 = vdwg.mxu0
  %v727 = vunpack.c.l.b16 %v607
  %v728 = vunpack.c.l.b16 %v608
  %v729 = vunpack.c.l.b16 %v609
  %v730 = vunpack.c.l.b16 %v610
  %v731 = vpack.c.b16 %v728, %v727
  %v732 = vpack.c.b16 %v730, %v729
  %v736 = vsel %vm231, %v693, 0
  %738 = vmatpush.bf16.msra.mxu0 0
  %739 = vmatpush.bf16.msra.mxu0 0
  %740 = vmatpush.bf16.msra.mxu0 0
  %741 = vmatpush.bf16.msra.mxu0 0
  %742 = vmatpush.bf16.msra.mxu0 0
  %743 = vmatpush.bf16.msra.mxu0 0
  %744 = vmatpush.bf16.msra.mxu0 %v732
  %745 = vmatpush.bf16.msra.mxu0 %v731
  %746 = vmatmul.bf16.gmra.mxu0 %v736
  %v747 = vpop.f32.mrf.mxu0
  %v748 = vadd.f32 %v720, %v747
  %v749 = vpop.f32.mrf.mxu0
  %750 = vdwg.mxu0
  %v752 = vperm.slane %v615, 0
  %v754 = vadd.f32 %v748, %v752
  %v755 = vmax.f32 %v754, 0.0
  %v756 = vpack.c.bf16 %v755, %v755
  %v758 = vperm.slane %v620, 0
  %v764 = vunpack.c.l.b16 %v616
  %v765 = vunpack.c.l.b16 %v617
  %v766 = vunpack.c.l.b16 %v618
  %v767 = vunpack.c.l.b16 %v619
  %v768 = vpack.c.b16 %v765, %v764
  %v769 = vpack.c.b16 %v767, %v766
  %v773 = vsel %vm231, %v756, 0
  %775 = vmatpush.bf16.msra.mxu0 0
  %776 = vmatpush.bf16.msra.mxu0 0
  %777 = vmatpush.bf16.msra.mxu0 0
  %778 = vmatpush.bf16.msra.mxu0 0
  %779 = vmatpush.bf16.msra.mxu0 0
  %780 = vmatpush.bf16.msra.mxu0 0
  %781 = vmatpush.bf16.msra.mxu0 %v769
  %782 = vmatpush.bf16.msra.mxu0 %v768
  %783 = vmatmul.bf16.gmra.mxu0 %v773
  %v784 = vpop.f32.mrf.mxu0
  %v785 = vadd.f32 %v758, %v784
  %v786 = vpop.f32.mrf.mxu0
  %787 = vdwg.mxu0
  %vm788 = vcmask 25600
  %v789 = vsel %vm788, %v785, -inf
  %790 = vmax.xlane.f32.xlu0 %v789
  %v791 = vpop.xlane.xlu0 %790
  %v792 = vsub.f32 %v785, %v791
  %v793 = vmul.f32 %v792, 1.442695
  %v794 = vpow.pop %v793
  %v795 = vsel %vm788, %v794, 0.0
  %796 = vadd.xlane.f32.xlu0 %v795
  %v797 = vpop.xlane.xlu0 %796
  %v798 = vrcp.pop %v797
  %v799 = vmul.f32 %v797, %v798
  %v800 = vsub.f32 1.0, %v799
  %v801 = vmul.f32 %v798, %v800
  %v802 = vadd.f32 %v798, %v801
  %vm803 = vweird.f32 %v797
  %vm804 = vweird.f32 %v798
  %vm805 = vmor %vm803, %vm804
  %v806 = vsel %vm805, %v798, %v802
  %v807 = vand.u32 2147483647, %v797
  %vm808 = vcmp.eq.f32.partialorder %v807, 8.507059e+37
  %v809 = vand.u32 %v797, 2147483648
  %v810 = vor.u32 1.1754944e-38, %v809
  %v811 = vsel %vm808, %v810, %v806
  %v812 = vmul.f32 %v794, %v811
  %813 = vst.msk [vmem:[%s75] sm:$0x3] %vm788, %v812
  // Predicated region
  $region146: #{samoe_forward.7} parent=0 // pred_check
    _
  $region147: #{samoe_forward.7} parent=0 // pred_check_branch
    %815 = sbr.rel (0) target = $region149
  $region148: #{samoe_forward.7} parent=0 // pred_region
    _
  $region149: #{samoe_forward.7} parent=0 // pred_fallthru
    _
  // Predicated region
  $region150: #{samoe_forward.7} parent=0 // pred_check
    _
  $region151: #{samoe_forward.7} parent=0 // pred_check_branch
    %817 = sbr.rel (0) target = $region153
  $region152: #{samoe_forward.7} parent=0 // pred_region
    _
  $region153: #{samoe_forward.7} parent=0 // pred_fallthru
    _
  // Predicated region
  $region154: #{samoe_forward.7} parent=0 // pred_check
    _
  $region155: #{samoe_forward.7} parent=0 // pred_check_branch
    %819 = sbr.rel (0) target = $region157
  $region156: #{samoe_forward.7} parent=0 // pred_region
    _
  $region157: #{samoe_forward.7} parent=0 // pred_fallthru
    _
  // Predicated region
  $region158: #{samoe_forward.7} parent=0 // pred_check
    _
  $region159: #{samoe_forward.7} parent=0 // pred_check_branch
    %821 = sbr.rel (0) target = $region161
  $region160: #{samoe_forward.7} parent=0 // pred_region
    _
  $region161: #{samoe_forward.7} parent=0 // pred_fallthru
    _

</llo_original>
